<compile_context>
chip_gen: v7x
topology: tpu7x:2x2x1
jax: 0.10.0
libtpu: 0.0.40
codegen_flags: <defaults>
</compile_context>

<pallas_src>
import functools

import jax
import jax.numpy as jnp
import numpy as np
from jax.experimental import pallas as pl
from jax.experimental.pallas import tpu as pltpu

# ----------------------------- configuration --------------------------------
N_BATCH = 2
IN_PLANES = 8
REL_PLANES = 4
OUT_PLANES = 16
SHARE_PLANES = 4
CW = OUT_PLANES // SHARE_PLANES            # out_planes // share_planes
K = 3                                      # kernel_size
DIL = 1
STRIDE = 1
PAD = (DIL * (K - 1) + 1) // 2             # = 1
K2 = K * K
CENTER = K2 // 2                           # index of the (0,0) offset in the unfold
H = W = 16
L = H * W
C1 = REL_PLANES + 2                        # channels entering conv_w


# ----------------------------- fused Pallas kernel ---------------------------
def _fused_san_kernel(xu_ref, pos_ref, wc_ref, wn_ref, w1x_ref, w2_ref, vec_ref,
                      out_ref, *, l):
    """Whole pairwise-SAN forward for one batch element.

    xu_ref : (1, Cin, K2*l)  reflection-padded 3x3 neighbors of x (k-major lanes)
    pos_ref: (rel, K2*l)     precomputed positional conv_w contribution (batch-shared)
    wc_ref : (rel, Cin)      conv1 weight
    wn_ref : (out+rel, Cin)  [conv3; conv2] stacked weights
    w1x_ref: (rel, rel)      conv_w[2] weight, x-diff columns
    w2_ref : (Cw, rel)       conv_w[5] weight
    vec_ref: (24, 128)       packed bias / folded-BN vectors (see pack_vec_params)
    """
    xu = xu_ref[0]                                                   # (Cin, K2*l)
    pos_term = pos_ref[...]                                          # (rel, K2*l)
    w_c = wc_ref[...]
    w_n = wn_ref[...]
    w1x = w1x_ref[...]
    w2 = w2_ref[...]
    vec = vec_ref[...]

    b1c = vec[0:REL_PLANES, 0:1]                                     # conv1 bias
    bn1s = vec[0:REL_PLANES, 1:2]                                    # BN1 scale (x part)
    bn1b = vec[0:REL_PLANES, 2:3]                                    # BN1 shift (x part)
    bn2s = vec[0:REL_PLANES, 3:4]
    bn2b = vec[0:REL_PLANES, 4:5]
    b2 = vec[0:REL_PLANES, 5:6]                                      # conv_w[5] bias
    bnb = vec[0:OUT_PLANES + REL_PLANES, 6:7]                        # [conv3_b; conv2_b]

    # conv1 on the center pixel (the k == CENTER lane-block of the unfolded input)
    x_ctr = xu[:, CENTER * l:(CENTER + 1) * l]                       # (Cin, l)
    x1 = jnp.dot(w_c, x_ctr, preferred_element_type=jnp.float32) + b1c   # (rel, l)

    # conv3 + conv2 of all 9 neighbor slabs in ONE MXU pass
    # (1x1 conv commutes with the reflection-padded spatial gather)
    xn = jnp.dot(w_n, xu, preferred_element_type=jnp.float32) + bnb  # (out+rel, K2*l)
    x3n = xn[0:OUT_PLANES]                                           # (out, K2*l)
    x2n = xn[OUT_PLANES:OUT_PLANES + REL_PLANES]                     # (rel, K2*l)

    # subtraction2 -> conv_w (BN folded -> ReLU -> 1x1 -> BN -> ReLU -> 1x1),
    # with the batch-invariant position term added after the first 1x1.
    x1w = jnp.concatenate([x1] * K2, axis=-1)                        # (rel, K2*l)
    hdn = jnp.maximum((x1w - x2n) * bn1s + bn1b, 0.0)
    y = jnp.dot(w1x, hdn, preferred_element_type=jnp.float32) + pos_term
    y = jnp.maximum(y * bn2s + bn2b, 0.0)
    lg = jnp.dot(w2, y, preferred_element_type=jnp.float32) + b2     # (Cw, K2*l)

    # softmax over the k^2 axis (k-major lane blocks of width l)
    lgs = [lg[:, k * l:(k + 1) * l] for k in range(K2)]
    m = lgs[0]
    for k in range(1, K2):
        m = jnp.maximum(m, lgs[k])
    es = [jnp.exp(lgs[k] - m) for k in range(K2)]
    den = es[0]
    for k in range(1, K2):
        den = den + es[k]
    inv = pl.reciprocal(den, approx=True)                            # (Cw, l)

    # aggregation: out[s*Cw + c, :] = sum_k w_k[c, :] * x3_k[s*Cw + c, :]
    # (weight sharing: output channel c uses attention channel c % Cw, matching
    #  the reference; no jnp.tile / sublane replication)
    acc = [jnp.zeros((CW, l), jnp.float32) for _ in range(SHARE_PLANES)]
    for k in range(K2):
        wk = es[k] * inv                                             # (Cw, l)
        x3k = x3n[:, k * l:(k + 1) * l]                              # (out, l)
        for s in range(SHARE_PLANES):
            acc[s] = acc[s] + wk * x3k[s * CW:(s + 1) * CW, :]
    out_ref[0] = jnp.concatenate(acc, axis=0).astype(out_ref.dtype)


# ------------------------------ JAX glue -------------------------------------
def encode_position(h, w):
    """Matches SelfAttentionModule.encode_position: (1, 2, H, W), ch0=loc_w, ch1=loc_h."""
    loc_w = jnp.broadcast_to(jnp.linspace(-1.0, 1.0, w)[None, :], (h, w))
    loc_h = jnp.broadcast_to(jnp.linspace(-1.0, 1.0, h)[:, None], (h, w))
    return jnp.stack([loc_w, loc_h], axis=0)[None].astype(jnp.float32)


def reflect_unfold(x_nchw, kernel_size, pad, dilation=1):
    """nn.Unfold(kernel_size, dilation, padding=0, stride=1) of ReflectionPad2d(pad)(x),
       reshaped to (N, C, k*k, H*W).  (stride==1 path only)."""
    n, c, h, w = x_nchw.shape
    xp = jnp.pad(x_nchw, ((0, 0), (0, 0), (pad, pad), (pad, pad)), mode="reflect")
    cols = []
    for kh in range(kernel_size):
        for kw in range(kernel_size):
            patch = xp[:, :, kh * dilation:kh * dilation + h,
                       kw * dilation:kw * dilation + w]
            cols.append(patch.reshape(n, c, h * w))
    return jnp.stack(cols, axis=2)                             # (N, C, k^2, H*W)


def pack_vec_params(p):
    """Pack all small bias / folded-BN vectors into a single (24,128) VMEM slab."""
    v = jnp.zeros((24, 128), jnp.float32)
    v = v.at[0:REL_PLANES, 0].set(p["conv1_b"])
    v = v.at[0:REL_PLANES, 1].set(p["bn1_scale"][:REL_PLANES])
    v = v.at[0:REL_PLANES, 2].set(p["bn1_shift"][:REL_PLANES])
    v = v.at[0:REL_PLANES, 3].set(p["bn2_scale"])
    v = v.at[0:REL_PLANES, 4].set(p["bn2_shift"])
    v = v.at[0:REL_PLANES, 5].set(p["convw2_b"])
    bnb = jnp.concatenate([p["conv3_b"], p["conv2_b"]], axis=0)      # (out+rel,)
    v = v.at[0:OUT_PLANES + REL_PLANES, 6].set(bnb)
    return v


def self_attention_forward(x, p):
    """x: (N, in_planes, H, W) NCHW -> (N, out_planes, H, W)."""
    n, cin, h, w = x.shape
    l = h * w

    # reflection-padded 3x3 neighbor gather of the RAW input (pure data movement);
    # conv2 / conv3 of the neighbors are done in-kernel (1x1 convs commute with it).
    x_unf = reflect_unfold(x, K, PAD, DIL).reshape(n, cin, K2 * l)   # (N, Cin, K2*L)

    # batch-invariant position branch, hoisted out of the per-batch kernel:
    # conv_p -> subtraction(position) -> BN1/ReLU (pos channels) -> conv_w[2] pos cols
    pos = encode_position(h, w).reshape(2, l)
    posp = jnp.dot(p["convp_w"], pos) + p["convp_b"][:, None]        # (2, L)
    pos_unf = reflect_unfold(posp.reshape(1, 2, h, w), K, PAD, DIL)[0]   # (2, K2, L)
    pos_sub = (posp[:, None, :] - pos_unf).reshape(2, K2 * l)        # (2, K2*L)
    hdn_p = jnp.maximum(pos_sub * p["bn1_scale"][REL_PLANES:, None]
                        + p["bn1_shift"][REL_PLANES:, None], 0.0)
    pos_term = jnp.dot(p["convw1_w"][:, REL_PLANES:], hdn_p)         # (rel, K2*L)

    w_ctr = p["conv1_w"]                                             # (rel, Cin)
    w_nb = jnp.concatenate([p["conv3_w"], p["conv2_w"]], axis=0)     # (out+rel, Cin)
    w1x = p["convw1_w"][:, :REL_PLANES]                              # (rel, rel)
    vec = pack_vec_params(p)                                         # (24, 128)

    kern = functools.partial(_fused_san_kernel, l=l)
    out = pl.pallas_call(
        kern,
        out_shape=jax.ShapeDtypeStruct((n, OUT_PLANES, l), jnp.float32),
        grid=(n,),
        in_specs=[
            pl.BlockSpec((1, cin, K2 * l), lambda i: (i, 0, 0)),
            pl.BlockSpec((REL_PLANES, K2 * l), lambda i: (0, 0)),        # batch-shared
            pl.BlockSpec((REL_PLANES, cin), lambda i: (0, 0)),
            pl.BlockSpec((OUT_PLANES + REL_PLANES, cin), lambda i: (0, 0)),
            pl.BlockSpec((REL_PLANES, REL_PLANES), lambda i: (0, 0)),
            pl.BlockSpec((CW, REL_PLANES), lambda i: (0, 0)),
            pl.BlockSpec((24, 128), lambda i: (0, 0)),
        ],
        out_specs=pl.BlockSpec((1, OUT_PLANES, l), lambda i: (i, 0, 0)),
        compiler_params=pltpu.CompilerParams(dimension_semantics=("parallel",)),
    )(x_unf, pos_term, w_ctr, w_nb, w1x, p["convw2_w"], vec)
    return out.reshape(n, OUT_PLANES, h, w)


# --------------------------- deterministic params ----------------------------
def fold_bn(gamma, beta, mean, var, eps=1e-5):
    scale = gamma / jnp.sqrt(var + eps)
    shift = beta - mean * scale
    return scale.astype(jnp.float32), shift.astype(jnp.float32)


def init_params(key):
    ks = jax.random.split(key, 16)
    nrm = lambda k, shape, s=0.2: (s * jax.random.normal(k, shape)).astype(jnp.float32)
    p = {
        "conv1_w": nrm(ks[0], (REL_PLANES, IN_PLANES)),
        "conv1_b": nrm(ks[1], (REL_PLANES,), 0.1),
        "conv2_w": nrm(ks[2], (REL_PLANES, IN_PLANES)),
        "conv2_b": nrm(ks[3], (REL_PLANES,), 0.1),
        "conv3_w": nrm(ks[4], (OUT_PLANES, IN_PLANES)),
        "conv3_b": nrm(ks[5], (OUT_PLANES,), 0.1),
        "convp_w": nrm(ks[6], (2, 2)),
        "convp_b": nrm(ks[7], (2,), 0.1),
        "convw1_w": nrm(ks[8], (REL_PLANES, C1)),              # conv_w[2], no bias
        "convw2_w": nrm(ks[9], (CW, REL_PLANES)),              # conv_w[5]
        "convw2_b": nrm(ks[10], (CW,), 0.1),
    }
    g1 = 1.0 + 0.1 * jax.random.normal(ks[11], (C1,))
    b1 = 0.1 * jax.random.normal(ks[12], (C1,))
    m1 = 0.1 * jax.random.normal(ks[13], (C1,))
    v1 = 0.9 + 0.1 * jnp.abs(jax.random.normal(ks[14], (C1,)))
    p["bn1_scale"], p["bn1_shift"] = fold_bn(g1, b1, m1, v1)
    g2 = 1.0 + 0.1 * jax.random.normal(ks[15], (REL_PLANES,))
    b2 = jnp.zeros((REL_PLANES,))
    m2 = jnp.zeros((REL_PLANES,))
    v2 = jnp.ones((REL_PLANES,))
    p["bn2_scale"], p["bn2_shift"] = fold_bn(g2, b2, m2, v2)
    return p


# ------------------------------ pure-JAX reference ---------------------------
def reference_forward(x, p):
    n, cin, h, w = x.shape
    l = h * w
    c1x1 = lambda z, wt, b: jnp.einsum("oc,ncl->nol", wt, z) + b[None, :, None]
    xf = x.reshape(n, cin, l)
    x1 = c1x1(xf, p["conv1_w"], p["conv1_b"])
    x2 = c1x1(xf, p["conv2_w"], p["conv2_b"])
    x3 = c1x1(xf, p["conv3_w"], p["conv3_b"])
    posp = c1x1(encode_position(h, w).reshape(1, 2, l), p["convp_w"], p["convp_b"])
    pos_sub = posp[:, :, None, :] - reflect_unfold(posp.reshape(1, 2, h, w), K, PAD, DIL)
    x2_unf = reflect_unfold(x2.reshape(n, REL_PLANES, h, w), K, PAD, DIL)
    x3_unf = reflect_unfold(x3.reshape(n, OUT_PLANES, h, w), K, PAD, DIL)
    feat = jnp.concatenate(
        [x1[:, :, None, :] - x2_unf, jnp.tile(pos_sub, (n, 1, 1, 1))], axis=1)
    hdn = jax.nn.relu(feat * p["bn1_scale"][None, :, None, None]
                      + p["bn1_shift"][None, :, None, None])
    y = jnp.einsum("oc,nckl->nokl", p["convw1_w"], hdn)
    y = jax.nn.relu(y * p["bn2_scale"][None, :, None, None]
                    + p["bn2_shift"][None, :, None, None])
    logits = jnp.einsum("oc,nckl->nokl", p["convw2_w"], y) + p["convw2_b"][None, :, None, None]
    wn = jax.nn.softmax(logits, axis=2)                        # softmax over k^2 (dim=-2)
    x3r = x3_unf.reshape(n, SHARE_PLANES, CW, K2, l)
    out = (wn[:, None] * x3r).sum(axis=3).reshape(n, OUT_PLANES, h, w)
    return out


# ----------------------------------- main -------------------------------------
if __name__ == "__main__":
    key = jax.random.PRNGKey(0)
    kx, kp = jax.random.split(key)
    x = jax.random.normal(kx, (N_BATCH, IN_PLANES, H, W), dtype=jnp.float32)
    params = init_params(kp)

    out = self_attention_forward(x, params)
    out = jax.block_until_ready(out)
    assert out.shape == (N_BATCH, OUT_PLANES, H, W)

    ref = reference_forward(x, params)
    np.testing.assert_allclose(np.asarray(out), np.asarray(ref), rtol=1e-2, atol=1e-2)

    print("KERNEL_OK")
</pallas_src>

<mosaic_0001>
module attributes {stable_mosaic.version = 11 : i64} {
  func.func @_fused_san_kernel(%arg0: i32, %arg1: memref<1x8x2304xf32, #tpu.memory_space<vmem>>, %arg2: memref<4x2304xf32, #tpu.memory_space<vmem>>, %arg3: memref<4x8xf32, #tpu.memory_space<vmem>>, %arg4: memref<20x8xf32, #tpu.memory_space<vmem>>, %arg5: memref<4x4xf32, #tpu.memory_space<vmem>>, %arg6: memref<4x4xf32, #tpu.memory_space<vmem>>, %arg7: memref<24x128xf32, #tpu.memory_space<vmem>>, %arg8: memref<1x16x256xf32, #tpu.memory_space<vmem>>) attributes {dimension_semantics = [#tpu.dimension_semantics<parallel>], iteration_bounds = array<i64: 2>, scalar_prefetch = 0 : i64, scratch_operands = 0 : i64, tpu.core_type = #tpu.core_type<tc>, window_params = [{transform_indices = @transform_0, window_bounds = array<i64: 1, 8, 2304>}, {pipeline_mode = #tpu.pipeline_mode<synchronous>, transform_indices = @transform_1, window_bounds = array<i64: 4, 2304>}, {pipeline_mode = #tpu.pipeline_mode<synchronous>, transform_indices = @transform_2, window_bounds = array<i64: 4, 8>}, {pipeline_mode = #tpu.pipeline_mode<synchronous>, transform_indices = @transform_3, window_bounds = array<i64: 20, 8>}, {pipeline_mode = #tpu.pipeline_mode<synchronous>, transform_indices = @transform_4, window_bounds = array<i64: 4, 4>}, {pipeline_mode = #tpu.pipeline_mode<synchronous>, transform_indices = @transform_5, window_bounds = array<i64: 4, 4>}, {pipeline_mode = #tpu.pipeline_mode<synchronous>, transform_indices = @transform_6, window_bounds = array<i64: 24, 128>}, {transform_indices = @transform_7, window_bounds = array<i64: 1, 16, 256>}]} {
    %c0 = arith.constant 0 : index
    %c0_0 = arith.constant 0 : index
    %c0_1 = arith.constant 0 : index
    %0 = vector.load %arg1[%c0, %c0_0, %c0_1] : memref<1x8x2304xf32, #tpu.memory_space<vmem>>, vector<1x8x2304xf32>
    %1 = vector.shape_cast %0 : vector<1x8x2304xf32> to vector<8x2304xf32>
    %c0_2 = arith.constant 0 : index
    %c0_3 = arith.constant 0 : index
    %2 = vector.load %arg2[%c0_2, %c0_3] : memref<4x2304xf32, #tpu.memory_space<vmem>>, vector<4x2304xf32>
    %c0_4 = arith.constant 0 : index
    %c0_5 = arith.constant 0 : index
    %3 = vector.load %arg3[%c0_4, %c0_5] : memref<4x8xf32, #tpu.memory_space<vmem>>, vector<4x8xf32>
    %c0_6 = arith.constant 0 : index
    %c0_7 = arith.constant 0 : index
    %4 = vector.load %arg4[%c0_6, %c0_7] : memref<20x8xf32, #tpu.memory_space<vmem>>, vector<20x8xf32>
    %c0_8 = arith.constant 0 : index
    %c0_9 = arith.constant 0 : index
    %5 = vector.load %arg5[%c0_8, %c0_9] : memref<4x4xf32, #tpu.memory_space<vmem>>, vector<4x4xf32>
    %c0_10 = arith.constant 0 : index
    %c0_11 = arith.constant 0 : index
    %6 = vector.load %arg6[%c0_10, %c0_11] : memref<4x4xf32, #tpu.memory_space<vmem>>, vector<4x4xf32>
    %c0_12 = arith.constant 0 : index
    %c0_13 = arith.constant 0 : index
    %7 = vector.load %arg7[%c0_12, %c0_13] : memref<24x128xf32, #tpu.memory_space<vmem>>, vector<24x128xf32>
    %8 = vector.extract_strided_slice %7 {offsets = [0, 0], sizes = [4, 1], strides = [1, 1]} : vector<24x128xf32> to vector<4x1xf32>
    %9 = vector.extract_strided_slice %7 {offsets = [0, 1], sizes = [4, 1], strides = [1, 1]} : vector<24x128xf32> to vector<4x1xf32>
    %10 = vector.extract_strided_slice %7 {offsets = [0, 2], sizes = [4, 1], strides = [1, 1]} : vector<24x128xf32> to vector<4x1xf32>
    %11 = vector.extract_strided_slice %7 {offsets = [0, 3], sizes = [4, 1], strides = [1, 1]} : vector<24x128xf32> to vector<4x1xf32>
    %12 = vector.extract_strided_slice %7 {offsets = [0, 4], sizes = [4, 1], strides = [1, 1]} : vector<24x128xf32> to vector<4x1xf32>
    %13 = vector.extract_strided_slice %7 {offsets = [0, 5], sizes = [4, 1], strides = [1, 1]} : vector<24x128xf32> to vector<4x1xf32>
    %14 = vector.extract_strided_slice %7 {offsets = [0, 6], sizes = [20, 1], strides = [1, 1]} : vector<24x128xf32> to vector<20x1xf32>
    %15 = vector.extract_strided_slice %1 {offsets = [0, 1024], sizes = [8, 256], strides = [1, 1]} : vector<8x2304xf32> to vector<8x256xf32>
    %cst = arith.constant dense<0.000000e+00> : vector<4x256xf32>
    %16 = tpu.matmul %3, %15, %cst {dimension_numbers = #tpu.dot_dimension_numbers<[1], [0], [0], [1], [0, 0, 1, 1], [], []>} : vector<4x8xf32>, vector<8x256xf32>, vector<4x256xf32> -> vector<4x256xf32>
    %17 = vector.broadcast %8 : vector<4x1xf32> to vector<4x256xf32>
    %18 = arith.addf %16, %17 : vector<4x256xf32>
    %cst_14 = arith.constant dense<0.000000e+00> : vector<20x2304xf32>
    %19 = tpu.matmul %4, %1, %cst_14 {dimension_numbers = #tpu.dot_dimension_numbers<[1], [0], [0], [1], [0, 0, 1, 1], [], []>} : vector<20x8xf32>, vector<8x2304xf32>, vector<20x2304xf32> -> vector<20x2304xf32>
    %20 = vector.broadcast %14 : vector<20x1xf32> to vector<20x2304xf32>
    %21 = arith.addf %19, %20 : vector<20x2304xf32>
    %22 = vector.extract_strided_slice %21 {offsets = [0, 0], sizes = [16, 2304], strides = [1, 1]} : vector<20x2304xf32> to vector<16x2304xf32>
    %23 = vector.extract_strided_slice %21 {offsets = [16, 0], sizes = [4, 2304], strides = [1, 1]} : vector<20x2304xf32> to vector<4x2304xf32>
    %24 = tpu.concatenate %18, %18, %18, %18, %18, %18, %18, %18, %18 in 1 : vector<4x256xf32>, vector<4x256xf32>, vector<4x256xf32>, vector<4x256xf32>, vector<4x256xf32>, vector<4x256xf32>, vector<4x256xf32>, vector<4x256xf32>, vector<4x256xf32> -> vector<4x2304xf32>
    %25 = arith.subf %24, %23 : vector<4x2304xf32>
    %26 = vector.broadcast %9 : vector<4x1xf32> to vector<4x2304xf32>
    %27 = arith.mulf %25, %26 : vector<4x2304xf32>
    %28 = vector.broadcast %10 : vector<4x1xf32> to vector<4x2304xf32>
    %29 = arith.addf %27, %28 : vector<4x2304xf32>
    %cst_15 = arith.constant 0.000000e+00 : f32
    %30 = vector.broadcast %cst_15 : f32 to vector<4x2304xf32>
    %31 = arith.maximumf %29, %30 : vector<4x2304xf32>
    %cst_16 = arith.constant dense<0.000000e+00> : vector<4x2304xf32>
    %32 = tpu.matmul %5, %31, %cst_16 {dimension_numbers = #tpu.dot_dimension_numbers<[1], [0], [0], [1], [0, 0, 1, 1], [], []>} : vector<4x4xf32>, vector<4x2304xf32>, vector<4x2304xf32> -> vector<4x2304xf32>
    %33 = arith.addf %32, %2 : vector<4x2304xf32>
    %34 = vector.broadcast %11 : vector<4x1xf32> to vector<4x2304xf32>
    %35 = arith.mulf %33, %34 : vector<4x2304xf32>
    %36 = vector.broadcast %12 : vector<4x1xf32> to vector<4x2304xf32>
    %37 = arith.addf %35, %36 : vector<4x2304xf32>
    %cst_17 = arith.constant 0.000000e+00 : f32
    %38 = vector.broadcast %cst_17 : f32 to vector<4x2304xf32>
    %39 = arith.maximumf %37, %38 : vector<4x2304xf32>
    %cst_18 = arith.constant dense<0.000000e+00> : vector<4x2304xf32>
    %40 = tpu.matmul %6, %39, %cst_18 {dimension_numbers = #tpu.dot_dimension_numbers<[1], [0], [0], [1], [0, 0, 1, 1], [], []>} : vector<4x4xf32>, vector<4x2304xf32>, vector<4x2304xf32> -> vector<4x2304xf32>
    %41 = vector.broadcast %13 : vector<4x1xf32> to vector<4x2304xf32>
    %42 = arith.addf %40, %41 : vector<4x2304xf32>
    %43 = vector.extract_strided_slice %42 {offsets = [0, 0], sizes = [4, 256], strides = [1, 1]} : vector<4x2304xf32> to vector<4x256xf32>
    %44 = vector.extract_strided_slice %42 {offsets = [0, 256], sizes = [4, 256], strides = [1, 1]} : vector<4x2304xf32> to vector<4x256xf32>
    %45 = vector.extract_strided_slice %42 {offsets = [0, 512], sizes = [4, 256], strides = [1, 1]} : vector<4x2304xf32> to vector<4x256xf32>
    %46 = vector.extract_strided_slice %42 {offsets = [0, 768], sizes = [4, 256], strides = [1, 1]} : vector<4x2304xf32> to vector<4x256xf32>
    %47 = vector.extract_strided_slice %42 {offsets = [0, 1024], sizes = [4, 256], strides = [1, 1]} : vector<4x2304xf32> to vector<4x256xf32>
    %48 = vector.extract_strided_slice %42 {offsets = [0, 1280], sizes = [4, 256], strides = [1, 1]} : vector<4x2304xf32> to vector<4x256xf32>
    %49 = vector.extract_strided_slice %42 {offsets = [0, 1536], sizes = [4, 256], strides = [1, 1]} : vector<4x2304xf32> to vector<4x256xf32>
    %50 = vector.extract_strided_slice %42 {offsets = [0, 1792], sizes = [4, 256], strides = [1, 1]} : vector<4x2304xf32> to vector<4x256xf32>
    %51 = vector.extract_strided_slice %42 {offsets = [0, 2048], sizes = [4, 256], strides = [1, 1]} : vector<4x2304xf32> to vector<4x256xf32>
    %52 = arith.maximumf %43, %44 : vector<4x256xf32>
    %53 = arith.maximumf %52, %45 : vector<4x256xf32>
    %54 = arith.maximumf %53, %46 : vector<4x256xf32>
    %55 = arith.maximumf %54, %47 : vector<4x256xf32>
    %56 = arith.maximumf %55, %48 : vector<4x256xf32>
    %57 = arith.maximumf %56, %49 : vector<4x256xf32>
    %58 = arith.maximumf %57, %50 : vector<4x256xf32>
    %59 = arith.maximumf %58, %51 : vector<4x256xf32>
    %60 = arith.subf %43, %59 : vector<4x256xf32>
    %61 = math.exp %60 : vector<4x256xf32>
    %62 = arith.subf %44, %59 : vector<4x256xf32>
    %63 = math.exp %62 : vector<4x256xf32>
    %64 = arith.subf %45, %59 : vector<4x256xf32>
    %65 = math.exp %64 : vector<4x256xf32>
    %66 = arith.subf %46, %59 : vector<4x256xf32>
    %67 = math.exp %66 : vector<4x256xf32>
    %68 = arith.subf %47, %59 : vector<4x256xf32>
    %69 = math.exp %68 : vector<4x256xf32>
    %70 = arith.subf %48, %59 : vector<4x256xf32>
    %71 = math.exp %70 : vector<4x256xf32>
    %72 = arith.subf %49, %59 : vector<4x256xf32>
    %73 = math.exp %72 : vector<4x256xf32>
    %74 = arith.subf %50, %59 : vector<4x256xf32>
    %75 = math.exp %74 : vector<4x256xf32>
    %76 = arith.subf %51, %59 : vector<4x256xf32>
    %77 = math.exp %76 : vector<4x256xf32>
    %78 = arith.addf %61, %63 : vector<4x256xf32>
    %79 = arith.addf %78, %65 : vector<4x256xf32>
    %80 = arith.addf %79, %67 : vector<4x256xf32>
    %81 = arith.addf %80, %69 : vector<4x256xf32>
    %82 = arith.addf %81, %71 : vector<4x256xf32>
    %83 = arith.addf %82, %73 : vector<4x256xf32>
    %84 = arith.addf %83, %75 : vector<4x256xf32>
    %85 = arith.addf %84, %77 : vector<4x256xf32>
    %86 = tpu.reciprocal %85 {approx = true} : vector<4x256xf32> -> vector<4x256xf32>
    %cst_19 = arith.constant 0.000000e+00 : f32
    %87 = vector.broadcast %cst_19 : f32 to vector<4x256xf32>
    %cst_20 = arith.constant 0.000000e+00 : f32
    %88 = vector.broadcast %cst_20 : f32 to vector<4x256xf32>
    %cst_21 = arith.constant 0.000000e+00 : f32
    %89 = vector.broadcast %cst_21 : f32 to vector<4x256xf32>
    %cst_22 = arith.constant 0.000000e+00 : f32
    %90 = vector.broadcast %cst_22 : f32 to vector<4x256xf32>
    %91 = arith.mulf %61, %86 : vector<4x256xf32>
    %92 = vector.extract_strided_slice %22 {offsets = [0, 0], sizes = [16, 256], strides = [1, 1]} : vector<16x2304xf32> to vector<16x256xf32>
    %93 = vector.extract_strided_slice %92 {offsets = [0, 0], sizes = [4, 256], strides = [1, 1]} : vector<16x256xf32> to vector<4x256xf32>
    %94 = arith.mulf %91, %93 : vector<4x256xf32>
    %95 = arith.addf %87, %94 : vector<4x256xf32>
    %96 = vector.extract_strided_slice %92 {offsets = [4, 0], sizes = [4, 256], strides = [1, 1]} : vector<16x256xf32> to vector<4x256xf32>
    %97 = arith.mulf %91, %96 : vector<4x256xf32>
    %98 = arith.addf %88, %97 : vector<4x256xf32>
    %99 = vector.extract_strided_slice %92 {offsets = [8, 0], sizes = [4, 256], strides = [1, 1]} : vector<16x256xf32> to vector<4x256xf32>
    %100 = arith.mulf %91, %99 : vector<4x256xf32>
    %101 = arith.addf %89, %100 : vector<4x256xf32>
    %102 = vector.extract_strided_slice %92 {offsets = [12, 0], sizes = [4, 256], strides = [1, 1]} : vector<16x256xf32> to vector<4x256xf32>
    %103 = arith.mulf %91, %102 : vector<4x256xf32>
    %104 = arith.addf %90, %103 : vector<4x256xf32>
    %105 = arith.mulf %63, %86 : vector<4x256xf32>
    %106 = vector.extract_strided_slice %22 {offsets = [0, 256], sizes = [16, 256], strides = [1, 1]} : vector<16x2304xf32> to vector<16x256xf32>
    %107 = vector.extract_strided_slice %106 {offsets = [0, 0], sizes = [4, 256], strides = [1, 1]} : vector<16x256xf32> to vector<4x256xf32>
    %108 = arith.mulf %105, %107 : vector<4x256xf32>
    %109 = arith.addf %95, %108 : vector<4x256xf32>
    %110 = vector.extract_strided_slice %106 {offsets = [4, 0], sizes = [4, 256], strides = [1, 1]} : vector<16x256xf32> to vector<4x256xf32>
    %111 = arith.mulf %105, %110 : vector<4x256xf32>
    %112 = arith.addf %98, %111 : vector<4x256xf32>
    %113 = vector.extract_strided_slice %106 {offsets = [8, 0], sizes = [4, 256], strides = [1, 1]} : vector<16x256xf32> to vector<4x256xf32>
    %114 = arith.mulf %105, %113 : vector<4x256xf32>
    %115 = arith.addf %101, %114 : vector<4x256xf32>
    %116 = vector.extract_strided_slice %106 {offsets = [12, 0], sizes = [4, 256], strides = [1, 1]} : vector<16x256xf32> to vector<4x256xf32>
    %117 = arith.mulf %105, %116 : vector<4x256xf32>
    %118 = arith.addf %104, %117 : vector<4x256xf32>
    %119 = arith.mulf %65, %86 : vector<4x256xf32>
    %120 = vector.extract_strided_slice %22 {offsets = [0, 512], sizes = [16, 256], strides = [1, 1]} : vector<16x2304xf32> to vector<16x256xf32>
    %121 = vector.extract_strided_slice %120 {offsets = [0, 0], sizes = [4, 256], strides = [1, 1]} : vector<16x256xf32> to vector<4x256xf32>
    %122 = arith.mulf %119, %121 : vector<4x256xf32>
    %123 = arith.addf %109, %122 : vector<4x256xf32>
    %124 = vector.extract_strided_slice %120 {offsets = [4, 0], sizes = [4, 256], strides = [1, 1]} : vector<16x256xf32> to vector<4x256xf32>
    %125 = arith.mulf %119, %124 : vector<4x256xf32>
    %126 = arith.addf %112, %125 : vector<4x256xf32>
    %127 = vector.extract_strided_slice %120 {offsets = [8, 0], sizes = [4, 256], strides = [1, 1]} : vector<16x256xf32> to vector<4x256xf32>
    %128 = arith.mulf %119, %127 : vector<4x256xf32>
    %129 = arith.addf %115, %128 : vector<4x256xf32>
    %130 = vector.extract_strided_slice %120 {offsets = [12, 0], sizes = [4, 256], strides = [1, 1]} : vector<16x256xf32> to vector<4x256xf32>
    %131 = arith.mulf %119, %130 : vector<4x256xf32>
    %132 = arith.addf %118, %131 : vector<4x256xf32>
    %133 = arith.mulf %67, %86 : vector<4x256xf32>
    %134 = vector.extract_strided_slice %22 {offsets = [0, 768], sizes = [16, 256], strides = [1, 1]} : vector<16x2304xf32> to vector<16x256xf32>
    %135 = vector.extract_strided_slice %134 {offsets = [0, 0], sizes = [4, 256], strides = [1, 1]} : vector<16x256xf32> to vector<4x256xf32>
    %136 = arith.mulf %133, %135 : vector<4x256xf32>
    %137 = arith.addf %123, %136 : vector<4x256xf32>
    %138 = vector.extract_strided_slice %134 {offsets = [4, 0], sizes = [4, 256], strides = [1, 1]} : vector<16x256xf32> to vector<4x256xf32>
    %139 = arith.mulf %133, %138 : vector<4x256xf32>
    %140 = arith.addf %126, %139 : vector<4x256xf32>
    %141 = vector.extract_strided_slice %134 {offsets = [8, 0], sizes = [4, 256], strides = [1, 1]} : vector<16x256xf32> to vector<4x256xf32>
    %142 = arith.mulf %133, %141 : vector<4x256xf32>
    %143 = arith.addf %129, %142 : vector<4x256xf32>
    %144 = vector.extract_strided_slice %134 {offsets = [12, 0], sizes = [4, 256], strides = [1, 1]} : vector<16x256xf32> to vector<4x256xf32>
    %145 = arith.mulf %133, %144 : vector<4x256xf32>
    %146 = arith.addf %132, %145 : vector<4x256xf32>
    %147 = arith.mulf %69, %86 : vector<4x256xf32>
    %148 = vector.extract_strided_slice %22 {offsets = [0, 1024], sizes = [16, 256], strides = [1, 1]} : vector<16x2304xf32> to vector<16x256xf32>
    %149 = vector.extract_strided_slice %148 {offsets = [0, 0], sizes = [4, 256], strides = [1, 1]} : vector<16x256xf32> to vector<4x256xf32>
    %150 = arith.mulf %147, %149 : vector<4x256xf32>
    %151 = arith.addf %137, %150 : vector<4x256xf32>
    %152 = vector.extract_strided_slice %148 {offsets = [4, 0], sizes = [4, 256], strides = [1, 1]} : vector<16x256xf32> to vector<4x256xf32>
    %153 = arith.mulf %147, %152 : vector<4x256xf32>
    %154 = arith.addf %140, %153 : vector<4x256xf32>
    %155 = vector.extract_strided_slice %148 {offsets = [8, 0], sizes = [4, 256], strides = [1, 1]} : vector<16x256xf32> to vector<4x256xf32>
    %156 = arith.mulf %147, %155 : vector<4x256xf32>
    %157 = arith.addf %143, %156 : vector<4x256xf32>
    %158 = vector.extract_strided_slice %148 {offsets = [12, 0], sizes = [4, 256], strides = [1, 1]} : vector<16x256xf32> to vector<4x256xf32>
    %159 = arith.mulf %147, %158 : vector<4x256xf32>
    %160 = arith.addf %146, %159 : vector<4x256xf32>
    %161 = arith.mulf %71, %86 : vector<4x256xf32>
    %162 = vector.extract_strided_slice %22 {offsets = [0, 1280], sizes = [16, 256], strides = [1, 1]} : vector<16x2304xf32> to vector<16x256xf32>
    %163 = vector.extract_strided_slice %162 {offsets = [0, 0], sizes = [4, 256], strides = [1, 1]} : vector<16x256xf32> to vector<4x256xf32>
    %164 = arith.mulf %161, %163 : vector<4x256xf32>
    %165 = arith.addf %151, %164 : vector<4x256xf32>
    %166 = vector.extract_strided_slice %162 {offsets = [4, 0], sizes = [4, 256], strides = [1, 1]} : vector<16x256xf32> to vector<4x256xf32>
    %167 = arith.mulf %161, %166 : vector<4x256xf32>
    %168 = arith.addf %154, %167 : vector<4x256xf32>
    %169 = vector.extract_strided_slice %162 {offsets = [8, 0], sizes = [4, 256], strides = [1, 1]} : vector<16x256xf32> to vector<4x256xf32>
    %170 = arith.mulf %161, %169 : vector<4x256xf32>
    %171 = arith.addf %157, %170 : vector<4x256xf32>
    %172 = vector.extract_strided_slice %162 {offsets = [12, 0], sizes = [4, 256], strides = [1, 1]} : vector<16x256xf32> to vector<4x256xf32>
    %173 = arith.mulf %161, %172 : vector<4x256xf32>
    %174 = arith.addf %160, %173 : vector<4x256xf32>
    %175 = arith.mulf %73, %86 : vector<4x256xf32>
    %176 = vector.extract_strided_slice %22 {offsets = [0, 1536], sizes = [16, 256], strides = [1, 1]} : vector<16x2304xf32> to vector<16x256xf32>
    %177 = vector.extract_strided_slice %176 {offsets = [0, 0], sizes = [4, 256], strides = [1, 1]} : vector<16x256xf32> to vector<4x256xf32>
    %178 = arith.mulf %175, %177 : vector<4x256xf32>
    %179 = arith.addf %165, %178 : vector<4x256xf32>
    %180 = vector.extract_strided_slice %176 {offsets = [4, 0], sizes = [4, 256], strides = [1, 1]} : vector<16x256xf32> to vector<4x256xf32>
    %181 = arith.mulf %175, %180 : vector<4x256xf32>
    %182 = arith.addf %168, %181 : vector<4x256xf32>
    %183 = vector.extract_strided_slice %176 {offsets = [8, 0], sizes = [4, 256], strides = [1, 1]} : vector<16x256xf32> to vector<4x256xf32>
    %184 = arith.mulf %175, %183 : vector<4x256xf32>
    %185 = arith.addf %171, %184 : vector<4x256xf32>
    %186 = vector.extract_strided_slice %176 {offsets = [12, 0], sizes = [4, 256], strides = [1, 1]} : vector<16x256xf32> to vector<4x256xf32>
    %187 = arith.mulf %175, %186 : vector<4x256xf32>
    %188 = arith.addf %174, %187 : vector<4x256xf32>
    %189 = arith.mulf %75, %86 : vector<4x256xf32>
    %190 = vector.extract_strided_slice %22 {offsets = [0, 1792], sizes = [16, 256], strides = [1, 1]} : vector<16x2304xf32> to vector<16x256xf32>
    %191 = vector.extract_strided_slice %190 {offsets = [0, 0], sizes = [4, 256], strides = [1, 1]} : vector<16x256xf32> to vector<4x256xf32>
    %192 = arith.mulf %189, %191 : vector<4x256xf32>
    %193 = arith.addf %179, %192 : vector<4x256xf32>
    %194 = vector.extract_strided_slice %190 {offsets = [4, 0], sizes = [4, 256], strides = [1, 1]} : vector<16x256xf32> to vector<4x256xf32>
    %195 = arith.mulf %189, %194 : vector<4x256xf32>
    %196 = arith.addf %182, %195 : vector<4x256xf32>
    %197 = vector.extract_strided_slice %190 {offsets = [8, 0], sizes = [4, 256], strides = [1, 1]} : vector<16x256xf32> to vector<4x256xf32>
    %198 = arith.mulf %189, %197 : vector<4x256xf32>
    %199 = arith.addf %185, %198 : vector<4x256xf32>
    %200 = vector.extract_strided_slice %190 {offsets = [12, 0], sizes = [4, 256], strides = [1, 1]} : vector<16x256xf32> to vector<4x256xf32>
    %201 = arith.mulf %189, %200 : vector<4x256xf32>
    %202 = arith.addf %188, %201 : vector<4x256xf32>
    %203 = arith.mulf %77, %86 : vector<4x256xf32>
    %204 = vector.extract_strided_slice %22 {offsets = [0, 2048], sizes = [16, 256], strides = [1, 1]} : vector<16x2304xf32> to vector<16x256xf32>
    %205 = vector.extract_strided_slice %204 {offsets = [0, 0], sizes = [4, 256], strides = [1, 1]} : vector<16x256xf32> to vector<4x256xf32>
    %206 = arith.mulf %203, %205 : vector<4x256xf32>
    %207 = arith.addf %193, %206 : vector<4x256xf32>
    %208 = vector.extract_strided_slice %204 {offsets = [4, 0], sizes = [4, 256], strides = [1, 1]} : vector<16x256xf32> to vector<4x256xf32>
    %209 = arith.mulf %203, %208 : vector<4x256xf32>
    %210 = arith.addf %196, %209 : vector<4x256xf32>
    %211 = vector.extract_strided_slice %204 {offsets = [8, 0], sizes = [4, 256], strides = [1, 1]} : vector<16x256xf32> to vector<4x256xf32>
    %212 = arith.mulf %203, %211 : vector<4x256xf32>
    %213 = arith.addf %199, %212 : vector<4x256xf32>
    %214 = vector.extract_strided_slice %204 {offsets = [12, 0], sizes = [4, 256], strides = [1, 1]} : vector<16x256xf32> to vector<4x256xf32>
    %215 = arith.mulf %203, %214 : vector<4x256xf32>
    %216 = arith.addf %202, %215 : vector<4x256xf32>
    %217 = tpu.concatenate %207, %210, %213, %216 in 0 : vector<4x256xf32>, vector<4x256xf32>, vector<4x256xf32>, vector<4x256xf32> -> vector<16x256xf32>
    %c0_23 = arith.constant 0 : index
    %c0_24 = arith.constant 0 : index
    %c0_25 = arith.constant 0 : index
    %218 = vector.load %arg8[%c0_23, %c0_24, %c0_25] : memref<1x16x256xf32, #tpu.memory_space<vmem>>, vector<1x16x256xf32>
    %219 = vector.shape_cast %218 : vector<1x16x256xf32> to vector<16x256xf32>
    %220 = vector.shape_cast %217 : vector<16x256xf32> to vector<1x16x256xf32>
    tpu.vector_store %arg8[%c0_23, %c0_24, %c0_25], %220 {strides = array<i32>} : memref<1x16x256xf32, #tpu.memory_space<vmem>>, vector<1x16x256xf32>,
    return
  }
  func.func @transform_0(%arg0: i32) -> (i32, i32, i32) {
    %c0_i32 = arith.constant 0 : i32
    %c0_i32_0 = arith.constant 0 : i32
    %c0_i32_1 = arith.constant 0 : i32
    return %arg0, %c0_i32, %c0_i32_0 : i32, i32, i32
  }
  func.func @transform_1(%arg0: i32) -> (i32, i32) {
    %c0_i32 = arith.constant 0 : i32
    %c0_i32_0 = arith.constant 0 : i32
    %c0_i32_1 = arith.constant 0 : i32
    return %c0_i32, %c0_i32_0 : i32, i32
  }
  func.func @transform_2(%arg0: i32) -> (i32, i32) {
    %c0_i32 = arith.constant 0 : i32
    %c0_i32_0 = arith.constant 0 : i32
    %c0_i32_1 = arith.constant 0 : i32
    return %c0_i32, %c0_i32_0 : i32, i32
  }
  func.func @transform_3(%arg0: i32) -> (i32, i32) {
    %c0_i32 = arith.constant 0 : i32
    %c0_i32_0 = arith.constant 0 : i32
    %c0_i32_1 = arith.constant 0 : i32
    return %c0_i32, %c0_i32_0 : i32, i32
  }
  func.func @transform_4(%arg0: i32) -> (i32, i32) {
    %c0_i32 = arith.constant 0 : i32
    %c0_i32_0 = arith.constant 0 : i32
    %c0_i32_1 = arith.constant 0 : i32
    return %c0_i32, %c0_i32_0 : i32, i32
  }
  func.func @transform_5(%arg0: i32) -> (i32, i32) {
    %c0_i32 = arith.constant 0 : i32
    %c0_i32_0 = arith.constant 0 : i32
    %c0_i32_1 = arith.constant 0 : i32
    return %c0_i32, %c0_i32_0 : i32, i32
  }
  func.func @transform_6(%arg0: i32) -> (i32, i32) {
    %c0_i32 = arith.constant 0 : i32
    %c0_i32_0 = arith.constant 0 : i32
    %c0_i32_1 = arith.constant 0 : i32
    return %c0_i32, %c0_i32_0 : i32, i32
  }
  func.func @transform_7(%arg0: i32) -> (i32, i32, i32) {
    %c0_i32 = arith.constant 0 : i32
    %c0_i32_0 = arith.constant 0 : i32
    %c0_i32_1 = arith.constant 0 : i32
    return %arg0, %c0_i32, %c0_i32_0 : i32, i32, i32
  }
}

</mosaic_0001>

<llo_original>
// kernel: tpu_custom_call.1
$region0: #{tpu_custom_call.1}
  #allocation0 [shape = 'u32[]', space=smem, size = 0x4, offset = 0x4, fixed_abs, tag = 'smem constant byte address 0x4 - core index']
  #allocation1 [shape = 'u32[144,128]{1,0:T(1,128)}', space=vmem, size = 0x12000, scoped, tag = 'internal scratch']
  %s0 = inlined_call_operand.hbm [shape: f32[2,8,2304], index: 0, kind: input, shape index: {}]
  %s1 = inlined_call_operand.hbm [shape: f32[4,2304], index: 1, kind: input, shape index: {}]
  %s2 = inlined_call_operand.vmem [shape: f32[4,8], index: 2, kind: input, shape index: {}]
  %s3 = inlined_call_operand.vmem [shape: f32[20,8], index: 3, kind: input, shape index: {}]
  %s4 = inlined_call_operand.vmem [shape: f32[4,4], index: 4, kind: input, shape index: {}]
  %s5 = inlined_call_operand.vmem [shape: f32[4,4], index: 5, kind: input, shape index: {}]
  %s6 = inlined_call_operand.vmem [shape: f32[24,128], index: 6, kind: input, shape index: {}]
  %s7 = inlined_call_operand.hbm [shape: f32[2,16,256], index: 7, kind: output, shape index: {}]
  %s8 = sld [smem:[#allocation0]]
  $region69: #{tpu_custom_call.1} parent=0
    _
  %s10 = ssub.s32 1, %s8
  %s11 = scalar_select 0, %s10, %s8
  $region1: #{tpu_custom_call.1} parent=0
    #allocation2 [shape = 'u8[147456]{0}', space=vmem, size = 0x24000, scoped, tag = 'input window, operand 0']
    #allocation3 [shape = 's32[2]{0}', space=sflag, size = 0x8, scoped, tag = 'scoped memory for tpu_custom_call.1']
    #allocation4 [shape = 's32[2]{0}', space=sflag, size = 0x8, scoped, tag = 'scoped memory for tpu_custom_call.1']
    #allocation5 [shape = 'u8[36864]{0}', space=vmem, size = 0x9000, scoped, tag = 'input window, operand 1, single buffered']
    #allocation6 [shape = 's32[1]{0}', space=sflag, size = 0x4, scoped, tag = 'scoped memory for tpu_custom_call.1']
    #allocation7 [shape = 'u8[32768]{0}', space=vmem, size = 0x8000, scoped, tag = 'output window, operand 0']
    %12 = vsyncpa [#allocation3], 0
    %s13 = scalar_lea.sflag [#allocation3], 1
    %14 = vsyncpa %s13, 0
    %15 = vsyncpa [#allocation6], 0
    %16 = vsyncpa [#allocation4], 0
    %s17 = scalar_lea.sflag [#allocation4], 1
    %18 = vsyncpa %s17, 0
    loop: start=0, step=1, limit=4
    $region2: #{tpu_custom_call.1} parent=1 // loop_pre_header
      _
    $region3: #{tpu_custom_call.1} parent=1 // loop_header
      %s20 = sphi 0, %s24
      %p21 = scmp.ge.s32.totalorder %s20, 4
      %s30 = sphi 0, %s32
      %s33 = sphi 0, %s30
      %s34 = sphi 0, %s33
      %s50 = sphi 0, %s34
      %s54 = sphi 0, %s54
      %s56 = sphi 0, %s54
      %s57 = sphi 0, %s56
      %s71 = sphi 0, %s57
      %s75 = sphi 0, %s75
      %s77 = sphi 0, %s75
      %s78 = sphi 0, %s77
      %s92 = sphi 0, %s78
      %s96 = sphi 0, %s96
      %s98 = sphi 0, %s96
      %s99 = sphi 0, %s98
      %s113 = sphi 0, %s99
      %s117 = sphi 0, %s117
      %s119 = sphi 0, %s117
      %s120 = sphi 0, %s119
      %s134 = sphi 0, %s120
      %s138 = sphi 0, %s138
      %s140 = sphi 0, %s138
      %s141 = sphi 0, %s140
      %s155 = sphi 0, %s141
      %s159 = sphi 0, %s159
      %s161 = sphi 0, %s159
      %s162 = sphi 0, %s161
      %s176 = sphi 0, %s162
      %s182 = sphi 0, %s184
      %s185 = sphi 0, %s182
      %s186 = sphi 0, %s185
      %s202 = sphi 0, %s186
    $region4: #{tpu_custom_call.1} parent=1 // loop_header_branch
      %23 = sbr.rel (%p21) target = $region8
    $region5: #{tpu_custom_call.1} parent=1 // loop_body
      %s25 = ssub.s32 %s20, 1
      %s26 = ssub.s32 %s20, 2
      %s27 = sadd.s32 %s20, 1
      %s28 = ssub.s32 %s20, %s27
      %p29 = scmp.eq.s32.totalorder %s28, 0
      %s31 = sadd.s32 %s30, 1
      %s32 = scalar_select %p29, %s30, %s31
      %p35 = pneg %p29
      %p36 = scmp.eq.s32.totalorder %s20, 1
      %p37 = por %p35, %p36
      %p38 = scmp.ne.s32.totalorder %s30, %s33
      %p39 = scmp.eq.s32.totalorder %s20, 0
      %p40 = por %p38, %p39
      %p41 = scmp.ne.s32.totalorder %s30, %s33
      %p42 = scmp.eq.s32.totalorder %s25, 1
      %p43 = por %p41, %p42
      %p44 = scmp.ne.s32.totalorder %s33, %s34
      %p45 = scmp.eq.s32.totalorder %s25, 0
      %p46 = por %p44, %p45
      %p47 = scmp.ne.s32.totalorder %s33, %s34
      %p48 = scmp.eq.s32.totalorder %s26, 1
      %p49 = por %p47, %p48
      %p51 = scmp.ne.s32.totalorder %s34, %s50
      %p52 = scmp.eq.s32.totalorder %s26, 0
      %p53 = por %p51, %p52
      %s55 = sadd.s32 %s54, 1
      %p58 = scmp.eq.s32.totalorder %s20, 1
      %p59 = scmp.ne.s32.totalorder %s54, %s56
      %p60 = scmp.eq.s32.totalorder %s20, 0
      %p61 = por %p59, %p60
      %p62 = scmp.ne.s32.totalorder %s54, %s56
      %p63 = scmp.eq.s32.totalorder %s25, 1
      %p64 = por %p62, %p63
      %p65 = scmp.ne.s32.totalorder %s56, %s57
      %p66 = scmp.eq.s32.totalorder %s25, 0
      %p67 = por %p65, %p66
      %p68 = scmp.ne.s32.totalorder %s56, %s57
      %p69 = scmp.eq.s32.totalorder %s26, 1
      %p70 = por %p68, %p69
      %p72 = scmp.ne.s32.totalorder %s57, %s71
      %p73 = scmp.eq.s32.totalorder %s26, 0
      %p74 = por %p72, %p73
      %s76 = sadd.s32 %s75, 1
      %p79 = scmp.eq.s32.totalorder %s20, 1
      %p80 = scmp.ne.s32.totalorder %s75, %s77
      %p81 = scmp.eq.s32.totalorder %s20, 0
      %p82 = por %p80, %p81
      %p83 = scmp.ne.s32.totalorder %s75, %s77
      %p84 = scmp.eq.s32.totalorder %s25, 1
      %p85 = por %p83, %p84
      %p86 = scmp.ne.s32.totalorder %s77, %s78
      %p87 = scmp.eq.s32.totalorder %s25, 0
      %p88 = por %p86, %p87
      %p89 = scmp.ne.s32.totalorder %s77, %s78
      %p90 = scmp.eq.s32.totalorder %s26, 1
      %p91 = por %p89, %p90
      %p93 = scmp.ne.s32.totalorder %s78, %s92
      %p94 = scmp.eq.s32.totalorder %s26, 0
      %p95 = por %p93, %p94
      %s97 = sadd.s32 %s96, 1
      %p100 = scmp.eq.s32.totalorder %s20, 1
      %p101 = scmp.ne.s32.totalorder %s96, %s98
      %p102 = scmp.eq.s32.totalorder %s20, 0
      %p103 = por %p101, %p102
      %p104 = scmp.ne.s32.totalorder %s96, %s98
      %p105 = scmp.eq.s32.totalorder %s25, 1
      %p106 = por %p104, %p105
      %p107 = scmp.ne.s32.totalorder %s98, %s99
      %p108 = scmp.eq.s32.totalorder %s25, 0
      %p109 = por %p107, %p108
      %p110 = scmp.ne.s32.totalorder %s98, %s99
      %p111 = scmp.eq.s32.totalorder %s26, 1
      %p112 = por %p110, %p111
      %p114 = scmp.ne.s32.totalorder %s99, %s113
      %p115 = scmp.eq.s32.totalorder %s26, 0
      %p116 = por %p114, %p115
      %s118 = sadd.s32 %s117, 1
      %p121 = scmp.eq.s32.totalorder %s20, 1
      %p122 = scmp.ne.s32.totalorder %s117, %s119
      %p123 = scmp.eq.s32.totalorder %s20, 0
      %p124 = por %p122, %p123
      %p125 = scmp.ne.s32.totalorder %s117, %s119
      %p126 = scmp.eq.s32.totalorder %s25, 1
      %p127 = por %p125, %p126
      %p128 = scmp.ne.s32.totalorder %s119, %s120
      %p129 = scmp.eq.s32.totalorder %s25, 0
      %p130 = por %p128, %p129
      %p131 = scmp.ne.s32.totalorder %s119, %s120
      %p132 = scmp.eq.s32.totalorder %s26, 1
      %p133 = por %p131, %p132
      %p135 = scmp.ne.s32.totalorder %s120, %s134
      %p136 = scmp.eq.s32.totalorder %s26, 0
      %p137 = por %p135, %p136
      %s139 = sadd.s32 %s138, 1
      %p142 = scmp.eq.s32.totalorder %s20, 1
      %p143 = scmp.ne.s32.totalorder %s138, %s140
      %p144 = scmp.eq.s32.totalorder %s20, 0
      %p145 = por %p143, %p144
      %p146 = scmp.ne.s32.totalorder %s138, %s140
      %p147 = scmp.eq.s32.totalorder %s25, 1
      %p148 = por %p146, %p147
      %p149 = scmp.ne.s32.totalorder %s140, %s141
      %p150 = scmp.eq.s32.totalorder %s25, 0
      %p151 = por %p149, %p150
      %p152 = scmp.ne.s32.totalorder %s140, %s141
      %p153 = scmp.eq.s32.totalorder %s26, 1
      %p154 = por %p152, %p153
      %p156 = scmp.ne.s32.totalorder %s141, %s155
      %p157 = scmp.eq.s32.totalorder %s26, 0
      %p158 = por %p156, %p157
      %s160 = sadd.s32 %s159, 1
      %p163 = scmp.eq.s32.totalorder %s20, 1
      %p164 = scmp.ne.s32.totalorder %s159, %s161
      %p165 = scmp.eq.s32.totalorder %s20, 0
      %p166 = por %p164, %p165
      %p167 = scmp.ne.s32.totalorder %s159, %s161
      %p168 = scmp.eq.s32.totalorder %s25, 1
      %p169 = por %p167, %p168
      %p170 = scmp.ne.s32.totalorder %s161, %s162
      %p171 = scmp.eq.s32.totalorder %s25, 0
      %p172 = por %p170, %p171
      %p173 = scmp.ne.s32.totalorder %s161, %s162
      %p174 = scmp.eq.s32.totalorder %s26, 1
      %p175 = por %p173, %p174
      %p177 = scmp.ne.s32.totalorder %s162, %s176
      %p178 = scmp.eq.s32.totalorder %s26, 0
      %p179 = por %p177, %p178
      %s180 = ssub.s32 %s20, %s27
      %p181 = scmp.eq.s32.totalorder %s180, 0
      %s183 = sadd.s32 %s182, 1
      %s184 = scalar_select %p181, %s182, %s183
      %p187 = pneg %p181
      %p188 = scmp.eq.s32.totalorder %s20, 1
      %p189 = por %p187, %p188
      %p190 = scmp.ne.s32.totalorder %s182, %s185
      %p191 = scmp.eq.s32.totalorder %s20, 0
      %p192 = por %p190, %p191
      %p193 = scmp.ne.s32.totalorder %s182, %s185
      %p194 = scmp.eq.s32.totalorder %s25, 1
      %p195 = por %p193, %p194
      %p196 = scmp.ne.s32.totalorder %s185, %s186
      %p197 = scmp.eq.s32.totalorder %s25, 0
      %p198 = por %p196, %p197
      %p199 = scmp.ne.s32.totalorder %s185, %s186
      %p200 = scmp.eq.s32.totalorder %s26, 1
      %p201 = por %p199, %p200
      %p203 = scmp.ne.s32.totalorder %s186, %s202
      %p204 = scmp.eq.s32.totalorder %s26, 0
      %p205 = por %p203, %p204
      %p206 = scmp.le.s32.totalorder 1, %s20
      %p207 = scmp.lt.s32.totalorder %s20, 3
      %p208 = pnand %p206, %p207
      %p209 = pneg %p208
      // Predicated region
      $region9: #{tpu_custom_call.1} parent=5 // pred_check
        _
      $region10: #{tpu_custom_call.1} parent=5 // pred_check_branch
        %211 = sbr.rel (%p208) target = $region12
      $region11: #{tpu_custom_call.1} parent=5 // pred_region
        %s212 = ssub.s32 %s20, 1
        // Predicated region
        $region13: #{tpu_custom_call.1} parent=11 // pred_check
          %p213 = pneg %p67
        $region14: #{tpu_custom_call.1} parent=11 // pred_check_branch
          %215 = sbr.rel (%p213) target = $region16
        $region15: #{tpu_custom_call.1} parent=11 // pred_region
          %s217 = ssub.s32 1152, 1152
          %218 = vsyncadd [#allocation6], %s217
          %s220 = sshll.u32 [#allocation5], 4
          %s221 = int_to_ptr.vmem [resolvable:$true] %s220
          %223 = dma.hbm_to_vmem [thread:$0]  %s1, 1152, %s221, [#allocation6]
        $region16: #{tpu_custom_call.1} parent=11 // pred_fallthru
          _
        // Predicated region
        $region17: #{tpu_custom_call.1} parent=11 // pred_check
          %p224 = pneg %p88
        $region18: #{tpu_custom_call.1} parent=11 // pred_check_branch
          %226 = sbr.rel (%p224) target = $region20
        $region19: #{tpu_custom_call.1} parent=11 // pred_region
          _
        $region20: #{tpu_custom_call.1} parent=11 // pred_fallthru
          _
        // Predicated region
        $region21: #{tpu_custom_call.1} parent=11 // pred_check
          %p227 = pneg %p109
        $region22: #{tpu_custom_call.1} parent=11 // pred_check_branch
          %229 = sbr.rel (%p227) target = $region24
        $region23: #{tpu_custom_call.1} parent=11 // pred_region
          _
        $region24: #{tpu_custom_call.1} parent=11 // pred_fallthru
          _
        // Predicated region
        $region25: #{tpu_custom_call.1} parent=11 // pred_check
          %p230 = pneg %p130
        $region26: #{tpu_custom_call.1} parent=11 // pred_check_branch
          %232 = sbr.rel (%p230) target = $region28
        $region27: #{tpu_custom_call.1} parent=11 // pred_region
          _
        $region28: #{tpu_custom_call.1} parent=11 // pred_fallthru
          _
        // Predicated region
        $region29: #{tpu_custom_call.1} parent=11 // pred_check
          %p233 = pneg %p151
        $region30: #{tpu_custom_call.1} parent=11 // pred_check_branch
          %235 = sbr.rel (%p233) target = $region32
        $region31: #{tpu_custom_call.1} parent=11 // pred_region
          _
        $region32: #{tpu_custom_call.1} parent=11 // pred_fallthru
          _
        // Predicated region
        $region33: #{tpu_custom_call.1} parent=11 // pred_check
          %p236 = pneg %p172
        $region34: #{tpu_custom_call.1} parent=11 // pred_check_branch
          %238 = sbr.rel (%p236) target = $region36
        $region35: #{tpu_custom_call.1} parent=11 // pred_region
          _
        $region36: #{tpu_custom_call.1} parent=11 // pred_fallthru
          _
      $region12: #{tpu_custom_call.1} parent=5 // pred_fallthru
        _
      %p239 = scmp.lt.s32.totalorder %s20, 2
      // Predicated region
      $region37: #{tpu_custom_call.1} parent=5 // pred_check
        %p240 = pneg %p239
      $region38: #{tpu_custom_call.1} parent=5 // pred_check_branch
        %242 = sbr.rel (%p240) target = $region40
      $region39: #{tpu_custom_call.1} parent=5 // pred_region
        // Predicated region
        $region41: #{tpu_custom_call.1} parent=39 // pred_check
          %p243 = pneg %p40
        $region42: #{tpu_custom_call.1} parent=39 // pred_check_branch
          %245 = sbr.rel (%p243) target = $region44
        $region43: #{tpu_custom_call.1} parent=39 // pred_region
          %s246 = sand.u32 %s30, 1
          %s247 = scalar_lea.sflag [#allocation3], %s246
          %s248 = sand.u32 %s30, 1
          %s249 = smul.addr %s248, 144
          %s250 = scalar_lea.vmem [#allocation2], %s249
          %s252 = ssub.s32 2304, 2304
          %253 = vsyncadd %s247, %s252
          %s254 = smul.addr %s20, 18
          %s255 = smul.addr %s254, 128
          %s256 = scalar_lea.hbm %s0, %s255
          %s258 = sshll.u32 %s250, 4
          %s259 = int_to_ptr.vmem [resolvable:$true] %s258
          %261 = dma.hbm_to_vmem [thread:$0]  %s256, 2304, %s259, %s247
        $region44: #{tpu_custom_call.1} parent=39 // pred_fallthru
          _
      $region40: #{tpu_custom_call.1} parent=5 // pred_fallthru
        _
      %p262 = scmp.le.s32.totalorder 1, %s20
      %p263 = scmp.lt.s32.totalorder %s20, 3
      %p264 = pnand %p262, %p263
      %p265 = pneg %p264
      // Predicated region
      $region45: #{tpu_custom_call.1} parent=5 // pred_check
        _
      $region46: #{tpu_custom_call.1} parent=5 // pred_check_branch
        %267 = sbr.rel (%p264) target = $region48
      $region47: #{tpu_custom_call.1} parent=5 // pred_region
        %s268 = ssub.s32 %s20, 1
        %s269 = sand.u32 %s33, 1
        %s270 = scalar_lea.sflag [#allocation3], %s269
        %s271 = sand.u32 %s33, 1
        %s272 = smul.addr %s271, 144
        %s273 = scalar_lea.vmem [#allocation2], %s272
        // Predicated region
        $region49: #{tpu_custom_call.1} parent=47 // pred_check
          %p274 = pneg %p46
        $region50: #{tpu_custom_call.1} parent=47 // pred_check_branch
          %276 = sbr.rel (%p274) target = $region52
        $region51: #{tpu_custom_call.1} parent=47 // pred_region
          %277 = dma.done %s270, 2304
        $region52: #{tpu_custom_call.1} parent=47 // pred_fallthru
          _
        // Predicated region
        $region53: #{tpu_custom_call.1} parent=47 // pred_check
          %p278 = pneg %p67
        $region54: #{tpu_custom_call.1} parent=47 // pred_check_branch
          %280 = sbr.rel (%p278) target = $region56
        $region55: #{tpu_custom_call.1} parent=47 // pred_region
          %281 = dma.done [#allocation6], 1152
        $region56: #{tpu_custom_call.1} parent=47 // pred_fallthru
          _
        %s282 = sand.u32 %s33, 1
        %s283 = scalar_lea.sflag [#allocation3], %s282
        %s284 = sand.u32 %s33, 1
        %s285 = smul.addr %s284, 144
        %s286 = scalar_lea.vmem [#allocation2], %s285
        %p287 = pneg %p46
        %p288 = pneg %p43
        %p289 = pneg %p67
        %p290 = pneg %p64
        %p291 = pneg %p88
        %p292 = pneg %p85
        %p293 = pneg %p109
        %p294 = pneg %p106
        %p295 = pneg %p130
        %p296 = pneg %p127
        %p297 = pneg %p151
        %p298 = pneg %p148
        %p299 = pneg %p172
        %p300 = pneg %p169
        %p301 = pneg %p198
        %p302 = pneg %p195
        %s303 = sand.u32 %s185, 1
        %s304 = scalar_lea.sflag [#allocation4], %s303
        %s305 = sand.u32 %s185, 1
        %s306 = smul.addr %s305, 32
        %s307 = scalar_lea.vmem [#allocation7], %s306
        %v308 = vld [vmem:[%s273] sm:$0xff]
        %v309 = vld [vmem:[%s273 + $0x8] sm:$0xff]
        %v310 = vld [vmem:[%s273 + $0x10] sm:$0xff]
        %v311 = vld [vmem:[%s273 + $0x18] sm:$0xff]
        %v312 = vld [vmem:[%s273 + $0x20] sm:$0xff]
        %v313 = vld [vmem:[%s273 + $0x28] sm:$0xff]
        %v314 = vld [vmem:[%s273 + $0x30] sm:$0xff]
        %v315 = vld [vmem:[%s273 + $0x38] sm:$0xff]
        %v316 = vld [vmem:[%s273 + $0x40] sm:$0xff]
        %v317 = vld [vmem:[%s273 + $0x48] sm:$0xff]
        %v318 = vld [vmem:[%s273 + $0x50] sm:$0xff]
        %v319 = vld [vmem:[%s273 + $0x58] sm:$0xff]
        %v320 = vld [vmem:[%s273 + $0x60] sm:$0xff]
        %v321 = vld [vmem:[%s273 + $0x68] sm:$0xff]
        %v322 = vld [vmem:[%s273 + $0x70] sm:$0xff]
        %v323 = vld [vmem:[%s273 + $0x78] sm:$0xff]
        %v324 = vld [vmem:[%s273 + $0x80] sm:$0xff]
        %v325 = vld [vmem:[%s273 + $0x88] sm:$0xff]
        %v326 = vld [vmem:[#allocation5] sm:$0xff]
        %v327 = vld [vmem:[#allocation5 + $0x8] sm:$0xff]
        %v328 = vld [vmem:[#allocation5 + $0x10] sm:$0xff]
        %v329 = vld [vmem:[#allocation5 + $0x18] sm:$0xff]
        %v330 = vld [vmem:[#allocation5 + $0x20] sm:$0xff]
        %v331 = vld [vmem:[#allocation5 + $0x28] sm:$0xff]
        %v332 = vld [vmem:[#allocation5 + $0x30] sm:$0xff]
        %v333 = vld [vmem:[#allocation5 + $0x38] sm:$0xff]
        %v334 = vld [vmem:[#allocation5 + $0x40] sm:$0xff]
        %v335 = vld [vmem:[%s2] sm:$0xf]
        %v336 = vld [vmem:[%s3] sm:$0xff]
        %v337 = vld [vmem:[%s3 + $0x8] sm:$0xff]
        %v338 = vld [vmem:[%s3 + $0x10] sm:$0xf]
        %v339 = vld [vmem:[%s4] sm:$0xf]
        %v340 = vld [vmem:[%s5] sm:$0xf]
        %v341 = vld [vmem:[%s6] sm:$0xff]
        %v342 = vld [vmem:[%s6 + $0x8] sm:$0xff]
        %v343 = vld [vmem:[%s6 + $0x10] sm:$0xff]
        %345 = vset.pattern.permute.xlu0 0
        %346 = vperm.xlu0 %345, %v341
        %v347 = vpop.permute.xlu0 %346
        %vm349 = vcmask 64512
        %v351 = vsel %vm349, %v335, 0
        %353 = vmatprep.subr.mxu0 %v317
        %354 = vmatpush1.msra.mxu0 %v316
        %355 = vmatprep.subr.mxu0 0.0
        %356 = vmatpush1.msra.mxu0 0.0
        %357 = vmatprep.subr.mxu0 0.0
        %358 = vmatpush1.msra.mxu0 0.0
        %359 = vmatprep.subr.mxu0 0.0
        %360 = vmatpush1.msra.mxu0 0.0
        %361 = vmatprep.subr.mxu0 0.0
        %362 = vmatpush1.msra.mxu0 0.0
        %363 = vmatprep.subr.mxu0 0.0
        %364 = vmatpush1.msra.mxu0 0.0
        %365 = vmatprep.subr.mxu0 0.0
        %366 = vmatpush1.msra.mxu0 0.0
        %367 = vmatprep.subr.mxu0 0.0
        %368 = vmatpush1.msra.mxu0 0.0
        %369 = vmatprep.subr.mxu0 0.0
        %370 = vmatpush1.msra.mxu0 0.0
        %371 = vmatprep.subr.mxu0 0.0
        %372 = vmatpush1.msra.mxu0 0.0
        %373 = vmatprep.subr.mxu0 0.0
        %374 = vmatpush1.msra.mxu0 0.0
        %375 = vmatprep.subr.mxu0 0.0
        %376 = vmatpush1.msra.mxu0 0.0
        %377 = vmatprep.subr.mxu0 0.0
        %378 = vmatpush1.msra.mxu0 0.0
        %379 = vmatprep.subr.mxu0 0.0
        %380 = vmatpush1.msra.mxu0 0.0
        %381 = vmatprep.subr.mxu0 0.0
        %382 = vmatpush1.msra.mxu0 0.0
        %383 = vmatprep.subr.mxu0 0.0
        %384 = vmatpush1.msra.mxu0 0.0
        %385 = vmatprep.subr.mxu0 0.0
        %386 = vmatpush1.msra.mxu0 0.0
        %387 = vmatprep.subr.mxu0 0.0
        %388 = vmatpush1.msra.mxu0 0.0
        %389 = vmatprep.subr.mxu0 0.0
        %390 = vmatpush1.msra.mxu0 0.0
        %391 = vmatprep.subr.mxu0 0.0
        %392 = vmatpush1.msra.mxu0 0.0
        %393 = vmatprep.subr.mxu0 0.0
        %394 = vmatpush1.msra.mxu0 0.0
        %395 = vmatprep.subr.mxu0 0.0
        %396 = vmatpush1.msra.mxu0 0.0
        %397 = vmatprep.subr.mxu0 0.0
        %398 = vmatpush1.msra.mxu0 0.0
        %399 = vmatprep.subr.mxu0 0.0
        %400 = vmatpush1.msra.mxu0 0.0
        %401 = vmatprep.subr.mxu0 0.0
        %402 = vmatpush1.msra.mxu0 0.0
        %403 = vmatprep.subr.mxu0 0.0
        %404 = vmatpush1.msra.mxu0 0.0
        %405 = vmatprep.subr.mxu0 0.0
        %406 = vmatpush1.msra.mxu0 0.0
        %407 = vmatprep.subr.mxu0 0.0
        %408 = vmatpush1.msra.mxu0 0.0
        %409 = vmatprep.subr.mxu0 0.0
        %410 = vmatpush1.msra.mxu0 0.0
        %411 = vmatprep.subr.mxu0 0.0
        %412 = vmatpush1.msra.mxu0 0.0
        %413 = vmatprep.subr.mxu0 0.0
        %414 = vmatpush1.msra.mxu0 0.0
        %415 = vmatprep.subr.mxu0 0.0
        %416 = vmatpush1.msra.mxu0 0.0
        %417 = vmatprep.mubr.f32.mxu0 0.0
        %418 = vmatmul.mubr.f32.gmra.mrb[0].mxu0 %v351
        %v419 = vpop.f32.mrb[0].mxu0
        %v420 = vadd.f32 %v347, %v419
        %v421 = vpop.f32.mrb[0].mxu0
        %v422 = vadd.f32 %v347, %v421
        %423 = vdwg.mxu0
        %424 = vset.pattern.permute.xlu0 6
        %425 = vperm.xlu0 %424, %v341
        %v426 = vpop.permute.xlu0 %425
        %429 = vset.pattern.permute.xlu0 6
        %430 = vperm.xlu0 %429, %v342
        %v431 = vpop.permute.xlu0 %430
        %434 = vset.pattern.permute.xlu0 6
        %435 = vperm.xlu0 %434, %v343
        %v436 = vpop.permute.xlu0 %435
        %v439 = vsel %vm349, %v336, 0
        %v442 = vsel %vm349, %v337, 0
        %v445 = vsel %vm349, %v338, 0
        %447 = vmatprep.subr.mxu0 %v309
        %448 = vmatpush1.msra.mxu0 %v308
        %449 = vmatprep.subr.mxu0 0.0
        %450 = vmatpush1.msra.mxu0 0.0
        %451 = vmatprep.subr.mxu0 0.0
        %452 = vmatpush1.msra.mxu0 0.0
        %453 = vmatprep.subr.mxu0 0.0
        %454 = vmatpush1.msra.mxu0 0.0
        %455 = vmatprep.subr.mxu0 0.0
        %456 = vmatpush1.msra.mxu0 0.0
        %457 = vmatprep.subr.mxu0 0.0
        %458 = vmatpush1.msra.mxu0 0.0
        %459 = vmatprep.subr.mxu0 0.0
        %460 = vmatpush1.msra.mxu0 0.0
        %461 = vmatprep.subr.mxu0 0.0
        %462 = vmatpush1.msra.mxu0 0.0
        %463 = vmatprep.subr.mxu0 0.0
        %464 = vmatpush1.msra.mxu0 0.0
        %465 = vmatprep.subr.mxu0 0.0
        %466 = vmatpush1.msra.mxu0 0.0
        %467 = vmatprep.subr.mxu0 0.0
        %468 = vmatpush1.msra.mxu0 0.0
        %469 = vmatprep.subr.mxu0 0.0
        %470 = vmatpush1.msra.mxu0 0.0
        %471 = vmatprep.subr.mxu0 0.0
        %472 = vmatpush1.msra.mxu0 0.0
        %473 = vmatprep.subr.mxu0 0.0
        %474 = vmatpush1.msra.mxu0 0.0
        %475 = vmatprep.subr.mxu0 0.0
        %476 = vmatpush1.msra.mxu0 0.0
        %477 = vmatprep.subr.mxu0 0.0
        %478 = vmatpush1.msra.mxu0 0.0
        %479 = vmatprep.subr.mxu0 0.0
        %480 = vmatpush1.msra.mxu0 0.0
        %481 = vmatprep.subr.mxu0 0.0
        %482 = vmatpush1.msra.mxu0 0.0
        %483 = vmatprep.subr.mxu0 0.0
        %484 = vmatpush1.msra.mxu0 0.0
        %485 = vmatprep.subr.mxu0 0.0
        %486 = vmatpush1.msra.mxu0 0.0
        %487 = vmatprep.subr.mxu0 0.0
        %488 = vmatpush1.msra.mxu0 0.0
        %489 = vmatprep.subr.mxu0 0.0
        %490 = vmatpush1.msra.mxu0 0.0
        %491 = vmatprep.subr.mxu0 0.0
        %492 = vmatpush1.msra.mxu0 0.0
        %493 = vmatprep.subr.mxu0 0.0
        %494 = vmatpush1.msra.mxu0 0.0
        %495 = vmatprep.subr.mxu0 0.0
        %496 = vmatpush1.msra.mxu0 0.0
        %497 = vmatprep.subr.mxu0 0.0
        %498 = vmatpush1.msra.mxu0 0.0
        %499 = vmatprep.subr.mxu0 0.0
        %500 = vmatpush1.msra.mxu0 0.0
        %501 = vmatprep.subr.mxu0 0.0
        %502 = vmatpush1.msra.mxu0 0.0
        %503 = vmatprep.subr.mxu0 0.0
        %504 = vmatpush1.msra.mxu0 0.0
        %505 = vmatprep.subr.mxu0 0.0
        %506 = vmatpush1.msra.mxu0 0.0
        %507 = vmatprep.subr.mxu0 0.0
        %508 = vmatpush1.msra.mxu0 0.0
        %509 = vmatprep.subr.mxu0 0.0
        %510 = vmatpush1.msra.mxu0 0.0
        %511 = vmatprep.mubr.f32.mxu0 0.0
        %512 = vmatmul.mubr.f32.gmra.mrb[0].mxu0 %v439
        %v513 = vpop.f32.mrb[0].mxu0
        %v514 = vadd.f32 %v426, %v513
        %v515 = vpop.f32.mrb[0].mxu0
        %v516 = vadd.f32 %v426, %v515
        %517 = vmatprep.mubr.f32.mxu0 0.0
        %518 = vmatmul.mubr.f32.gmra.mrb[0].mxu0 %v442
        %v519 = vpop.f32.mrb[0].mxu0
        %v520 = vadd.f32 %v431, %v519
        %v521 = vpop.f32.mrb[0].mxu0
        %v522 = vadd.f32 %v431, %v521
        %523 = vmatprep.mubr.f32.mxu0 0.0
        %524 = vmatmul.mubr.f32.gmra.mrb[0].mxu0 %v445
        %v525 = vpop.f32.mrb[0].mxu0
        %v526 = vadd.f32 %v436, %v525
        %v527 = vpop.f32.mrb[0].mxu0
        %v528 = vadd.f32 %v436, %v527
        %529 = vdwg.mxu0
        %530 = vmatprep.subr.mxu0 %v311
        %531 = vmatpush1.msra.mxu0 %v310
        %532 = vmatprep.subr.mxu0 0.0
        %533 = vmatpush1.msra.mxu0 0.0
        %534 = vmatprep.subr.mxu0 0.0
        %535 = vmatpush1.msra.mxu0 0.0
        %536 = vmatprep.subr.mxu0 0.0
        %537 = vmatpush1.msra.mxu0 0.0
        %538 = vmatprep.subr.mxu0 0.0
        %539 = vmatpush1.msra.mxu0 0.0
        %540 = vmatprep.subr.mxu0 0.0
        %541 = vmatpush1.msra.mxu0 0.0
        %542 = vmatprep.subr.mxu0 0.0
        %543 = vmatpush1.msra.mxu0 0.0
        %544 = vmatprep.subr.mxu0 0.0
        %545 = vmatpush1.msra.mxu0 0.0
        %546 = vmatprep.subr.mxu0 0.0
        %547 = vmatpush1.msra.mxu0 0.0
        %548 = vmatprep.subr.mxu0 0.0
        %549 = vmatpush1.msra.mxu0 0.0
        %550 = vmatprep.subr.mxu0 0.0
        %551 = vmatpush1.msra.mxu0 0.0
        %552 = vmatprep.subr.mxu0 0.0
        %553 = vmatpush1.msra.mxu0 0.0
        %554 = vmatprep.subr.mxu0 0.0
        %555 = vmatpush1.msra.mxu0 0.0
        %556 = vmatprep.subr.mxu0 0.0
        %557 = vmatpush1.msra.mxu0 0.0
        %558 = vmatprep.subr.mxu0 0.0
        %559 = vmatpush1.msra.mxu0 0.0
        %560 = vmatprep.subr.mxu0 0.0
        %561 = vmatpush1.msra.mxu0 0.0
        %562 = vmatprep.subr.mxu0 0.0
        %563 = vmatpush1.msra.mxu0 0.0
        %564 = vmatprep.subr.mxu0 0.0
        %565 = vmatpush1.msra.mxu0 0.0
        %566 = vmatprep.subr.mxu0 0.0
        %567 = vmatpush1.msra.mxu0 0.0
        %568 = vmatprep.subr.mxu0 0.0
        %569 = vmatpush1.msra.mxu0 0.0
        %570 = vmatprep.subr.mxu0 0.0
        %571 = vmatpush1.msra.mxu0 0.0
        %572 = vmatprep.subr.mxu0 0.0
        %573 = vmatpush1.msra.mxu0 0.0
        %574 = vmatprep.subr.mxu0 0.0
        %575 = vmatpush1.msra.mxu0 0.0
        %576 = vmatprep.subr.mxu0 0.0
        %577 = vmatpush1.msra.mxu0 0.0
        %578 = vmatprep.subr.mxu0 0.0
        %579 = vmatpush1.msra.mxu0 0.0
        %580 = vmatprep.subr.mxu0 0.0
        %581 = vmatpush1.msra.mxu0 0.0
        %582 = vmatprep.subr.mxu0 0.0
        %583 = vmatpush1.msra.mxu0 0.0
        %584 = vmatprep.subr.mxu0 0.0
        %585 = vmatpush1.msra.mxu0 0.0
        %586 = vmatprep.subr.mxu0 0.0
        %587 = vmatpush1.msra.mxu0 0.0
        %588 = vmatprep.subr.mxu0 0.0
        %589 = vmatpush1.msra.mxu0 0.0
        %590 = vmatprep.subr.mxu0 0.0
        %591 = vmatpush1.msra.mxu0 0.0
        %592 = vmatprep.subr.mxu0 0.0
        %593 = vmatpush1.msra.mxu0 0.0
        %594 = vmatprep.mubr.f32.mxu0 0.0
        %595 = vmatmul.mubr.f32.gmra.mrb[0].mxu0 %v439
        %v596 = vpop.f32.mrb[0].mxu0
        %v597 = vadd.f32 %v426, %v596
        %v598 = vpop.f32.mrb[0].mxu0
        %v599 = vadd.f32 %v426, %v598
        %600 = vmatprep.mubr.f32.mxu0 0.0
        %601 = vmatmul.mubr.f32.gmra.mrb[0].mxu0 %v442
        %v602 = vpop.f32.mrb[0].mxu0
        %v603 = vadd.f32 %v431, %v602
        %v604 = vpop.f32.mrb[0].mxu0
        %v605 = vadd.f32 %v431, %v604
        %606 = vmatprep.mubr.f32.mxu0 0.0
        %607 = vmatmul.mubr.f32.gmra.mrb[0].mxu0 %v445
        %v608 = vpop.f32.mrb[0].mxu0
        %v609 = vadd.f32 %v436, %v608
        %v610 = vpop.f32.mrb[0].mxu0
        %v611 = vadd.f32 %v436, %v610
        %612 = vdwg.mxu0
        %613 = vmatprep.subr.mxu0 %v313
        %614 = vmatpush1.msra.mxu0 %v312
        %615 = vmatprep.subr.mxu0 0.0
        %616 = vmatpush1.msra.mxu0 0.0
        %617 = vmatprep.subr.mxu0 0.0
        %618 = vmatpush1.msra.mxu0 0.0
        %619 = vmatprep.subr.mxu0 0.0
        %620 = vmatpush1.msra.mxu0 0.0
        %621 = vmatprep.subr.mxu0 0.0
        %622 = vmatpush1.msra.mxu0 0.0
        %623 = vmatprep.subr.mxu0 0.0
        %624 = vmatpush1.msra.mxu0 0.0
        %625 = vmatprep.subr.mxu0 0.0
        %626 = vmatpush1.msra.mxu0 0.0
        %627 = vmatprep.subr.mxu0 0.0
        %628 = vmatpush1.msra.mxu0 0.0
        %629 = vmatprep.subr.mxu0 0.0
        %630 = vmatpush1.msra.mxu0 0.0
        %631 = vmatprep.subr.mxu0 0.0
        %632 = vmatpush1.msra.mxu0 0.0
        %633 = vmatprep.subr.mxu0 0.0
        %634 = vmatpush1.msra.mxu0 0.0
        %635 = vmatprep.subr.mxu0 0.0
        %636 = vmatpush1.msra.mxu0 0.0
        %637 = vmatprep.subr.mxu0 0.0
        %638 = vmatpush1.msra.mxu0 0.0
        %639 = vmatprep.subr.mxu0 0.0
        %640 = vmatpush1.msra.mxu0 0.0
        %641 = vmatprep.subr.mxu0 0.0
        %642 = vmatpush1.msra.mxu0 0.0
        %643 = vmatprep.subr.mxu0 0.0
        %644 = vmatpush1.msra.mxu0 0.0
        %645 = vmatprep.subr.mxu0 0.0
        %646 = vmatpush1.msra.mxu0 0.0
        %647 = vmatprep.subr.mxu0 0.0
        %648 = vmatpush1.msra.mxu0 0.0
        %649 = vmatprep.subr.mxu0 0.0
        %650 = vmatpush1.msra.mxu0 0.0
        %651 = vmatprep.subr.mxu0 0.0
        %652 = vmatpush1.msra.mxu0 0.0
        %653 = vmatprep.subr.mxu0 0.0
        %654 = vmatpush1.msra.mxu0 0.0
        %655 = vmatprep.subr.mxu0 0.0
        %656 = vmatpush1.msra.mxu0 0.0
        %657 = vmatprep.subr.mxu0 0.0
        %658 = vmatpush1.msra.mxu0 0.0
        %659 = vmatprep.subr.mxu0 0.0
        %660 = vmatpush1.msra.mxu0 0.0
        %661 = vmatprep.subr.mxu0 0.0
        %662 = vmatpush1.msra.mxu0 0.0
        %663 = vmatprep.subr.mxu0 0.0
        %664 = vmatpush1.msra.mxu0 0.0
        %665 = vmatprep.subr.mxu0 0.0
        %666 = vmatpush1.msra.mxu0 0.0
        %667 = vmatprep.subr.mxu0 0.0
        %668 = vmatpush1.msra.mxu0 0.0
        %669 = vmatprep.subr.mxu0 0.0
        %670 = vmatpush1.msra.mxu0 0.0
        %671 = vmatprep.subr.mxu0 0.0
        %672 = vmatpush1.msra.mxu0 0.0
        %673 = vmatprep.subr.mxu0 0.0
        %674 = vmatpush1.msra.mxu0 0.0
        %675 = vmatprep.subr.mxu0 0.0
        %676 = vmatpush1.msra.mxu0 0.0
        %677 = vmatprep.mubr.f32.mxu0 0.0
        %678 = vmatmul.mubr.f32.gmra.mrb[0].mxu0 %v439
        %v679 = vpop.f32.mrb[0].mxu0
        %v680 = vadd.f32 %v426, %v679
        %v681 = vpop.f32.mrb[0].mxu0
        %v682 = vadd.f32 %v426, %v681
        %683 = vmatprep.mubr.f32.mxu0 0.0
        %684 = vmatmul.mubr.f32.gmra.mrb[0].mxu0 %v442
        %v685 = vpop.f32.mrb[0].mxu0
        %v686 = vadd.f32 %v431, %v685
        %v687 = vpop.f32.mrb[0].mxu0
        %v688 = vadd.f32 %v431, %v687
        %689 = vmatprep.mubr.f32.mxu0 0.0
        %690 = vmatmul.mubr.f32.gmra.mrb[0].mxu0 %v445
        %v691 = vpop.f32.mrb[0].mxu0
        %v692 = vadd.f32 %v436, %v691
        %v693 = vpop.f32.mrb[0].mxu0
        %v694 = vadd.f32 %v436, %v693
        %695 = vdwg.mxu0
        %696 = vmatprep.subr.mxu0 %v315
        %697 = vmatpush1.msra.mxu0 %v314
        %698 = vmatprep.subr.mxu0 0.0
        %699 = vmatpush1.msra.mxu0 0.0
        %700 = vmatprep.subr.mxu0 0.0
        %701 = vmatpush1.msra.mxu0 0.0
        %702 = vmatprep.subr.mxu0 0.0
        %703 = vmatpush1.msra.mxu0 0.0
        %704 = vmatprep.subr.mxu0 0.0
        %705 = vmatpush1.msra.mxu0 0.0
        %706 = vmatprep.subr.mxu0 0.0
        %707 = vmatpush1.msra.mxu0 0.0
        %708 = vmatprep.subr.mxu0 0.0
        %709 = vmatpush1.msra.mxu0 0.0
        %710 = vmatprep.subr.mxu0 0.0
        %711 = vmatpush1.msra.mxu0 0.0
        %712 = vmatprep.subr.mxu0 0.0
        %713 = vmatpush1.msra.mxu0 0.0
        %714 = vmatprep.subr.mxu0 0.0
        %715 = vmatpush1.msra.mxu0 0.0
        %716 = vmatprep.subr.mxu0 0.0
        %717 = vmatpush1.msra.mxu0 0.0
        %718 = vmatprep.subr.mxu0 0.0
        %719 = vmatpush1.msra.mxu0 0.0
        %720 = vmatprep.subr.mxu0 0.0
        %721 = vmatpush1.msra.mxu0 0.0
        %722 = vmatprep.subr.mxu0 0.0
        %723 = vmatpush1.msra.mxu0 0.0
        %724 = vmatprep.subr.mxu0 0.0
        %725 = vmatpush1.msra.mxu0 0.0
        %726 = vmatprep.subr.mxu0 0.0
        %727 = vmatpush1.msra.mxu0 0.0
        %728 = vmatprep.subr.mxu0 0.0
        %729 = vmatpush1.msra.mxu0 0.0
        %730 = vmatprep.subr.mxu0 0.0
        %731 = vmatpush1.msra.mxu0 0.0
        %732 = vmatprep.subr.mxu0 0.0
        %733 = vmatpush1.msra.mxu0 0.0
        %734 = vmatprep.subr.mxu0 0.0
        %735 = vmatpush1.msra.mxu0 0.0
        %736 = vmatprep.subr.mxu0 0.0
        %737 = vmatpush1.msra.mxu0 0.0
        %738 = vmatprep.subr.mxu0 0.0
        %739 = vmatpush1.msra.mxu0 0.0
        %740 = vmatprep.subr.mxu0 0.0
        %741 = vmatpush1.msra.mxu0 0.0
        %742 = vmatprep.subr.mxu0 0.0
        %743 = vmatpush1.msra.mxu0 0.0
        %744 = vmatprep.subr.mxu0 0.0
        %745 = vmatpush1.msra.mxu0 0.0
        %746 = vmatprep.subr.mxu0 0.0
        %747 = vmatpush1.msra.mxu0 0.0
        %748 = vmatprep.subr.mxu0 0.0
        %749 = vmatpush1.msra.mxu0 0.0
        %750 = vmatprep.subr.mxu0 0.0
        %751 = vmatpush1.msra.mxu0 0.0
        %752 = vmatprep.subr.mxu0 0.0
        %753 = vmatpush1.msra.mxu0 0.0
        %754 = vmatprep.subr.mxu0 0.0
        %755 = vmatpush1.msra.mxu0 0.0
        %756 = vmatprep.subr.mxu0 0.0
        %757 = vmatpush1.msra.mxu0 0.0
        %758 = vmatprep.subr.mxu0 0.0
        %759 = vmatpush1.msra.mxu0 0.0
        %760 = vmatprep.mubr.f32.mxu0 0.0
        %761 = vmatmul.mubr.f32.gmra.mrb[0].mxu0 %v439
        %v762 = vpop.f32.mrb[0].mxu0
        %v763 = vadd.f32 %v426, %v762
        %v764 = vpop.f32.mrb[0].mxu0
        %v765 = vadd.f32 %v426, %v764
        %766 = vmatprep.mubr.f32.mxu0 0.0
        %767 = vmatmul.mubr.f32.gmra.mrb[0].mxu0 %v442
        %v768 = vpop.f32.mrb[0].mxu0
        %v769 = vadd.f32 %v431, %v768
        %v770 = vpop.f32.mrb[0].mxu0
        %v771 = vadd.f32 %v431, %v770
        %772 = vmatprep.mubr.f32.mxu0 0.0
        %773 = vmatmul.mubr.f32.gmra.mrb[0].mxu0 %v445
        %v774 = vpop.f32.mrb[0].mxu0
        %v775 = vadd.f32 %v436, %v774
        %v776 = vpop.f32.mrb[0].mxu0
        %v777 = vadd.f32 %v436, %v776
        %778 = vdwg.mxu0
        %779 = vmatprep.subr.mxu0 %v317
        %780 = vmatpush1.msra.mxu0 %v316
        %781 = vmatprep.subr.mxu0 0.0
        %782 = vmatpush1.msra.mxu0 0.0
        %783 = vmatprep.subr.mxu0 0.0
        %784 = vmatpush1.msra.mxu0 0.0
        %785 = vmatprep.subr.mxu0 0.0
        %786 = vmatpush1.msra.mxu0 0.0
        %787 = vmatprep.subr.mxu0 0.0
        %788 = vmatpush1.msra.mxu0 0.0
        %789 = vmatprep.subr.mxu0 0.0
        %790 = vmatpush1.msra.mxu0 0.0
        %791 = vmatprep.subr.mxu0 0.0
        %792 = vmatpush1.msra.mxu0 0.0
        %793 = vmatprep.subr.mxu0 0.0
        %794 = vmatpush1.msra.mxu0 0.0
        %795 = vmatprep.subr.mxu0 0.0
        %796 = vmatpush1.msra.mxu0 0.0
        %797 = vmatprep.subr.mxu0 0.0
        %798 = vmatpush1.msra.mxu0 0.0
        %799 = vmatprep.subr.mxu0 0.0
        %800 = vmatpush1.msra.mxu0 0.0
        %801 = vmatprep.subr.mxu0 0.0
        %802 = vmatpush1.msra.mxu0 0.0
        %803 = vmatprep.subr.mxu0 0.0
        %804 = vmatpush1.msra.mxu0 0.0
        %805 = vmatprep.subr.mxu0 0.0
        %806 = vmatpush1.msra.mxu0 0.0
        %807 = vmatprep.subr.mxu0 0.0
        %808 = vmatpush1.msra.mxu0 0.0
        %809 = vmatprep.subr.mxu0 0.0
        %810 = vmatpush1.msra.mxu0 0.0
        %811 = vmatprep.subr.mxu0 0.0
        %812 = vmatpush1.msra.mxu0 0.0
        %813 = vmatprep.subr.mxu0 0.0
        %814 = vmatpush1.msra.mxu0 0.0
        %815 = vmatprep.subr.mxu0 0.0
        %816 = vmatpush1.msra.mxu0 0.0
        %817 = vmatprep.subr.mxu0 0.0
        %818 = vmatpush1.msra.mxu0 0.0
        %819 = vmatprep.subr.mxu0 0.0
        %820 = vmatpush1.msra.mxu0 0.0
        %821 = vmatprep.subr.mxu0 0.0
        %822 = vmatpush1.msra.mxu0 0.0
        %823 = vmatprep.subr.mxu0 0.0
        %824 = vmatpush1.msra.mxu0 0.0
        %825 = vmatprep.subr.mxu0 0.0
        %826 = vmatpush1.msra.mxu0 0.0
        %827 = vmatprep.subr.mxu0 0.0
        %828 = vmatpush1.msra.mxu0 0.0
        %829 = vmatprep.subr.mxu0 0.0
        %830 = vmatpush1.msra.mxu0 0.0
        %831 = vmatprep.subr.mxu0 0.0
        %832 = vmatpush1.msra.mxu0 0.0
        %833 = vmatprep.subr.mxu0 0.0
        %834 = vmatpush1.msra.mxu0 0.0
        %835 = vmatprep.subr.mxu0 0.0
        %836 = vmatpush1.msra.mxu0 0.0
        %837 = vmatprep.subr.mxu0 0.0
        %838 = vmatpush1.msra.mxu0 0.0
        %839 = vmatprep.subr.mxu0 0.0
        %840 = vmatpush1.msra.mxu0 0.0
        %841 = vmatprep.subr.mxu0 0.0
        %842 = vmatpush1.msra.mxu0 0.0
        %843 = vmatprep.mubr.f32.mxu0 0.0
        %844 = vmatmul.mubr.f32.gmra.mrb[0].mxu0 %v439
        %v845 = vpop.f32.mrb[0].mxu0
        %v846 = vadd.f32 %v426, %v845
        %v847 = vpop.f32.mrb[0].mxu0
        %v848 = vadd.f32 %v426, %v847
        %849 = vmatprep.mubr.f32.mxu0 0.0
        %850 = vmatmul.mubr.f32.gmra.mrb[0].mxu0 %v442
        %v851 = vpop.f32.mrb[0].mxu0
        %v852 = vadd.f32 %v431, %v851
        %v853 = vpop.f32.mrb[0].mxu0
        %v854 = vadd.f32 %v431, %v853
        %855 = vmatprep.mubr.f32.mxu0 0.0
        %856 = vmatmul.mubr.f32.gmra.mrb[0].mxu0 %v445
        %v857 = vpop.f32.mrb[0].mxu0
        %v858 = vadd.f32 %v436, %v857
        %v859 = vpop.f32.mrb[0].mxu0
        %v860 = vadd.f32 %v436, %v859
        %861 = vdwg.mxu0
        %862 = vmatprep.subr.mxu0 %v319
        %863 = vmatpush1.msra.mxu0 %v318
        %864 = vmatprep.subr.mxu0 0.0
        %865 = vmatpush1.msra.mxu0 0.0
        %866 = vmatprep.subr.mxu0 0.0
        %867 = vmatpush1.msra.mxu0 0.0
        %868 = vmatprep.subr.mxu0 0.0
        %869 = vmatpush1.msra.mxu0 0.0
        %870 = vmatprep.subr.mxu0 0.0
        %871 = vmatpush1.msra.mxu0 0.0
        %872 = vmatprep.subr.mxu0 0.0
        %873 = vmatpush1.msra.mxu0 0.0
        %874 = vmatprep.subr.mxu0 0.0
        %875 = vmatpush1.msra.mxu0 0.0
        %876 = vmatprep.subr.mxu0 0.0
        %877 = vmatpush1.msra.mxu0 0.0
        %878 = vmatprep.subr.mxu0 0.0
        %879 = vmatpush1.msra.mxu0 0.0
        %880 = vmatprep.subr.mxu0 0.0
        %881 = vmatpush1.msra.mxu0 0.0
        %882 = vmatprep.subr.mxu0 0.0
        %883 = vmatpush1.msra.mxu0 0.0
        %884 = vmatprep.subr.mxu0 0.0
        %885 = vmatpush1.msra.mxu0 0.0
        %886 = vmatprep.subr.mxu0 0.0
        %887 = vmatpush1.msra.mxu0 0.0
        %888 = vmatprep.subr.mxu0 0.0
        %889 = vmatpush1.msra.mxu0 0.0
        %890 = vmatprep.subr.mxu0 0.0
        %891 = vmatpush1.msra.mxu0 0.0
        %892 = vmatprep.subr.mxu0 0.0
        %893 = vmatpush1.msra.mxu0 0.0
        %894 = vmatprep.subr.mxu0 0.0
        %895 = vmatpush1.msra.mxu0 0.0
        %896 = vmatprep.subr.mxu0 0.0
        %897 = vmatpush1.msra.mxu0 0.0
        %898 = vmatprep.subr.mxu0 0.0
        %899 = vmatpush1.msra.mxu0 0.0
        %900 = vmatprep.subr.mxu0 0.0
        %901 = vmatpush1.msra.mxu0 0.0
        %902 = vmatprep.subr.mxu0 0.0
        %903 = vmatpush1.msra.mxu0 0.0
        %904 = vmatprep.subr.mxu0 0.0
        %905 = vmatpush1.msra.mxu0 0.0
        %906 = vmatprep.subr.mxu0 0.0
        %907 = vmatpush1.msra.mxu0 0.0
        %908 = vmatprep.subr.mxu0 0.0
        %909 = vmatpush1.msra.mxu0 0.0
        %910 = vmatprep.subr.mxu0 0.0
        %911 = vmatpush1.msra.mxu0 0.0
        %912 = vmatprep.subr.mxu0 0.0
        %913 = vmatpush1.msra.mxu0 0.0
        %914 = vmatprep.subr.mxu0 0.0
        %915 = vmatpush1.msra.mxu0 0.0
        %916 = vmatprep.subr.mxu0 0.0
        %917 = vmatpush1.msra.mxu0 0.0
        %918 = vmatprep.subr.mxu0 0.0
        %919 = vmatpush1.msra.mxu0 0.0
        %920 = vmatprep.subr.mxu0 0.0
        %921 = vmatpush1.msra.mxu0 0.0
        %922 = vmatprep.subr.mxu0 0.0
        %923 = vmatpush1.msra.mxu0 0.0
        %924 = vmatprep.subr.mxu0 0.0
        %925 = vmatpush1.msra.mxu0 0.0
        %926 = vmatprep.mubr.f32.mxu0 0.0
        %927 = vmatmul.mubr.f32.gmra.mrb[0].mxu0 %v439
        %v928 = vpop.f32.mrb[0].mxu0
        %v929 = vadd.f32 %v426, %v928
        %v930 = vpop.f32.mrb[0].mxu0
        %v931 = vadd.f32 %v426, %v930
        %932 = vmatprep.mubr.f32.mxu0 0.0
        %933 = vmatmul.mubr.f32.gmra.mrb[0].mxu0 %v442
        %v934 = vpop.f32.mrb[0].mxu0
        %v935 = vadd.f32 %v431, %v934
        %v936 = vpop.f32.mrb[0].mxu0
        %v937 = vadd.f32 %v431, %v936
        %938 = vmatprep.mubr.f32.mxu0 0.0
        %939 = vmatmul.mubr.f32.gmra.mrb[0].mxu0 %v445
        %v940 = vpop.f32.mrb[0].mxu0
        %v941 = vadd.f32 %v436, %v940
        %v942 = vpop.f32.mrb[0].mxu0
        %v943 = vadd.f32 %v436, %v942
        %944 = vdwg.mxu0
        %945 = vmatprep.subr.mxu0 %v321
        %946 = vmatpush1.msra.mxu0 %v320
        %947 = vmatprep.subr.mxu0 0.0
        %948 = vmatpush1.msra.mxu0 0.0
        %949 = vmatprep.subr.mxu0 0.0
        %950 = vmatpush1.msra.mxu0 0.0
        %951 = vmatprep.subr.mxu0 0.0
        %952 = vmatpush1.msra.mxu0 0.0
        %953 = vmatprep.subr.mxu0 0.0
        %954 = vmatpush1.msra.mxu0 0.0
        %955 = vmatprep.subr.mxu0 0.0
        %956 = vmatpush1.msra.mxu0 0.0
        %957 = vmatprep.subr.mxu0 0.0
        %958 = vmatpush1.msra.mxu0 0.0
        %959 = vmatprep.subr.mxu0 0.0
        %960 = vmatpush1.msra.mxu0 0.0
        %961 = vmatprep.subr.mxu0 0.0
        %962 = vmatpush1.msra.mxu0 0.0
        %963 = vmatprep.subr.mxu0 0.0
        %964 = vmatpush1.msra.mxu0 0.0
        %965 = vmatprep.subr.mxu0 0.0
        %966 = vmatpush1.msra.mxu0 0.0
        %967 = vmatprep.subr.mxu0 0.0
        %968 = vmatpush1.msra.mxu0 0.0
        %969 = vmatprep.subr.mxu0 0.0
        %970 = vmatpush1.msra.mxu0 0.0
        %971 = vmatprep.subr.mxu0 0.0
        %972 = vmatpush1.msra.mxu0 0.0
        %973 = vmatprep.subr.mxu0 0.0
        %974 = vmatpush1.msra.mxu0 0.0
        %975 = vmatprep.subr.mxu0 0.0
        %976 = vmatpush1.msra.mxu0 0.0
        %977 = vmatprep.subr.mxu0 0.0
        %978 = vmatpush1.msra.mxu0 0.0
        %979 = vmatprep.subr.mxu0 0.0
        %980 = vmatpush1.msra.mxu0 0.0
        %981 = vmatprep.subr.mxu0 0.0
        %982 = vmatpush1.msra.mxu0 0.0
        %983 = vmatprep.subr.mxu0 0.0
        %984 = vmatpush1.msra.mxu0 0.0
        %985 = vmatprep.subr.mxu0 0.0
        %986 = vmatpush1.msra.mxu0 0.0
        %987 = vmatprep.subr.mxu0 0.0
        %988 = vmatpush1.msra.mxu0 0.0
        %989 = vmatprep.subr.mxu0 0.0
        %990 = vmatpush1.msra.mxu0 0.0
        %991 = vmatprep.subr.mxu0 0.0
        %992 = vmatpush1.msra.mxu0 0.0
        %993 = vmatprep.subr.mxu0 0.0
        %994 = vmatpush1.msra.mxu0 0.0
        %995 = vmatprep.subr.mxu0 0.0
        %996 = vmatpush1.msra.mxu0 0.0
        %997 = vmatprep.subr.mxu0 0.0
        %998 = vmatpush1.msra.mxu0 0.0
        %999 = vmatprep.subr.mxu0 0.0
        %1000 = vmatpush1.msra.mxu0 0.0
        %1001 = vmatprep.subr.mxu0 0.0
        %1002 = vmatpush1.msra.mxu0 0.0
        %1003 = vmatprep.subr.mxu0 0.0
        %1004 = vmatpush1.msra.mxu0 0.0
        %1005 = vmatprep.subr.mxu0 0.0
        %1006 = vmatpush1.msra.mxu0 0.0
        %1007 = vmatprep.subr.mxu0 0.0
        %1008 = vmatpush1.msra.mxu0 0.0
        %1009 = vmatprep.mubr.f32.mxu0 0.0
        %1010 = vmatmul.mubr.f32.gmra.mrb[0].mxu0 %v439
        %v1011 = vpop.f32.mrb[0].mxu0
        %v1012 = vadd.f32 %v426, %v1011
        %v1013 = vpop.f32.mrb[0].mxu0
        %v1014 = vadd.f32 %v426, %v1013
        %1015 = vmatprep.mubr.f32.mxu0 0.0
        %1016 = vmatmul.mubr.f32.gmra.mrb[0].mxu0 %v442
        %v1017 = vpop.f32.mrb[0].mxu0
        %v1018 = vadd.f32 %v431, %v1017
        %v1019 = vpop.f32.mrb[0].mxu0
        %v1020 = vadd.f32 %v431, %v1019
        %1021 = vmatprep.mubr.f32.mxu0 0.0
        %1022 = vmatmul.mubr.f32.gmra.mrb[0].mxu0 %v445
        %v1023 = vpop.f32.mrb[0].mxu0
        %v1024 = vadd.f32 %v436, %v1023
        %v1025 = vpop.f32.mrb[0].mxu0
        %v1026 = vadd.f32 %v436, %v1025
        %1027 = vdwg.mxu0
        %1028 = vmatprep.subr.mxu0 %v323
        %1029 = vmatpush1.msra.mxu0 %v322
        %1030 = vmatprep.subr.mxu0 0.0
        %1031 = vmatpush1.msra.mxu0 0.0
        %1032 = vmatprep.subr.mxu0 0.0
        %1033 = vmatpush1.msra.mxu0 0.0
        %1034 = vmatprep.subr.mxu0 0.0
        %1035 = vmatpush1.msra.mxu0 0.0
        %1036 = vmatprep.subr.mxu0 0.0
        %1037 = vmatpush1.msra.mxu0 0.0
        %1038 = vmatprep.subr.mxu0 0.0
        %1039 = vmatpush1.msra.mxu0 0.0
        %1040 = vmatprep.subr.mxu0 0.0
        %1041 = vmatpush1.msra.mxu0 0.0
        %1042 = vmatprep.subr.mxu0 0.0
        %1043 = vmatpush1.msra.mxu0 0.0
        %1044 = vmatprep.subr.mxu0 0.0
        %1045 = vmatpush1.msra.mxu0 0.0
        %1046 = vmatprep.subr.mxu0 0.0
        %1047 = vmatpush1.msra.mxu0 0.0
        %1048 = vmatprep.subr.mxu0 0.0
        %1049 = vmatpush1.msra.mxu0 0.0
        %1050 = vmatprep.subr.mxu0 0.0
        %1051 = vmatpush1.msra.mxu0 0.0
        %1052 = vmatprep.subr.mxu0 0.0
        %1053 = vmatpush1.msra.mxu0 0.0
        %1054 = vmatprep.subr.mxu0 0.0
        %1055 = vmatpush1.msra.mxu0 0.0
        %1056 = vmatprep.subr.mxu0 0.0
        %1057 = vmatpush1.msra.mxu0 0.0
        %1058 = vmatprep.subr.mxu0 0.0
        %1059 = vmatpush1.msra.mxu0 0.0
        %1060 = vmatprep.subr.mxu0 0.0
        %1061 = vmatpush1.msra.mxu0 0.0
        %1062 = vmatprep.subr.mxu0 0.0
        %1063 = vmatpush1.msra.mxu0 0.0
        %1064 = vmatprep.subr.mxu0 0.0
        %1065 = vmatpush1.msra.mxu0 0.0
        %1066 = vmatprep.subr.mxu0 0.0
        %1067 = vmatpush1.msra.mxu0 0.0
        %1068 = vmatprep.subr.mxu0 0.0
        %1069 = vmatpush1.msra.mxu0 0.0
        %1070 = vmatprep.subr.mxu0 0.0
        %1071 = vmatpush1.msra.mxu0 0.0
        %1072 = vmatprep.subr.mxu0 0.0
        %1073 = vmatpush1.msra.mxu0 0.0
        %1074 = vmatprep.subr.mxu0 0.0
        %1075 = vmatpush1.msra.mxu0 0.0
        %1076 = vmatprep.subr.mxu0 0.0
        %1077 = vmatpush1.msra.mxu0 0.0
        %1078 = vmatprep.subr.mxu0 0.0
        %1079 = vmatpush1.msra.mxu0 0.0
        %1080 = vmatprep.subr.mxu0 0.0
        %1081 = vmatpush1.msra.mxu0 0.0
        %1082 = vmatprep.subr.mxu0 0.0
        %1083 = vmatpush1.msra.mxu0 0.0
        %1084 = vmatprep.subr.mxu0 0.0
        %1085 = vmatpush1.msra.mxu0 0.0
        %1086 = vmatprep.subr.mxu0 0.0
        %1087 = vmatpush1.msra.mxu0 0.0
        %1088 = vmatprep.subr.mxu0 0.0
        %1089 = vmatpush1.msra.mxu0 0.0
        %1090 = vmatprep.subr.mxu0 0.0
        %1091 = vmatpush1.msra.mxu0 0.0
        %1092 = vmatprep.mubr.f32.mxu0 0.0
        %1093 = vmatmul.mubr.f32.gmra.mrb[0].mxu0 %v439
        %v1094 = vpop.f32.mrb[0].mxu0
        %v1095 = vadd.f32 %v426, %v1094
        %v1096 = vpop.f32.mrb[0].mxu0
        %v1097 = vadd.f32 %v426, %v1096
        %1098 = vmatprep.mubr.f32.mxu0 0.0
        %1099 = vmatmul.mubr.f32.gmra.mrb[0].mxu0 %v442
        %v1100 = vpop.f32.mrb[0].mxu0
        %v1101 = vadd.f32 %v431, %v1100
        %v1102 = vpop.f32.mrb[0].mxu0
        %v1103 = vadd.f32 %v431, %v1102
        %1104 = vmatprep.mubr.f32.mxu0 0.0
        %1105 = vmatmul.mubr.f32.gmra.mrb[0].mxu0 %v445
        %v1106 = vpop.f32.mrb[0].mxu0
        %v1107 = vadd.f32 %v436, %v1106
        %v1108 = vpop.f32.mrb[0].mxu0
        %v1109 = vadd.f32 %v436, %v1108
        %1110 = vdwg.mxu0
        %1111 = vmatprep.subr.mxu0 %v325
        %1112 = vmatpush1.msra.mxu0 %v324
        %1113 = vmatprep.subr.mxu0 0.0
        %1114 = vmatpush1.msra.mxu0 0.0
        %1115 = vmatprep.subr.mxu0 0.0
        %1116 = vmatpush1.msra.mxu0 0.0
        %1117 = vmatprep.subr.mxu0 0.0
        %1118 = vmatpush1.msra.mxu0 0.0
        %1119 = vmatprep.subr.mxu0 0.0
        %1120 = vmatpush1.msra.mxu0 0.0
        %1121 = vmatprep.subr.mxu0 0.0
        %1122 = vmatpush1.msra.mxu0 0.0
        %1123 = vmatprep.subr.mxu0 0.0
        %1124 = vmatpush1.msra.mxu0 0.0
        %1125 = vmatprep.subr.mxu0 0.0
        %1126 = vmatpush1.msra.mxu0 0.0
        %1127 = vmatprep.subr.mxu0 0.0
        %1128 = vmatpush1.msra.mxu0 0.0
        %1129 = vmatprep.subr.mxu0 0.0
        %1130 = vmatpush1.msra.mxu0 0.0
        %1131 = vmatprep.subr.mxu0 0.0
        %1132 = vmatpush1.msra.mxu0 0.0
        %1133 = vmatprep.subr.mxu0 0.0
        %1134 = vmatpush1.msra.mxu0 0.0
        %1135 = vmatprep.subr.mxu0 0.0
        %1136 = vmatpush1.msra.mxu0 0.0
        %1137 = vmatprep.subr.mxu0 0.0
        %1138 = vmatpush1.msra.mxu0 0.0
        %1139 = vmatprep.subr.mxu0 0.0
        %1140 = vmatpush1.msra.mxu0 0.0
        %1141 = vmatprep.subr.mxu0 0.0
        %1142 = vmatpush1.msra.mxu0 0.0
        %1143 = vmatprep.subr.mxu0 0.0
        %1144 = vmatpush1.msra.mxu0 0.0
        %1145 = vmatprep.subr.mxu0 0.0
        %1146 = vmatpush1.msra.mxu0 0.0
        %1147 = vmatprep.subr.mxu0 0.0
        %1148 = vmatpush1.msra.mxu0 0.0
        %1149 = vmatprep.subr.mxu0 0.0
        %1150 = vmatpush1.msra.mxu0 0.0
        %1151 = vmatprep.subr.mxu0 0.0
        %1152 = vmatpush1.msra.mxu0 0.0
        %1153 = vmatprep.subr.mxu0 0.0
        %1154 = vmatpush1.msra.mxu0 0.0
        %1155 = vmatprep.subr.mxu0 0.0
        %1156 = vmatpush1.msra.mxu0 0.0
        %1157 = vmatprep.subr.mxu0 0.0
        %1158 = vmatpush1.msra.mxu0 0.0
        %1159 = vmatprep.subr.mxu0 0.0
        %1160 = vmatpush1.msra.mxu0 0.0
        %1161 = vmatprep.subr.mxu0 0.0
        %1162 = vmatpush1.msra.mxu0 0.0
        %1163 = vmatprep.subr.mxu0 0.0
        %1164 = vmatpush1.msra.mxu0 0.0
        %1165 = vmatprep.subr.mxu0 0.0
        %1166 = vmatpush1.msra.mxu0 0.0
        %1167 = vmatprep.subr.mxu0 0.0
        %1168 = vmatpush1.msra.mxu0 0.0
        %1169 = vmatprep.subr.mxu0 0.0
        %1170 = vmatpush1.msra.mxu0 0.0
        %1171 = vmatprep.subr.mxu0 0.0
        %1172 = vmatpush1.msra.mxu0 0.0
        %1173 = vmatprep.subr.mxu0 0.0
        %1174 = vmatpush1.msra.mxu0 0.0
        %1175 = vmatprep.mubr.f32.mxu0 0.0
        %1176 = vmatmul.mubr.f32.gmra.mrb[0].mxu0 %v439
        %v1177 = vpop.f32.mrb[0].mxu0
        %v1178 = vadd.f32 %v426, %v1177
        %v1179 = vpop.f32.mrb[0].mxu0
        %v1180 = vadd.f32 %v426, %v1179
        %1181 = vmatprep.mubr.f32.mxu0 0.0
        %1182 = vmatmul.mubr.f32.gmra.mrb[0].mxu0 %v442
        %v1183 = vpop.f32.mrb[0].mxu0
        %v1184 = vadd.f32 %v431, %v1183
        %v1185 = vpop.f32.mrb[0].mxu0
        %v1186 = vadd.f32 %v431, %v1185
        %1187 = vmatprep.mubr.f32.mxu0 0.0
        %1188 = vmatmul.mubr.f32.gmra.mrb[0].mxu0 %v445
        %v1189 = vpop.f32.mrb[0].mxu0
        %v1190 = vadd.f32 %v436, %v1189
        %v1191 = vpop.f32.mrb[0].mxu0
        %v1192 = vadd.f32 %v436, %v1191
        %1193 = vdwg.mxu0
        %v1194 = vsub.f32 %v420, %v526
        %v1195 = vsub.f32 %v422, %v528
        %v1196 = vsub.f32 %v420, %v609
        %v1197 = vsub.f32 %v422, %v611
        %v1198 = vsub.f32 %v420, %v692
        %v1199 = vsub.f32 %v422, %v694
        %v1200 = vsub.f32 %v420, %v775
        %v1201 = vsub.f32 %v422, %v777
        %v1202 = vsub.f32 %v420, %v858
        %v1203 = vsub.f32 %v422, %v860
        %v1204 = vsub.f32 %v420, %v941
        %v1205 = vsub.f32 %v422, %v943
        %v1206 = vsub.f32 %v420, %v1024
        %v1207 = vsub.f32 %v422, %v1026
        %v1208 = vsub.f32 %v420, %v1107
        %v1209 = vsub.f32 %v422, %v1109
        %v1210 = vsub.f32 %v420, %v1190
        %v1211 = vsub.f32 %v422, %v1192
        %1212 = vset.pattern.permute.xlu0 1
        %1213 = vperm.xlu0 %1212, %v341
        %v1214 = vpop.permute.xlu0 %1213
        %v1216 = vmul.f32 %v1194, %v1214
        %v1217 = vmul.f32 %v1195, %v1214
        %v1218 = vmul.f32 %v1196, %v1214
        %v1219 = vmul.f32 %v1197, %v1214
        %v1220 = vmul.f32 %v1198, %v1214
        %v1221 = vmul.f32 %v1199, %v1214
        %v1222 = vmul.f32 %v1200, %v1214
        %v1223 = vmul.f32 %v1201, %v1214
        %v1224 = vmul.f32 %v1202, %v1214
        %v1225 = vmul.f32 %v1203, %v1214
        %v1226 = vmul.f32 %v1204, %v1214
        %v1227 = vmul.f32 %v1205, %v1214
        %v1228 = vmul.f32 %v1206, %v1214
        %v1229 = vmul.f32 %v1207, %v1214
        %v1230 = vmul.f32 %v1208, %v1214
        %v1231 = vmul.f32 %v1209, %v1214
        %v1232 = vmul.f32 %v1210, %v1214
        %v1233 = vmul.f32 %v1211, %v1214
        %1234 = vset.pattern.permute.xlu0 2
        %1235 = vperm.xlu0 %1234, %v341
        %v1236 = vpop.permute.xlu0 %1235
        %v1238 = vadd.f32 %v1216, %v1236
        %v1239 = vadd.f32 %v1217, %v1236
        %v1240 = vadd.f32 %v1218, %v1236
        %v1241 = vadd.f32 %v1219, %v1236
        %v1242 = vadd.f32 %v1220, %v1236
        %v1243 = vadd.f32 %v1221, %v1236
        %v1244 = vadd.f32 %v1222, %v1236
        %v1245 = vadd.f32 %v1223, %v1236
        %v1246 = vadd.f32 %v1224, %v1236
        %v1247 = vadd.f32 %v1225, %v1236
        %v1248 = vadd.f32 %v1226, %v1236
        %v1249 = vadd.f32 %v1227, %v1236
        %v1250 = vadd.f32 %v1228, %v1236
        %v1251 = vadd.f32 %v1229, %v1236
        %v1252 = vadd.f32 %v1230, %v1236
        %v1253 = vadd.f32 %v1231, %v1236
        %v1254 = vadd.f32 %v1232, %v1236
        %v1255 = vadd.f32 %v1233, %v1236
        %v1256 = vmax.f32 %v1238, 0.0
        %v1257 = vmax.f32 %v1239, 0.0
        %v1258 = vmax.f32 %v1240, 0.0
        %v1259 = vmax.f32 %v1241, 0.0
        %v1260 = vmax.f32 %v1242, 0.0
        %v1261 = vmax.f32 %v1243, 0.0
        %v1262 = vmax.f32 %v1244, 0.0
        %v1263 = vmax.f32 %v1245, 0.0
        %v1264 = vmax.f32 %v1246, 0.0
        %v1265 = vmax.f32 %v1247, 0.0
        %v1266 = vmax.f32 %v1248, 0.0
        %v1267 = vmax.f32 %v1249, 0.0
        %v1268 = vmax.f32 %v1250, 0.0
        %v1269 = vmax.f32 %v1251, 0.0
        %v1270 = vmax.f32 %v1252, 0.0
        %v1271 = vmax.f32 %v1253, 0.0
        %v1272 = vmax.f32 %v1254, 0.0
        %v1273 = vmax.f32 %v1255, 0.0
        %v1283 = vcombine.high %v326, %v326
        %v1284 = vcombine.high %v327, %v327
        %v1285 = vcombine.high %v328, %v328
        %v1286 = vcombine.high %v329, %v329
        %v1287 = vcombine.high %v330, %v330
        %v1288 = vcombine.high %v331, %v331
        %v1289 = vcombine.high %v332, %v332
        %v1290 = vcombine.high %v333, %v333
        %v1291 = vcombine.high %v334, %v334
        %vm1301 = vcmask 31744
        %v1303 = vsel %vm1301, %v339, 0
        %vm1305 = vcmask 1043456
        %v1307 = vsel %vm1305, %v1256, 0
        %v1310 = vsel %vm1305, %v1257, 0
        %v1313 = vsel %vm1305, %v1258, 0
        %v1316 = vsel %vm1305, %v1259, 0
        %v1319 = vsel %vm1305, %v1260, 0
        %v1322 = vsel %vm1305, %v1261, 0
        %v1325 = vsel %vm1305, %v1262, 0
        %v1328 = vsel %vm1305, %v1263, 0
        %v1331 = vsel %vm1305, %v1264, 0
        %v1334 = vsel %vm1305, %v1265, 0
        %v1337 = vsel %vm1305, %v1266, 0
        %v1340 = vsel %vm1305, %v1267, 0
        %v1343 = vsel %vm1305, %v1268, 0
        %v1346 = vsel %vm1305, %v1269, 0
        %v1349 = vsel %vm1305, %v1270, 0
        %v1352 = vsel %vm1305, %v1271, 0
        %v1355 = vsel %vm1305, %v1272, 0
        %v1358 = vsel %vm1305, %v1273, 0
        %1360 = vmatprep.subr.mxu0 %v1310
        %1361 = vmatpush1.msra.mxu0 %v1307
        %1362 = vmatprep.subr.mxu0 0.0
        %1363 = vmatpush1.msra.mxu0 0.0
        %1364 = vmatprep.subr.mxu0 0.0
        %1365 = vmatpush1.msra.mxu0 0.0
        %1366 = vmatprep.subr.mxu0 0.0
        %1367 = vmatpush1.msra.mxu0 0.0
        %1368 = vmatprep.subr.mxu0 0.0
        %1369 = vmatpush1.msra.mxu0 0.0
        %1370 = vmatprep.subr.mxu0 0.0
        %1371 = vmatpush1.msra.mxu0 0.0
        %1372 = vmatprep.subr.mxu0 0.0
        %1373 = vmatpush1.msra.mxu0 0.0
        %1374 = vmatprep.subr.mxu0 0.0
        %1375 = vmatpush1.msra.mxu0 0.0
        %1376 = vmatprep.subr.mxu0 0.0
        %1377 = vmatpush1.msra.mxu0 0.0
        %1378 = vmatprep.subr.mxu0 0.0
        %1379 = vmatpush1.msra.mxu0 0.0
        %1380 = vmatprep.subr.mxu0 0.0
        %1381 = vmatpush1.msra.mxu0 0.0
        %1382 = vmatprep.subr.mxu0 0.0
        %1383 = vmatpush1.msra.mxu0 0.0
        %1384 = vmatprep.subr.mxu0 0.0
        %1385 = vmatpush1.msra.mxu0 0.0
        %1386 = vmatprep.subr.mxu0 0.0
        %1387 = vmatpush1.msra.mxu0 0.0
        %1388 = vmatprep.subr.mxu0 0.0
        %1389 = vmatpush1.msra.mxu0 0.0
        %1390 = vmatprep.subr.mxu0 0.0
        %1391 = vmatpush1.msra.mxu0 0.0
        %1392 = vmatprep.subr.mxu0 0.0
        %1393 = vmatpush1.msra.mxu0 0.0
        %1394 = vmatprep.subr.mxu0 0.0
        %1395 = vmatpush1.msra.mxu0 0.0
        %1396 = vmatprep.subr.mxu0 0.0
        %1397 = vmatpush1.msra.mxu0 0.0
        %1398 = vmatprep.subr.mxu0 0.0
        %1399 = vmatpush1.msra.mxu0 0.0
        %1400 = vmatprep.subr.mxu0 0.0
        %1401 = vmatpush1.msra.mxu0 0.0
        %1402 = vmatprep.subr.mxu0 0.0
        %1403 = vmatpush1.msra.mxu0 0.0
        %1404 = vmatprep.subr.mxu0 0.0
        %1405 = vmatpush1.msra.mxu0 0.0
        %1406 = vmatprep.subr.mxu0 0.0
        %1407 = vmatpush1.msra.mxu0 0.0
        %1408 = vmatprep.subr.mxu0 0.0
        %1409 = vmatpush1.msra.mxu0 0.0
        %1410 = vmatprep.subr.mxu0 0.0
        %1411 = vmatpush1.msra.mxu0 0.0
        %1412 = vmatprep.subr.mxu0 0.0
        %1413 = vmatpush1.msra.mxu0 0.0
        %1414 = vmatprep.subr.mxu0 0.0
        %1415 = vmatpush1.msra.mxu0 0.0
        %1416 = vmatprep.subr.mxu0 0.0
        %1417 = vmatpush1.msra.mxu0 0.0
        %1418 = vmatprep.subr.mxu0 0.0
        %1419 = vmatpush1.msra.mxu0 0.0
        %1420 = vmatprep.subr.mxu0 0.0
        %1421 = vmatpush1.msra.mxu0 0.0
        %1422 = vmatprep.subr.mxu0 0.0
        %1423 = vmatpush1.msra.mxu0 0.0
        %1424 = vmatprep.mubr.f32.mxu0 0.0
        %1425 = vmatmul.mubr.f32.gmra.mrb[0].mxu0 %v1303
        %v1426 = vpop.f32.mrb[0].mxu0
        %v1427 = vadd.f32 %v326, %v1426
        %v1428 = vpop.f32.mrb[0].mxu0
        %v1429 = vadd.f32 %v1283, %v1428
        %1430 = vdwg.mxu0
        %1431 = vmatprep.subr.mxu0 %v1316
        %1432 = vmatpush1.msra.mxu0 %v1313
        %1433 = vmatprep.subr.mxu0 0.0
        %1434 = vmatpush1.msra.mxu0 0.0
        %1435 = vmatprep.subr.mxu0 0.0
        %1436 = vmatpush1.msra.mxu0 0.0
        %1437 = vmatprep.subr.mxu0 0.0
        %1438 = vmatpush1.msra.mxu0 0.0
        %1439 = vmatprep.subr.mxu0 0.0
        %1440 = vmatpush1.msra.mxu0 0.0
        %1441 = vmatprep.subr.mxu0 0.0
        %1442 = vmatpush1.msra.mxu0 0.0
        %1443 = vmatprep.subr.mxu0 0.0
        %1444 = vmatpush1.msra.mxu0 0.0
        %1445 = vmatprep.subr.mxu0 0.0
        %1446 = vmatpush1.msra.mxu0 0.0
        %1447 = vmatprep.subr.mxu0 0.0
        %1448 = vmatpush1.msra.mxu0 0.0
        %1449 = vmatprep.subr.mxu0 0.0
        %1450 = vmatpush1.msra.mxu0 0.0
        %1451 = vmatprep.subr.mxu0 0.0
        %1452 = vmatpush1.msra.mxu0 0.0
        %1453 = vmatprep.subr.mxu0 0.0
        %1454 = vmatpush1.msra.mxu0 0.0
        %1455 = vmatprep.subr.mxu0 0.0
        %1456 = vmatpush1.msra.mxu0 0.0
        %1457 = vmatprep.subr.mxu0 0.0
        %1458 = vmatpush1.msra.mxu0 0.0
        %1459 = vmatprep.subr.mxu0 0.0
        %1460 = vmatpush1.msra.mxu0 0.0
        %1461 = vmatprep.subr.mxu0 0.0
        %1462 = vmatpush1.msra.mxu0 0.0
        %1463 = vmatprep.subr.mxu0 0.0
        %1464 = vmatpush1.msra.mxu0 0.0
        %1465 = vmatprep.subr.mxu0 0.0
        %1466 = vmatpush1.msra.mxu0 0.0
        %1467 = vmatprep.subr.mxu0 0.0
        %1468 = vmatpush1.msra.mxu0 0.0
        %1469 = vmatprep.subr.mxu0 0.0
        %1470 = vmatpush1.msra.mxu0 0.0
        %1471 = vmatprep.subr.mxu0 0.0
        %1472 = vmatpush1.msra.mxu0 0.0
        %1473 = vmatprep.subr.mxu0 0.0
        %1474 = vmatpush1.msra.mxu0 0.0
        %1475 = vmatprep.subr.mxu0 0.0
        %1476 = vmatpush1.msra.mxu0 0.0
        %1477 = vmatprep.subr.mxu0 0.0
        %1478 = vmatpush1.msra.mxu0 0.0
        %1479 = vmatprep.subr.mxu0 0.0
        %1480 = vmatpush1.msra.mxu0 0.0
        %1481 = vmatprep.subr.mxu0 0.0
        %1482 = vmatpush1.msra.mxu0 0.0
        %1483 = vmatprep.subr.mxu0 0.0
        %1484 = vmatpush1.msra.mxu0 0.0
        %1485 = vmatprep.subr.mxu0 0.0
        %1486 = vmatpush1.msra.mxu0 0.0
        %1487 = vmatprep.subr.mxu0 0.0
        %1488 = vmatpush1.msra.mxu0 0.0
        %1489 = vmatprep.subr.mxu0 0.0
        %1490 = vmatpush1.msra.mxu0 0.0
        %1491 = vmatprep.subr.mxu0 0.0
        %1492 = vmatpush1.msra.mxu0 0.0
        %1493 = vmatprep.subr.mxu0 0.0
        %1494 = vmatpush1.msra.mxu0 0.0
        %1495 = vmatprep.mubr.f32.mxu0 0.0
        %1496 = vmatmul.mubr.f32.gmra.mrb[0].mxu0 %v1303
        %v1497 = vpop.f32.mrb[0].mxu0
        %v1498 = vadd.f32 %v327, %v1497
        %v1499 = vpop.f32.mrb[0].mxu0
        %v1500 = vadd.f32 %v1284, %v1499
        %1501 = vdwg.mxu0
        %1502 = vmatprep.subr.mxu0 %v1322
        %1503 = vmatpush1.msra.mxu0 %v1319
        %1504 = vmatprep.subr.mxu0 0.0
        %1505 = vmatpush1.msra.mxu0 0.0
        %1506 = vmatprep.subr.mxu0 0.0
        %1507 = vmatpush1.msra.mxu0 0.0
        %1508 = vmatprep.subr.mxu0 0.0
        %1509 = vmatpush1.msra.mxu0 0.0
        %1510 = vmatprep.subr.mxu0 0.0
        %1511 = vmatpush1.msra.mxu0 0.0
        %1512 = vmatprep.subr.mxu0 0.0
        %1513 = vmatpush1.msra.mxu0 0.0
        %1514 = vmatprep.subr.mxu0 0.0
        %1515 = vmatpush1.msra.mxu0 0.0
        %1516 = vmatprep.subr.mxu0 0.0
        %1517 = vmatpush1.msra.mxu0 0.0
        %1518 = vmatprep.subr.mxu0 0.0
        %1519 = vmatpush1.msra.mxu0 0.0
        %1520 = vmatprep.subr.mxu0 0.0
        %1521 = vmatpush1.msra.mxu0 0.0
        %1522 = vmatprep.subr.mxu0 0.0
        %1523 = vmatpush1.msra.mxu0 0.0
        %1524 = vmatprep.subr.mxu0 0.0
        %1525 = vmatpush1.msra.mxu0 0.0
        %1526 = vmatprep.subr.mxu0 0.0
        %1527 = vmatpush1.msra.mxu0 0.0
        %1528 = vmatprep.subr.mxu0 0.0
        %1529 = vmatpush1.msra.mxu0 0.0
        %1530 = vmatprep.subr.mxu0 0.0
        %1531 = vmatpush1.msra.mxu0 0.0
        %1532 = vmatprep.subr.mxu0 0.0
        %1533 = vmatpush1.msra.mxu0 0.0
        %1534 = vmatprep.subr.mxu0 0.0
        %1535 = vmatpush1.msra.mxu0 0.0
        %1536 = vmatprep.subr.mxu0 0.0
        %1537 = vmatpush1.msra.mxu0 0.0
        %1538 = vmatprep.subr.mxu0 0.0
        %1539 = vmatpush1.msra.mxu0 0.0
        %1540 = vmatprep.subr.mxu0 0.0
        %1541 = vmatpush1.msra.mxu0 0.0
        %1542 = vmatprep.subr.mxu0 0.0
        %1543 = vmatpush1.msra.mxu0 0.0
        %1544 = vmatprep.subr.mxu0 0.0
        %1545 = vmatpush1.msra.mxu0 0.0
        %1546 = vmatprep.subr.mxu0 0.0
        %1547 = vmatpush1.msra.mxu0 0.0
        %1548 = vmatprep.subr.mxu0 0.0
        %1549 = vmatpush1.msra.mxu0 0.0
        %1550 = vmatprep.subr.mxu0 0.0
        %1551 = vmatpush1.msra.mxu0 0.0
        %1552 = vmatprep.subr.mxu0 0.0
        %1553 = vmatpush1.msra.mxu0 0.0
        %1554 = vmatprep.subr.mxu0 0.0
        %1555 = vmatpush1.msra.mxu0 0.0
        %1556 = vmatprep.subr.mxu0 0.0
        %1557 = vmatpush1.msra.mxu0 0.0
        %1558 = vmatprep.subr.mxu0 0.0
        %1559 = vmatpush1.msra.mxu0 0.0
        %1560 = vmatprep.subr.mxu0 0.0
        %1561 = vmatpush1.msra.mxu0 0.0
        %1562 = vmatprep.subr.mxu0 0.0
        %1563 = vmatpush1.msra.mxu0 0.0
        %1564 = vmatprep.subr.mxu0 0.0
        %1565 = vmatpush1.msra.mxu0 0.0
        %1566 = vmatprep.mubr.f32.mxu0 0.0
        %1567 = vmatmul.mubr.f32.gmra.mrb[0].mxu0 %v1303
        %v1568 = vpop.f32.mrb[0].mxu0
        %v1569 = vadd.f32 %v328, %v1568
        %v1570 = vpop.f32.mrb[0].mxu0
        %v1571 = vadd.f32 %v1285, %v1570
        %1572 = vdwg.mxu0
        %1573 = vmatprep.subr.mxu0 %v1328
        %1574 = vmatpush1.msra.mxu0 %v1325
        %1575 = vmatprep.subr.mxu0 0.0
        %1576 = vmatpush1.msra.mxu0 0.0
        %1577 = vmatprep.subr.mxu0 0.0
        %1578 = vmatpush1.msra.mxu0 0.0
        %1579 = vmatprep.subr.mxu0 0.0
        %1580 = vmatpush1.msra.mxu0 0.0
        %1581 = vmatprep.subr.mxu0 0.0
        %1582 = vmatpush1.msra.mxu0 0.0
        %1583 = vmatprep.subr.mxu0 0.0
        %1584 = vmatpush1.msra.mxu0 0.0
        %1585 = vmatprep.subr.mxu0 0.0
        %1586 = vmatpush1.msra.mxu0 0.0
        %1587 = vmatprep.subr.mxu0 0.0
        %1588 = vmatpush1.msra.mxu0 0.0
        %1589 = vmatprep.subr.mxu0 0.0
        %1590 = vmatpush1.msra.mxu0 0.0
        %1591 = vmatprep.subr.mxu0 0.0
        %1592 = vmatpush1.msra.mxu0 0.0
        %1593 = vmatprep.subr.mxu0 0.0
        %1594 = vmatpush1.msra.mxu0 0.0
        %1595 = vmatprep.subr.mxu0 0.0
        %1596 = vmatpush1.msra.mxu0 0.0
        %1597 = vmatprep.subr.mxu0 0.0
        %1598 = vmatpush1.msra.mxu0 0.0
        %1599 = vmatprep.subr.mxu0 0.0
        %1600 = vmatpush1.msra.mxu0 0.0
        %1601 = vmatprep.subr.mxu0 0.0
        %1602 = vmatpush1.msra.mxu0 0.0
        %1603 = vmatprep.subr.mxu0 0.0
        %1604 = vmatpush1.msra.mxu0 0.0
        %1605 = vmatprep.subr.mxu0 0.0
        %1606 = vmatpush1.msra.mxu0 0.0
        %1607 = vmatprep.subr.mxu0 0.0
        %1608 = vmatpush1.msra.mxu0 0.0
        %1609 = vmatprep.subr.mxu0 0.0
        %1610 = vmatpush1.msra.mxu0 0.0
        %1611 = vmatprep.subr.mxu0 0.0
        %1612 = vmatpush1.msra.mxu0 0.0
        %1613 = vmatprep.subr.mxu0 0.0
        %1614 = vmatpush1.msra.mxu0 0.0
        %1615 = vmatprep.subr.mxu0 0.0
        %1616 = vmatpush1.msra.mxu0 0.0
        %1617 = vmatprep.subr.mxu0 0.0
        %1618 = vmatpush1.msra.mxu0 0.0
        %1619 = vmatprep.subr.mxu0 0.0
        %1620 = vmatpush1.msra.mxu0 0.0
        %1621 = vmatprep.subr.mxu0 0.0
        %1622 = vmatpush1.msra.mxu0 0.0
        %1623 = vmatprep.subr.mxu0 0.0
        %1624 = vmatpush1.msra.mxu0 0.0
        %1625 = vmatprep.subr.mxu0 0.0
        %1626 = vmatpush1.msra.mxu0 0.0
        %1627 = vmatprep.subr.mxu0 0.0
        %1628 = vmatpush1.msra.mxu0 0.0
        %1629 = vmatprep.subr.mxu0 0.0
        %1630 = vmatpush1.msra.mxu0 0.0
        %1631 = vmatprep.subr.mxu0 0.0
        %1632 = vmatpush1.msra.mxu0 0.0
        %1633 = vmatprep.subr.mxu0 0.0
        %1634 = vmatpush1.msra.mxu0 0.0
        %1635 = vmatprep.subr.mxu0 0.0
        %1636 = vmatpush1.msra.mxu0 0.0
        %1637 = vmatprep.mubr.f32.mxu0 0.0
        %1638 = vmatmul.mubr.f32.gmra.mrb[0].mxu0 %v1303
        %v1639 = vpop.f32.mrb[0].mxu0
        %v1640 = vadd.f32 %v329, %v1639
        %v1641 = vpop.f32.mrb[0].mxu0
        %v1642 = vadd.f32 %v1286, %v1641
        %1643 = vdwg.mxu0
        %1644 = vmatprep.subr.mxu0 %v1334
        %1645 = vmatpush1.msra.mxu0 %v1331
        %1646 = vmatprep.subr.mxu0 0.0
        %1647 = vmatpush1.msra.mxu0 0.0
        %1648 = vmatprep.subr.mxu0 0.0
        %1649 = vmatpush1.msra.mxu0 0.0
        %1650 = vmatprep.subr.mxu0 0.0
        %1651 = vmatpush1.msra.mxu0 0.0
        %1652 = vmatprep.subr.mxu0 0.0
        %1653 = vmatpush1.msra.mxu0 0.0
        %1654 = vmatprep.subr.mxu0 0.0
        %1655 = vmatpush1.msra.mxu0 0.0
        %1656 = vmatprep.subr.mxu0 0.0
        %1657 = vmatpush1.msra.mxu0 0.0
        %1658 = vmatprep.subr.mxu0 0.0
        %1659 = vmatpush1.msra.mxu0 0.0
        %1660 = vmatprep.subr.mxu0 0.0
        %1661 = vmatpush1.msra.mxu0 0.0
        %1662 = vmatprep.subr.mxu0 0.0
        %1663 = vmatpush1.msra.mxu0 0.0
        %1664 = vmatprep.subr.mxu0 0.0
        %1665 = vmatpush1.msra.mxu0 0.0
        %1666 = vmatprep.subr.mxu0 0.0
        %1667 = vmatpush1.msra.mxu0 0.0
        %1668 = vmatprep.subr.mxu0 0.0
        %1669 = vmatpush1.msra.mxu0 0.0
        %1670 = vmatprep.subr.mxu0 0.0
        %1671 = vmatpush1.msra.mxu0 0.0
        %1672 = vmatprep.subr.mxu0 0.0
        %1673 = vmatpush1.msra.mxu0 0.0
        %1674 = vmatprep.subr.mxu0 0.0
        %1675 = vmatpush1.msra.mxu0 0.0
        %1676 = vmatprep.subr.mxu0 0.0
        %1677 = vmatpush1.msra.mxu0 0.0
        %1678 = vmatprep.subr.mxu0 0.0
        %1679 = vmatpush1.msra.mxu0 0.0
        %1680 = vmatprep.subr.mxu0 0.0
        %1681 = vmatpush1.msra.mxu0 0.0
        %1682 = vmatprep.subr.mxu0 0.0
        %1683 = vmatpush1.msra.mxu0 0.0
        %1684 = vmatprep.subr.mxu0 0.0
        %1685 = vmatpush1.msra.mxu0 0.0
        %1686 = vmatprep.subr.mxu0 0.0
        %1687 = vmatpush1.msra.mxu0 0.0
        %1688 = vmatprep.subr.mxu0 0.0
        %1689 = vmatpush1.msra.mxu0 0.0
        %1690 = vmatprep.subr.mxu0 0.0
        %1691 = vmatpush1.msra.mxu0 0.0
        %1692 = vmatprep.subr.mxu0 0.0
        %1693 = vmatpush1.msra.mxu0 0.0
        %1694 = vmatprep.subr.mxu0 0.0
        %1695 = vmatpush1.msra.mxu0 0.0
        %1696 = vmatprep.subr.mxu0 0.0
        %1697 = vmatpush1.msra.mxu0 0.0
        %1698 = vmatprep.subr.mxu0 0.0
        %1699 = vmatpush1.msra.mxu0 0.0
        %1700 = vmatprep.subr.mxu0 0.0
        %1701 = vmatpush1.msra.mxu0 0.0
        %1702 = vmatprep.subr.mxu0 0.0
        %1703 = vmatpush1.msra.mxu0 0.0
        %1704 = vmatprep.subr.mxu0 0.0
        %1705 = vmatpush1.msra.mxu0 0.0
        %1706 = vmatprep.subr.mxu0 0.0
        %1707 = vmatpush1.msra.mxu0 0.0
        %1708 = vmatprep.mubr.f32.mxu0 0.0
        %1709 = vmatmul.mubr.f32.gmra.mrb[0].mxu0 %v1303
        %v1710 = vpop.f32.mrb[0].mxu0
        %v1711 = vadd.f32 %v330, %v1710
        %v1712 = vpop.f32.mrb[0].mxu0
        %v1713 = vadd.f32 %v1287, %v1712
        %1714 = vdwg.mxu0
        %1715 = vmatprep.subr.mxu0 %v1340
        %1716 = vmatpush1.msra.mxu0 %v1337
        %1717 = vmatprep.subr.mxu0 0.0
        %1718 = vmatpush1.msra.mxu0 0.0
        %1719 = vmatprep.subr.mxu0 0.0
        %1720 = vmatpush1.msra.mxu0 0.0
        %1721 = vmatprep.subr.mxu0 0.0
        %1722 = vmatpush1.msra.mxu0 0.0
        %1723 = vmatprep.subr.mxu0 0.0
        %1724 = vmatpush1.msra.mxu0 0.0
        %1725 = vmatprep.subr.mxu0 0.0
        %1726 = vmatpush1.msra.mxu0 0.0
        %1727 = vmatprep.subr.mxu0 0.0
        %1728 = vmatpush1.msra.mxu0 0.0
        %1729 = vmatprep.subr.mxu0 0.0
        %1730 = vmatpush1.msra.mxu0 0.0
        %1731 = vmatprep.subr.mxu0 0.0
        %1732 = vmatpush1.msra.mxu0 0.0
        %1733 = vmatprep.subr.mxu0 0.0
        %1734 = vmatpush1.msra.mxu0 0.0
        %1735 = vmatprep.subr.mxu0 0.0
        %1736 = vmatpush1.msra.mxu0 0.0
        %1737 = vmatprep.subr.mxu0 0.0
        %1738 = vmatpush1.msra.mxu0 0.0
        %1739 = vmatprep.subr.mxu0 0.0
        %1740 = vmatpush1.msra.mxu0 0.0
        %1741 = vmatprep.subr.mxu0 0.0
        %1742 = vmatpush1.msra.mxu0 0.0
        %1743 = vmatprep.subr.mxu0 0.0
        %1744 = vmatpush1.msra.mxu0 0.0
        %1745 = vmatprep.subr.mxu0 0.0
        %1746 = vmatpush1.msra.mxu0 0.0
        %1747 = vmatprep.subr.mxu0 0.0
        %1748 = vmatpush1.msra.mxu0 0.0
        %1749 = vmatprep.subr.mxu0 0.0
        %1750 = vmatpush1.msra.mxu0 0.0
        %1751 = vmatprep.subr.mxu0 0.0
        %1752 = vmatpush1.msra.mxu0 0.0
        %1753 = vmatprep.subr.mxu0 0.0
        %1754 = vmatpush1.msra.mxu0 0.0
        %1755 = vmatprep.subr.mxu0 0.0
        %1756 = vmatpush1.msra.mxu0 0.0
        %1757 = vmatprep.subr.mxu0 0.0
        %1758 = vmatpush1.msra.mxu0 0.0
        %1759 = vmatprep.subr.mxu0 0.0
        %1760 = vmatpush1.msra.mxu0 0.0
        %1761 = vmatprep.subr.mxu0 0.0
        %1762 = vmatpush1.msra.mxu0 0.0
        %1763 = vmatprep.subr.mxu0 0.0
        %1764 = vmatpush1.msra.mxu0 0.0
        %1765 = vmatprep.subr.mxu0 0.0
        %1766 = vmatpush1.msra.mxu0 0.0
        %1767 = vmatprep.subr.mxu0 0.0
        %1768 = vmatpush1.msra.mxu0 0.0
        %1769 = vmatprep.subr.mxu0 0.0
        %1770 = vmatpush1.msra.mxu0 0.0
        %1771 = vmatprep.subr.mxu0 0.0
        %1772 = vmatpush1.msra.mxu0 0.0
        %1773 = vmatprep.subr.mxu0 0.0
        %1774 = vmatpush1.msra.mxu0 0.0
        %1775 = vmatprep.subr.mxu0 0.0
        %1776 = vmatpush1.msra.mxu0 0.0
        %1777 = vmatprep.subr.mxu0 0.0
        %1778 = vmatpush1.msra.mxu0 0.0
        %1779 = vmatprep.mubr.f32.mxu0 0.0
        %1780 = vmatmul.mubr.f32.gmra.mrb[0].mxu0 %v1303
        %v1781 = vpop.f32.mrb[0].mxu0
        %v1782 = vadd.f32 %v331, %v1781
        %v1783 = vpop.f32.mrb[0].mxu0
        %v1784 = vadd.f32 %v1288, %v1783
        %1785 = vdwg.mxu0
        %1786 = vmatprep.subr.mxu0 %v1346
        %1787 = vmatpush1.msra.mxu0 %v1343
        %1788 = vmatprep.subr.mxu0 0.0
        %1789 = vmatpush1.msra.mxu0 0.0
        %1790 = vmatprep.subr.mxu0 0.0
        %1791 = vmatpush1.msra.mxu0 0.0
        %1792 = vmatprep.subr.mxu0 0.0
        %1793 = vmatpush1.msra.mxu0 0.0
        %1794 = vmatprep.subr.mxu0 0.0
        %1795 = vmatpush1.msra.mxu0 0.0
        %1796 = vmatprep.subr.mxu0 0.0
        %1797 = vmatpush1.msra.mxu0 0.0
        %1798 = vmatprep.subr.mxu0 0.0
        %1799 = vmatpush1.msra.mxu0 0.0
        %1800 = vmatprep.subr.mxu0 0.0
        %1801 = vmatpush1.msra.mxu0 0.0
        %1802 = vmatprep.subr.mxu0 0.0
        %1803 = vmatpush1.msra.mxu0 0.0
        %1804 = vmatprep.subr.mxu0 0.0
        %1805 = vmatpush1.msra.mxu0 0.0
        %1806 = vmatprep.subr.mxu0 0.0
        %1807 = vmatpush1.msra.mxu0 0.0
        %1808 = vmatprep.subr.mxu0 0.0
        %1809 = vmatpush1.msra.mxu0 0.0
        %1810 = vmatprep.subr.mxu0 0.0
        %1811 = vmatpush1.msra.mxu0 0.0
        %1812 = vmatprep.subr.mxu0 0.0
        %1813 = vmatpush1.msra.mxu0 0.0
        %1814 = vmatprep.subr.mxu0 0.0
        %1815 = vmatpush1.msra.mxu0 0.0
        %1816 = vmatprep.subr.mxu0 0.0
        %1817 = vmatpush1.msra.mxu0 0.0
        %1818 = vmatprep.subr.mxu0 0.0
        %1819 = vmatpush1.msra.mxu0 0.0
        %1820 = vmatprep.subr.mxu0 0.0
        %1821 = vmatpush1.msra.mxu0 0.0
        %1822 = vmatprep.subr.mxu0 0.0
        %1823 = vmatpush1.msra.mxu0 0.0
        %1824 = vmatprep.subr.mxu0 0.0
        %1825 = vmatpush1.msra.mxu0 0.0
        %1826 = vmatprep.subr.mxu0 0.0
        %1827 = vmatpush1.msra.mxu0 0.0
        %1828 = vmatprep.subr.mxu0 0.0
        %1829 = vmatpush1.msra.mxu0 0.0
        %1830 = vmatprep.subr.mxu0 0.0
        %1831 = vmatpush1.msra.mxu0 0.0
        %1832 = vmatprep.subr.mxu0 0.0
        %1833 = vmatpush1.msra.mxu0 0.0
        %1834 = vmatprep.subr.mxu0 0.0
        %1835 = vmatpush1.msra.mxu0 0.0
        %1836 = vmatprep.subr.mxu0 0.0
        %1837 = vmatpush1.msra.mxu0 0.0
        %1838 = vmatprep.subr.mxu0 0.0
        %1839 = vmatpush1.msra.mxu0 0.0
        %1840 = vmatprep.subr.mxu0 0.0
        %1841 = vmatpush1.msra.mxu0 0.0
        %1842 = vmatprep.subr.mxu0 0.0
        %1843 = vmatpush1.msra.mxu0 0.0
        %1844 = vmatprep.subr.mxu0 0.0
        %1845 = vmatpush1.msra.mxu0 0.0
        %1846 = vmatprep.subr.mxu0 0.0
        %1847 = vmatpush1.msra.mxu0 0.0
        %1848 = vmatprep.subr.mxu0 0.0
        %1849 = vmatpush1.msra.mxu0 0.0
        %1850 = vmatprep.mubr.f32.mxu0 0.0
        %1851 = vmatmul.mubr.f32.gmra.mrb[0].mxu0 %v1303
        %v1852 = vpop.f32.mrb[0].mxu0
        %v1853 = vadd.f32 %v332, %v1852
        %v1854 = vpop.f32.mrb[0].mxu0
        %v1855 = vadd.f32 %v1289, %v1854
        %1856 = vdwg.mxu0
        %1857 = vmatprep.subr.mxu0 %v1352
        %1858 = vmatpush1.msra.mxu0 %v1349
        %1859 = vmatprep.subr.mxu0 0.0
        %1860 = vmatpush1.msra.mxu0 0.0
        %1861 = vmatprep.subr.mxu0 0.0
        %1862 = vmatpush1.msra.mxu0 0.0
        %1863 = vmatprep.subr.mxu0 0.0
        %1864 = vmatpush1.msra.mxu0 0.0
        %1865 = vmatprep.subr.mxu0 0.0
        %1866 = vmatpush1.msra.mxu0 0.0
        %1867 = vmatprep.subr.mxu0 0.0
        %1868 = vmatpush1.msra.mxu0 0.0
        %1869 = vmatprep.subr.mxu0 0.0
        %1870 = vmatpush1.msra.mxu0 0.0
        %1871 = vmatprep.subr.mxu0 0.0
        %1872 = vmatpush1.msra.mxu0 0.0
        %1873 = vmatprep.subr.mxu0 0.0
        %1874 = vmatpush1.msra.mxu0 0.0
        %1875 = vmatprep.subr.mxu0 0.0
        %1876 = vmatpush1.msra.mxu0 0.0
        %1877 = vmatprep.subr.mxu0 0.0
        %1878 = vmatpush1.msra.mxu0 0.0
        %1879 = vmatprep.subr.mxu0 0.0
        %1880 = vmatpush1.msra.mxu0 0.0
        %1881 = vmatprep.subr.mxu0 0.0
        %1882 = vmatpush1.msra.mxu0 0.0
        %1883 = vmatprep.subr.mxu0 0.0
        %1884 = vmatpush1.msra.mxu0 0.0
        %1885 = vmatprep.subr.mxu0 0.0
        %1886 = vmatpush1.msra.mxu0 0.0
        %1887 = vmatprep.subr.mxu0 0.0
        %1888 = vmatpush1.msra.mxu0 0.0
        %1889 = vmatprep.subr.mxu0 0.0
        %1890 = vmatpush1.msra.mxu0 0.0
        %1891 = vmatprep.subr.mxu0 0.0
        %1892 = vmatpush1.msra.mxu0 0.0
        %1893 = vmatprep.subr.mxu0 0.0
        %1894 = vmatpush1.msra.mxu0 0.0
        %1895 = vmatprep.subr.mxu0 0.0
        %1896 = vmatpush1.msra.mxu0 0.0
        %1897 = vmatprep.subr.mxu0 0.0
        %1898 = vmatpush1.msra.mxu0 0.0
        %1899 = vmatprep.subr.mxu0 0.0
        %1900 = vmatpush1.msra.mxu0 0.0
        %1901 = vmatprep.subr.mxu0 0.0
        %1902 = vmatpush1.msra.mxu0 0.0
        %1903 = vmatprep.subr.mxu0 0.0
        %1904 = vmatpush1.msra.mxu0 0.0
        %1905 = vmatprep.subr.mxu0 0.0
        %1906 = vmatpush1.msra.mxu0 0.0
        %1907 = vmatprep.subr.mxu0 0.0
        %1908 = vmatpush1.msra.mxu0 0.0
        %1909 = vmatprep.subr.mxu0 0.0
        %1910 = vmatpush1.msra.mxu0 0.0
        %1911 = vmatprep.subr.mxu0 0.0
        %1912 = vmatpush1.msra.mxu0 0.0
        %1913 = vmatprep.subr.mxu0 0.0
        %1914 = vmatpush1.msra.mxu0 0.0
        %1915 = vmatprep.subr.mxu0 0.0
        %1916 = vmatpush1.msra.mxu0 0.0
        %1917 = vmatprep.subr.mxu0 0.0
        %1918 = vmatpush1.msra.mxu0 0.0
        %1919 = vmatprep.subr.mxu0 0.0
        %1920 = vmatpush1.msra.mxu0 0.0
        %1921 = vmatprep.mubr.f32.mxu0 0.0
        %1922 = vmatmul.mubr.f32.gmra.mrb[0].mxu0 %v1303
        %v1923 = vpop.f32.mrb[0].mxu0
        %v1924 = vadd.f32 %v333, %v1923
        %v1925 = vpop.f32.mrb[0].mxu0
        %v1926 = vadd.f32 %v1290, %v1925
        %1927 = vdwg.mxu0
        %1928 = vmatprep.subr.mxu0 %v1358
        %1929 = vmatpush1.msra.mxu0 %v1355
        %1930 = vmatprep.subr.mxu0 0.0
        %1931 = vmatpush1.msra.mxu0 0.0
        %1932 = vmatprep.subr.mxu0 0.0
        %1933 = vmatpush1.msra.mxu0 0.0
        %1934 = vmatprep.subr.mxu0 0.0
        %1935 = vmatpush1.msra.mxu0 0.0
        %1936 = vmatprep.subr.mxu0 0.0
        %1937 = vmatpush1.msra.mxu0 0.0
        %1938 = vmatprep.subr.mxu0 0.0
        %1939 = vmatpush1.msra.mxu0 0.0
        %1940 = vmatprep.subr.mxu0 0.0
        %1941 = vmatpush1.msra.mxu0 0.0
        %1942 = vmatprep.subr.mxu0 0.0
        %1943 = vmatpush1.msra.mxu0 0.0
        %1944 = vmatprep.subr.mxu0 0.0
        %1945 = vmatpush1.msra.mxu0 0.0
        %1946 = vmatprep.subr.mxu0 0.0
        %1947 = vmatpush1.msra.mxu0 0.0
        %1948 = vmatprep.subr.mxu0 0.0
        %1949 = vmatpush1.msra.mxu0 0.0
        %1950 = vmatprep.subr.mxu0 0.0
        %1951 = vmatpush1.msra.mxu0 0.0
        %1952 = vmatprep.subr.mxu0 0.0
        %1953 = vmatpush1.msra.mxu0 0.0
        %1954 = vmatprep.subr.mxu0 0.0
        %1955 = vmatpush1.msra.mxu0 0.0
        %1956 = vmatprep.subr.mxu0 0.0
        %1957 = vmatpush1.msra.mxu0 0.0
        %1958 = vmatprep.subr.mxu0 0.0
        %1959 = vmatpush1.msra.mxu0 0.0
        %1960 = vmatprep.subr.mxu0 0.0
        %1961 = vmatpush1.msra.mxu0 0.0
        %1962 = vmatprep.subr.mxu0 0.0
        %1963 = vmatpush1.msra.mxu0 0.0
        %1964 = vmatprep.subr.mxu0 0.0
        %1965 = vmatpush1.msra.mxu0 0.0
        %1966 = vmatprep.subr.mxu0 0.0
        %1967 = vmatpush1.msra.mxu0 0.0
        %1968 = vmatprep.subr.mxu0 0.0
        %1969 = vmatpush1.msra.mxu0 0.0
        %1970 = vmatprep.subr.mxu0 0.0
        %1971 = vmatpush1.msra.mxu0 0.0
        %1972 = vmatprep.subr.mxu0 0.0
        %1973 = vmatpush1.msra.mxu0 0.0
        %1974 = vmatprep.subr.mxu0 0.0
        %1975 = vmatpush1.msra.mxu0 0.0
        %1976 = vmatprep.subr.mxu0 0.0
        %1977 = vmatpush1.msra.mxu0 0.0
        %1978 = vmatprep.subr.mxu0 0.0
        %1979 = vmatpush1.msra.mxu0 0.0
        %1980 = vmatprep.subr.mxu0 0.0
        %1981 = vmatpush1.msra.mxu0 0.0
        %1982 = vmatprep.subr.mxu0 0.0
        %1983 = vmatpush1.msra.mxu0 0.0
        %1984 = vmatprep.subr.mxu0 0.0
        %1985 = vmatpush1.msra.mxu0 0.0
        %1986 = vmatprep.subr.mxu0 0.0
        %1987 = vmatpush1.msra.mxu0 0.0
        %1988 = vmatprep.subr.mxu0 0.0
        %1989 = vmatpush1.msra.mxu0 0.0
        %1990 = vmatprep.subr.mxu0 0.0
        %1991 = vmatpush1.msra.mxu0 0.0
        %1992 = vmatprep.mubr.f32.mxu0 0.0
        %1993 = vmatmul.mubr.f32.gmra.mrb[0].mxu0 %v1303
        %v1994 = vpop.f32.mrb[0].mxu0
        %v1995 = vadd.f32 %v334, %v1994
        %v1996 = vpop.f32.mrb[0].mxu0
        %v1997 = vadd.f32 %v1291, %v1996
        %1998 = vdwg.mxu0
        %1999 = vset.pattern.permute.xlu0 3
        %2000 = vperm.xlu0 %1999, %v341
        %v2001 = vpop.permute.xlu0 %2000
        %v2003 = vmul.f32 %v1427, %v2001
        %v2004 = vmul.f32 %v1429, %v2001
        %v2005 = vmul.f32 %v1498, %v2001
        %v2006 = vmul.f32 %v1500, %v2001
        %v2007 = vmul.f32 %v1569, %v2001
        %v2008 = vmul.f32 %v1571, %v2001
        %v2009 = vmul.f32 %v1640, %v2001
        %v2010 = vmul.f32 %v1642, %v2001
        %v2011 = vmul.f32 %v1711, %v2001
        %v2012 = vmul.f32 %v1713, %v2001
        %v2013 = vmul.f32 %v1782, %v2001
        %v2014 = vmul.f32 %v1784, %v2001
        %v2015 = vmul.f32 %v1853, %v2001
        %v2016 = vmul.f32 %v1855, %v2001
        %v2017 = vmul.f32 %v1924, %v2001
        %v2018 = vmul.f32 %v1926, %v2001
        %v2019 = vmul.f32 %v1995, %v2001
        %v2020 = vmul.f32 %v1997, %v2001
        %2021 = vset.pattern.permute.xlu0 4
        %2022 = vperm.xlu0 %2021, %v341
        %v2023 = vpop.permute.xlu0 %2022
        %v2025 = vadd.f32 %v2003, %v2023
        %v2026 = vadd.f32 %v2004, %v2023
        %v2027 = vadd.f32 %v2005, %v2023
        %v2028 = vadd.f32 %v2006, %v2023
        %v2029 = vadd.f32 %v2007, %v2023
        %v2030 = vadd.f32 %v2008, %v2023
        %v2031 = vadd.f32 %v2009, %v2023
        %v2032 = vadd.f32 %v2010, %v2023
        %v2033 = vadd.f32 %v2011, %v2023
        %v2034 = vadd.f32 %v2012, %v2023
        %v2035 = vadd.f32 %v2013, %v2023
        %v2036 = vadd.f32 %v2014, %v2023
        %v2037 = vadd.f32 %v2015, %v2023
        %v2038 = vadd.f32 %v2016, %v2023
        %v2039 = vadd.f32 %v2017, %v2023
        %v2040 = vadd.f32 %v2018, %v2023
        %v2041 = vadd.f32 %v2019, %v2023
        %v2042 = vadd.f32 %v2020, %v2023
        %v2043 = vmax.f32 %v2025, 0.0
        %v2044 = vmax.f32 %v2026, 0.0
        %v2045 = vmax.f32 %v2027, 0.0
        %v2046 = vmax.f32 %v2028, 0.0
        %v2047 = vmax.f32 %v2029, 0.0
        %v2048 = vmax.f32 %v2030, 0.0
        %v2049 = vmax.f32 %v2031, 0.0
        %v2050 = vmax.f32 %v2032, 0.0
        %v2051 = vmax.f32 %v2033, 0.0
        %v2052 = vmax.f32 %v2034, 0.0
        %v2053 = vmax.f32 %v2035, 0.0
        %v2054 = vmax.f32 %v2036, 0.0
        %v2055 = vmax.f32 %v2037, 0.0
        %v2056 = vmax.f32 %v2038, 0.0
        %v2057 = vmax.f32 %v2039, 0.0
        %v2058 = vmax.f32 %v2040, 0.0
        %v2059 = vmax.f32 %v2041, 0.0
        %v2060 = vmax.f32 %v2042, 0.0
        %2061 = vset.pattern.permute.xlu0 5
        %2062 = vperm.xlu0 %2061, %v341
        %v2063 = vpop.permute.xlu0 %2062
        %v2066 = vsel %vm1301, %v340, 0
        %v2069 = vsel %vm1305, %v2043, 0
        %v2072 = vsel %vm1305, %v2044, 0
        %v2075 = vsel %vm1305, %v2045, 0
        %v2078 = vsel %vm1305, %v2046, 0
        %v2081 = vsel %vm1305, %v2047, 0
        %v2084 = vsel %vm1305, %v2048, 0
        %v2087 = vsel %vm1305, %v2049, 0
        %v2090 = vsel %vm1305, %v2050, 0
        %v2093 = vsel %vm1305, %v2051, 0
        %v2096 = vsel %vm1305, %v2052, 0
        %v2099 = vsel %vm1305, %v2053, 0
        %v2102 = vsel %vm1305, %v2054, 0
        %v2105 = vsel %vm1305, %v2055, 0
        %v2108 = vsel %vm1305, %v2056, 0
        %v2111 = vsel %vm1305, %v2057, 0
        %v2114 = vsel %vm1305, %v2058, 0
        %v2117 = vsel %vm1305, %v2059, 0
        %v2120 = vsel %vm1305, %v2060, 0
        %2122 = vmatprep.subr.mxu0 %v2072
        %2123 = vmatpush1.msra.mxu0 %v2069
        %2124 = vmatprep.subr.mxu0 0.0
        %2125 = vmatpush1.msra.mxu0 0.0
        %2126 = vmatprep.subr.mxu0 0.0
        %2127 = vmatpush1.msra.mxu0 0.0
        %2128 = vmatprep.subr.mxu0 0.0
        %2129 = vmatpush1.msra.mxu0 0.0
        %2130 = vmatprep.subr.mxu0 0.0
        %2131 = vmatpush1.msra.mxu0 0.0
        %2132 = vmatprep.subr.mxu0 0.0
        %2133 = vmatpush1.msra.mxu0 0.0
        %2134 = vmatprep.subr.mxu0 0.0
        %2135 = vmatpush1.msra.mxu0 0.0
        %2136 = vmatprep.subr.mxu0 0.0
        %2137 = vmatpush1.msra.mxu0 0.0
        %2138 = vmatprep.subr.mxu0 0.0
        %2139 = vmatpush1.msra.mxu0 0.0
        %2140 = vmatprep.subr.mxu0 0.0
        %2141 = vmatpush1.msra.mxu0 0.0
        %2142 = vmatprep.subr.mxu0 0.0
        %2143 = vmatpush1.msra.mxu0 0.0
        %2144 = vmatprep.subr.mxu0 0.0
        %2145 = vmatpush1.msra.mxu0 0.0
        %2146 = vmatprep.subr.mxu0 0.0
        %2147 = vmatpush1.msra.mxu0 0.0
        %2148 = vmatprep.subr.mxu0 0.0
        %2149 = vmatpush1.msra.mxu0 0.0
        %2150 = vmatprep.subr.mxu0 0.0
        %2151 = vmatpush1.msra.mxu0 0.0
        %2152 = vmatprep.subr.mxu0 0.0
        %2153 = vmatpush1.msra.mxu0 0.0
        %2154 = vmatprep.subr.mxu0 0.0
        %2155 = vmatpush1.msra.mxu0 0.0
        %2156 = vmatprep.subr.mxu0 0.0
        %2157 = vmatpush1.msra.mxu0 0.0
        %2158 = vmatprep.subr.mxu0 0.0
        %2159 = vmatpush1.msra.mxu0 0.0
        %2160 = vmatprep.subr.mxu0 0.0
        %2161 = vmatpush1.msra.mxu0 0.0
        %2162 = vmatprep.subr.mxu0 0.0
        %2163 = vmatpush1.msra.mxu0 0.0
        %2164 = vmatprep.subr.mxu0 0.0
        %2165 = vmatpush1.msra.mxu0 0.0
        %2166 = vmatprep.subr.mxu0 0.0
        %2167 = vmatpush1.msra.mxu0 0.0
        %2168 = vmatprep.subr.mxu0 0.0
        %2169 = vmatpush1.msra.mxu0 0.0
        %2170 = vmatprep.subr.mxu0 0.0
        %2171 = vmatpush1.msra.mxu0 0.0
        %2172 = vmatprep.subr.mxu0 0.0
        %2173 = vmatpush1.msra.mxu0 0.0
        %2174 = vmatprep.subr.mxu0 0.0
        %2175 = vmatpush1.msra.mxu0 0.0
        %2176 = vmatprep.subr.mxu0 0.0
        %2177 = vmatpush1.msra.mxu0 0.0
        %2178 = vmatprep.subr.mxu0 0.0
        %2179 = vmatpush1.msra.mxu0 0.0
        %2180 = vmatprep.subr.mxu0 0.0
        %2181 = vmatpush1.msra.mxu0 0.0
        %2182 = vmatprep.subr.mxu0 0.0
        %2183 = vmatpush1.msra.mxu0 0.0
        %2184 = vmatprep.subr.mxu0 0.0
        %2185 = vmatpush1.msra.mxu0 0.0
        %2186 = vmatprep.mubr.f32.mxu0 0.0
        %2187 = vmatmul.mubr.f32.gmra.mrb[0].mxu0 %v2066
        %v2188 = vpop.f32.mrb[0].mxu0
        %v2189 = vadd.f32 %v2063, %v2188
        %v2190 = vpop.f32.mrb[0].mxu0
        %v2191 = vadd.f32 %v2063, %v2190
        %2192 = vdwg.mxu0
        %2193 = vmatprep.subr.mxu0 %v2078
        %2194 = vmatpush1.msra.mxu0 %v2075
        %2195 = vmatprep.subr.mxu0 0.0
        %2196 = vmatpush1.msra.mxu0 0.0
        %2197 = vmatprep.subr.mxu0 0.0
        %2198 = vmatpush1.msra.mxu0 0.0
        %2199 = vmatprep.subr.mxu0 0.0
        %2200 = vmatpush1.msra.mxu0 0.0
        %2201 = vmatprep.subr.mxu0 0.0
        %2202 = vmatpush1.msra.mxu0 0.0
        %2203 = vmatprep.subr.mxu0 0.0
        %2204 = vmatpush1.msra.mxu0 0.0
        %2205 = vmatprep.subr.mxu0 0.0
        %2206 = vmatpush1.msra.mxu0 0.0
        %2207 = vmatprep.subr.mxu0 0.0
        %2208 = vmatpush1.msra.mxu0 0.0
        %2209 = vmatprep.subr.mxu0 0.0
        %2210 = vmatpush1.msra.mxu0 0.0
        %2211 = vmatprep.subr.mxu0 0.0
        %2212 = vmatpush1.msra.mxu0 0.0
        %2213 = vmatprep.subr.mxu0 0.0
        %2214 = vmatpush1.msra.mxu0 0.0
        %2215 = vmatprep.subr.mxu0 0.0
        %2216 = vmatpush1.msra.mxu0 0.0
        %2217 = vmatprep.subr.mxu0 0.0
        %2218 = vmatpush1.msra.mxu0 0.0
        %2219 = vmatprep.subr.mxu0 0.0
        %2220 = vmatpush1.msra.mxu0 0.0
        %2221 = vmatprep.subr.mxu0 0.0
        %2222 = vmatpush1.msra.mxu0 0.0
        %2223 = vmatprep.subr.mxu0 0.0
        %2224 = vmatpush1.msra.mxu0 0.0
        %2225 = vmatprep.subr.mxu0 0.0
        %2226 = vmatpush1.msra.mxu0 0.0
        %2227 = vmatprep.subr.mxu0 0.0
        %2228 = vmatpush1.msra.mxu0 0.0
        %2229 = vmatprep.subr.mxu0 0.0
        %2230 = vmatpush1.msra.mxu0 0.0
        %2231 = vmatprep.subr.mxu0 0.0
        %2232 = vmatpush1.msra.mxu0 0.0
        %2233 = vmatprep.subr.mxu0 0.0
        %2234 = vmatpush1.msra.mxu0 0.0
        %2235 = vmatprep.subr.mxu0 0.0
        %2236 = vmatpush1.msra.mxu0 0.0
        %2237 = vmatprep.subr.mxu0 0.0
        %2238 = vmatpush1.msra.mxu0 0.0
        %2239 = vmatprep.subr.mxu0 0.0
        %2240 = vmatpush1.msra.mxu0 0.0
        %2241 = vmatprep.subr.mxu0 0.0
        %2242 = vmatpush1.msra.mxu0 0.0
        %2243 = vmatprep.subr.mxu0 0.0
        %2244 = vmatpush1.msra.mxu0 0.0
        %2245 = vmatprep.subr.mxu0 0.0
        %2246 = vmatpush1.msra.mxu0 0.0
        %2247 = vmatprep.subr.mxu0 0.0
        %2248 = vmatpush1.msra.mxu0 0.0
        %2249 = vmatprep.subr.mxu0 0.0
        %2250 = vmatpush1.msra.mxu0 0.0
        %2251 = vmatprep.subr.mxu0 0.0
        %2252 = vmatpush1.msra.mxu0 0.0
        %2253 = vmatprep.subr.mxu0 0.0
        %2254 = vmatpush1.msra.mxu0 0.0
        %2255 = vmatprep.subr.mxu0 0.0
        %2256 = vmatpush1.msra.mxu0 0.0
        %2257 = vmatprep.mubr.f32.mxu0 0.0
        %2258 = vmatmul.mubr.f32.gmra.mrb[0].mxu0 %v2066
        %v2259 = vpop.f32.mrb[0].mxu0
        %v2260 = vadd.f32 %v2063, %v2259
        %v2261 = vpop.f32.mrb[0].mxu0
        %v2262 = vadd.f32 %v2063, %v2261
        %2263 = vdwg.mxu0
        %2264 = vmatprep.subr.mxu0 %v2084
        %2265 = vmatpush1.msra.mxu0 %v2081
        %2266 = vmatprep.subr.mxu0 0.0
        %2267 = vmatpush1.msra.mxu0 0.0
        %2268 = vmatprep.subr.mxu0 0.0
        %2269 = vmatpush1.msra.mxu0 0.0
        %2270 = vmatprep.subr.mxu0 0.0
        %2271 = vmatpush1.msra.mxu0 0.0
        %2272 = vmatprep.subr.mxu0 0.0
        %2273 = vmatpush1.msra.mxu0 0.0
        %2274 = vmatprep.subr.mxu0 0.0
        %2275 = vmatpush1.msra.mxu0 0.0
        %2276 = vmatprep.subr.mxu0 0.0
        %2277 = vmatpush1.msra.mxu0 0.0
        %2278 = vmatprep.subr.mxu0 0.0
        %2279 = vmatpush1.msra.mxu0 0.0
        %2280 = vmatprep.subr.mxu0 0.0
        %2281 = vmatpush1.msra.mxu0 0.0
        %2282 = vmatprep.subr.mxu0 0.0
        %2283 = vmatpush1.msra.mxu0 0.0
        %2284 = vmatprep.subr.mxu0 0.0
        %2285 = vmatpush1.msra.mxu0 0.0
        %2286 = vmatprep.subr.mxu0 0.0
        %2287 = vmatpush1.msra.mxu0 0.0
        %2288 = vmatprep.subr.mxu0 0.0
        %2289 = vmatpush1.msra.mxu0 0.0
        %2290 = vmatprep.subr.mxu0 0.0
        %2291 = vmatpush1.msra.mxu0 0.0
        %2292 = vmatprep.subr.mxu0 0.0
        %2293 = vmatpush1.msra.mxu0 0.0
        %2294 = vmatprep.subr.mxu0 0.0
        %2295 = vmatpush1.msra.mxu0 0.0
        %2296 = vmatprep.subr.mxu0 0.0
        %2297 = vmatpush1.msra.mxu0 0.0
        %2298 = vmatprep.subr.mxu0 0.0
        %2299 = vmatpush1.msra.mxu0 0.0
        %2300 = vmatprep.subr.mxu0 0.0
        %2301 = vmatpush1.msra.mxu0 0.0
        %2302 = vmatprep.subr.mxu0 0.0
        %2303 = vmatpush1.msra.mxu0 0.0
        %2304 = vmatprep.subr.mxu0 0.0
        %2305 = vmatpush1.msra.mxu0 0.0
        %2306 = vmatprep.subr.mxu0 0.0
        %2307 = vmatpush1.msra.mxu0 0.0
        %2308 = vmatprep.subr.mxu0 0.0
        %2309 = vmatpush1.msra.mxu0 0.0
        %2310 = vmatprep.subr.mxu0 0.0
        %2311 = vmatpush1.msra.mxu0 0.0
        %2312 = vmatprep.subr.mxu0 0.0
        %2313 = vmatpush1.msra.mxu0 0.0
        %2314 = vmatprep.subr.mxu0 0.0
        %2315 = vmatpush1.msra.mxu0 0.0
        %2316 = vmatprep.subr.mxu0 0.0
        %2317 = vmatpush1.msra.mxu0 0.0
        %2318 = vmatprep.subr.mxu0 0.0
        %2319 = vmatpush1.msra.mxu0 0.0
        %2320 = vmatprep.subr.mxu0 0.0
        %2321 = vmatpush1.msra.mxu0 0.0
        %2322 = vmatprep.subr.mxu0 0.0
        %2323 = vmatpush1.msra.mxu0 0.0
        %2324 = vmatprep.subr.mxu0 0.0
        %2325 = vmatpush1.msra.mxu0 0.0
        %2326 = vmatprep.subr.mxu0 0.0
        %2327 = vmatpush1.msra.mxu0 0.0
        %2328 = vmatprep.mubr.f32.mxu0 0.0
        %2329 = vmatmul.mubr.f32.gmra.mrb[0].mxu0 %v2066
        %v2330 = vpop.f32.mrb[0].mxu0
        %v2331 = vadd.f32 %v2063, %v2330
        %v2332 = vpop.f32.mrb[0].mxu0
        %v2333 = vadd.f32 %v2063, %v2332
        %2334 = vdwg.mxu0
        %2335 = vmatprep.subr.mxu0 %v2090
        %2336 = vmatpush1.msra.mxu0 %v2087
        %2337 = vmatprep.subr.mxu0 0.0
        %2338 = vmatpush1.msra.mxu0 0.0
        %2339 = vmatprep.subr.mxu0 0.0
        %2340 = vmatpush1.msra.mxu0 0.0
        %2341 = vmatprep.subr.mxu0 0.0
        %2342 = vmatpush1.msra.mxu0 0.0
        %2343 = vmatprep.subr.mxu0 0.0
        %2344 = vmatpush1.msra.mxu0 0.0
        %2345 = vmatprep.subr.mxu0 0.0
        %2346 = vmatpush1.msra.mxu0 0.0
        %2347 = vmatprep.subr.mxu0 0.0
        %2348 = vmatpush1.msra.mxu0 0.0
        %2349 = vmatprep.subr.mxu0 0.0
        %2350 = vmatpush1.msra.mxu0 0.0
        %2351 = vmatprep.subr.mxu0 0.0
        %2352 = vmatpush1.msra.mxu0 0.0
        %2353 = vmatprep.subr.mxu0 0.0
        %2354 = vmatpush1.msra.mxu0 0.0
        %2355 = vmatprep.subr.mxu0 0.0
        %2356 = vmatpush1.msra.mxu0 0.0
        %2357 = vmatprep.subr.mxu0 0.0
        %2358 = vmatpush1.msra.mxu0 0.0
        %2359 = vmatprep.subr.mxu0 0.0
        %2360 = vmatpush1.msra.mxu0 0.0
        %2361 = vmatprep.subr.mxu0 0.0
        %2362 = vmatpush1.msra.mxu0 0.0
        %2363 = vmatprep.subr.mxu0 0.0
        %2364 = vmatpush1.msra.mxu0 0.0
        %2365 = vmatprep.subr.mxu0 0.0
        %2366 = vmatpush1.msra.mxu0 0.0
        %2367 = vmatprep.subr.mxu0 0.0
        %2368 = vmatpush1.msra.mxu0 0.0
        %2369 = vmatprep.subr.mxu0 0.0
        %2370 = vmatpush1.msra.mxu0 0.0
        %2371 = vmatprep.subr.mxu0 0.0
        %2372 = vmatpush1.msra.mxu0 0.0
        %2373 = vmatprep.subr.mxu0 0.0
        %2374 = vmatpush1.msra.mxu0 0.0
        %2375 = vmatprep.subr.mxu0 0.0
        %2376 = vmatpush1.msra.mxu0 0.0
        %2377 = vmatprep.subr.mxu0 0.0
        %2378 = vmatpush1.msra.mxu0 0.0
        %2379 = vmatprep.subr.mxu0 0.0
        %2380 = vmatpush1.msra.mxu0 0.0
        %2381 = vmatprep.subr.mxu0 0.0
        %2382 = vmatpush1.msra.mxu0 0.0
        %2383 = vmatprep.subr.mxu0 0.0
        %2384 = vmatpush1.msra.mxu0 0.0
        %2385 = vmatprep.subr.mxu0 0.0
        %2386 = vmatpush1.msra.mxu0 0.0
        %2387 = vmatprep.subr.mxu0 0.0
        %2388 = vmatpush1.msra.mxu0 0.0
        %2389 = vmatprep.subr.mxu0 0.0
        %2390 = vmatpush1.msra.mxu0 0.0
        %2391 = vmatprep.subr.mxu0 0.0
        %2392 = vmatpush1.msra.mxu0 0.0
        %2393 = vmatprep.subr.mxu0 0.0
        %2394 = vmatpush1.msra.mxu0 0.0
        %2395 = vmatprep.subr.mxu0 0.0
        %2396 = vmatpush1.msra.mxu0 0.0
        %2397 = vmatprep.subr.mxu0 0.0
        %2398 = vmatpush1.msra.mxu0 0.0
        %2399 = vmatprep.mubr.f32.mxu0 0.0
        %2400 = vmatmul.mubr.f32.gmra.mrb[0].mxu0 %v2066
        %v2401 = vpop.f32.mrb[0].mxu0
        %v2402 = vadd.f32 %v2063, %v2401
        %v2403 = vpop.f32.mrb[0].mxu0
        %v2404 = vadd.f32 %v2063, %v2403
        %2405 = vdwg.mxu0
        %2406 = vmatprep.subr.mxu0 %v2096
        %2407 = vmatpush1.msra.mxu0 %v2093
        %2408 = vmatprep.subr.mxu0 0.0
        %2409 = vmatpush1.msra.mxu0 0.0
        %2410 = vmatprep.subr.mxu0 0.0
        %2411 = vmatpush1.msra.mxu0 0.0
        %2412 = vmatprep.subr.mxu0 0.0
        %2413 = vmatpush1.msra.mxu0 0.0
        %2414 = vmatprep.subr.mxu0 0.0
        %2415 = vmatpush1.msra.mxu0 0.0
        %2416 = vmatprep.subr.mxu0 0.0
        %2417 = vmatpush1.msra.mxu0 0.0
        %2418 = vmatprep.subr.mxu0 0.0
        %2419 = vmatpush1.msra.mxu0 0.0
        %2420 = vmatprep.subr.mxu0 0.0
        %2421 = vmatpush1.msra.mxu0 0.0
        %2422 = vmatprep.subr.mxu0 0.0
        %2423 = vmatpush1.msra.mxu0 0.0
        %2424 = vmatprep.subr.mxu0 0.0
        %2425 = vmatpush1.msra.mxu0 0.0
        %2426 = vmatprep.subr.mxu0 0.0
        %2427 = vmatpush1.msra.mxu0 0.0
        %2428 = vmatprep.subr.mxu0 0.0
        %2429 = vmatpush1.msra.mxu0 0.0
        %2430 = vmatprep.subr.mxu0 0.0
        %2431 = vmatpush1.msra.mxu0 0.0
        %2432 = vmatprep.subr.mxu0 0.0
        %2433 = vmatpush1.msra.mxu0 0.0
        %2434 = vmatprep.subr.mxu0 0.0
        %2435 = vmatpush1.msra.mxu0 0.0
        %2436 = vmatprep.subr.mxu0 0.0
        %2437 = vmatpush1.msra.mxu0 0.0
        %2438 = vmatprep.subr.mxu0 0.0
        %2439 = vmatpush1.msra.mxu0 0.0
        %2440 = vmatprep.subr.mxu0 0.0
        %2441 = vmatpush1.msra.mxu0 0.0
        %2442 = vmatprep.subr.mxu0 0.0
        %2443 = vmatpush1.msra.mxu0 0.0
        %2444 = vmatprep.subr.mxu0 0.0
        %2445 = vmatpush1.msra.mxu0 0.0
        %2446 = vmatprep.subr.mxu0 0.0
        %2447 = vmatpush1.msra.mxu0 0.0
        %2448 = vmatprep.subr.mxu0 0.0
        %2449 = vmatpush1.msra.mxu0 0.0
        %2450 = vmatprep.subr.mxu0 0.0
        %2451 = vmatpush1.msra.mxu0 0.0
        %2452 = vmatprep.subr.mxu0 0.0
        %2453 = vmatpush1.msra.mxu0 0.0
        %2454 = vmatprep.subr.mxu0 0.0
        %2455 = vmatpush1.msra.mxu0 0.0
        %2456 = vmatprep.subr.mxu0 0.0
        %2457 = vmatpush1.msra.mxu0 0.0
        %2458 = vmatprep.subr.mxu0 0.0
        %2459 = vmatpush1.msra.mxu0 0.0
        %2460 = vmatprep.subr.mxu0 0.0
        %2461 = vmatpush1.msra.mxu0 0.0
        %2462 = vmatprep.subr.mxu0 0.0
        %2463 = vmatpush1.msra.mxu0 0.0
        %2464 = vmatprep.subr.mxu0 0.0
        %2465 = vmatpush1.msra.mxu0 0.0
        %2466 = vmatprep.subr.mxu0 0.0
        %2467 = vmatpush1.msra.mxu0 0.0
        %2468 = vmatprep.subr.mxu0 0.0
        %2469 = vmatpush1.msra.mxu0 0.0
        %2470 = vmatprep.mubr.f32.mxu0 0.0
        %2471 = vmatmul.mubr.f32.gmra.mrb[0].mxu0 %v2066
        %v2472 = vpop.f32.mrb[0].mxu0
        %v2473 = vadd.f32 %v2063, %v2472
        %v2474 = vpop.f32.mrb[0].mxu0
        %v2475 = vadd.f32 %v2063, %v2474
        %2476 = vdwg.mxu0
        %2477 = vmatprep.subr.mxu0 %v2102
        %2478 = vmatpush1.msra.mxu0 %v2099
        %2479 = vmatprep.subr.mxu0 0.0
        %2480 = vmatpush1.msra.mxu0 0.0
        %2481 = vmatprep.subr.mxu0 0.0
        %2482 = vmatpush1.msra.mxu0 0.0
        %2483 = vmatprep.subr.mxu0 0.0
        %2484 = vmatpush1.msra.mxu0 0.0
        %2485 = vmatprep.subr.mxu0 0.0
        %2486 = vmatpush1.msra.mxu0 0.0
        %2487 = vmatprep.subr.mxu0 0.0
        %2488 = vmatpush1.msra.mxu0 0.0
        %2489 = vmatprep.subr.mxu0 0.0
        %2490 = vmatpush1.msra.mxu0 0.0
        %2491 = vmatprep.subr.mxu0 0.0
        %2492 = vmatpush1.msra.mxu0 0.0
        %2493 = vmatprep.subr.mxu0 0.0
        %2494 = vmatpush1.msra.mxu0 0.0
        %2495 = vmatprep.subr.mxu0 0.0
        %2496 = vmatpush1.msra.mxu0 0.0
        %2497 = vmatprep.subr.mxu0 0.0
        %2498 = vmatpush1.msra.mxu0 0.0
        %2499 = vmatprep.subr.mxu0 0.0
        %2500 = vmatpush1.msra.mxu0 0.0
        %2501 = vmatprep.subr.mxu0 0.0
        %2502 = vmatpush1.msra.mxu0 0.0
        %2503 = vmatprep.subr.mxu0 0.0
        %2504 = vmatpush1.msra.mxu0 0.0
        %2505 = vmatprep.subr.mxu0 0.0
        %2506 = vmatpush1.msra.mxu0 0.0
        %2507 = vmatprep.subr.mxu0 0.0
        %2508 = vmatpush1.msra.mxu0 0.0
        %2509 = vmatprep.subr.mxu0 0.0
        %2510 = vmatpush1.msra.mxu0 0.0
        %2511 = vmatprep.subr.mxu0 0.0
        %2512 = vmatpush1.msra.mxu0 0.0
        %2513 = vmatprep.subr.mxu0 0.0
        %2514 = vmatpush1.msra.mxu0 0.0
        %2515 = vmatprep.subr.mxu0 0.0
        %2516 = vmatpush1.msra.mxu0 0.0
        %2517 = vmatprep.subr.mxu0 0.0
        %2518 = vmatpush1.msra.mxu0 0.0
        %2519 = vmatprep.subr.mxu0 0.0
        %2520 = vmatpush1.msra.mxu0 0.0
        %2521 = vmatprep.subr.mxu0 0.0
        %2522 = vmatpush1.msra.mxu0 0.0
        %2523 = vmatprep.subr.mxu0 0.0
        %2524 = vmatpush1.msra.mxu0 0.0
        %2525 = vmatprep.subr.mxu0 0.0
        %2526 = vmatpush1.msra.mxu0 0.0
        %2527 = vmatprep.subr.mxu0 0.0
        %2528 = vmatpush1.msra.mxu0 0.0
        %2529 = vmatprep.subr.mxu0 0.0
        %2530 = vmatpush1.msra.mxu0 0.0
        %2531 = vmatprep.subr.mxu0 0.0
        %2532 = vmatpush1.msra.mxu0 0.0
        %2533 = vmatprep.subr.mxu0 0.0
        %2534 = vmatpush1.msra.mxu0 0.0
        %2535 = vmatprep.subr.mxu0 0.0
        %2536 = vmatpush1.msra.mxu0 0.0
        %2537 = vmatprep.subr.mxu0 0.0
        %2538 = vmatpush1.msra.mxu0 0.0
        %2539 = vmatprep.subr.mxu0 0.0
        %2540 = vmatpush1.msra.mxu0 0.0
        %2541 = vmatprep.mubr.f32.mxu0 0.0
        %2542 = vmatmul.mubr.f32.gmra.mrb[0].mxu0 %v2066
        %v2543 = vpop.f32.mrb[0].mxu0
        %v2544 = vadd.f32 %v2063, %v2543
        %v2545 = vpop.f32.mrb[0].mxu0
        %v2546 = vadd.f32 %v2063, %v2545
        %2547 = vdwg.mxu0
        %2548 = vmatprep.subr.mxu0 %v2108
        %2549 = vmatpush1.msra.mxu0 %v2105
        %2550 = vmatprep.subr.mxu0 0.0
        %2551 = vmatpush1.msra.mxu0 0.0
        %2552 = vmatprep.subr.mxu0 0.0
        %2553 = vmatpush1.msra.mxu0 0.0
        %2554 = vmatprep.subr.mxu0 0.0
        %2555 = vmatpush1.msra.mxu0 0.0
        %2556 = vmatprep.subr.mxu0 0.0
        %2557 = vmatpush1.msra.mxu0 0.0
        %2558 = vmatprep.subr.mxu0 0.0
        %2559 = vmatpush1.msra.mxu0 0.0
        %2560 = vmatprep.subr.mxu0 0.0
        %2561 = vmatpush1.msra.mxu0 0.0
        %2562 = vmatprep.subr.mxu0 0.0
        %2563 = vmatpush1.msra.mxu0 0.0
        %2564 = vmatprep.subr.mxu0 0.0
        %2565 = vmatpush1.msra.mxu0 0.0
        %2566 = vmatprep.subr.mxu0 0.0
        %2567 = vmatpush1.msra.mxu0 0.0
        %2568 = vmatprep.subr.mxu0 0.0
        %2569 = vmatpush1.msra.mxu0 0.0
        %2570 = vmatprep.subr.mxu0 0.0
        %2571 = vmatpush1.msra.mxu0 0.0
        %2572 = vmatprep.subr.mxu0 0.0
        %2573 = vmatpush1.msra.mxu0 0.0
        %2574 = vmatprep.subr.mxu0 0.0
        %2575 = vmatpush1.msra.mxu0 0.0
        %2576 = vmatprep.subr.mxu0 0.0
        %2577 = vmatpush1.msra.mxu0 0.0
        %2578 = vmatprep.subr.mxu0 0.0
        %2579 = vmatpush1.msra.mxu0 0.0
        %2580 = vmatprep.subr.mxu0 0.0
        %2581 = vmatpush1.msra.mxu0 0.0
        %2582 = vmatprep.subr.mxu0 0.0
        %2583 = vmatpush1.msra.mxu0 0.0
        %2584 = vmatprep.subr.mxu0 0.0
        %2585 = vmatpush1.msra.mxu0 0.0
        %2586 = vmatprep.subr.mxu0 0.0
        %2587 = vmatpush1.msra.mxu0 0.0
        %2588 = vmatprep.subr.mxu0 0.0
        %2589 = vmatpush1.msra.mxu0 0.0
        %2590 = vmatprep.subr.mxu0 0.0
        %2591 = vmatpush1.msra.mxu0 0.0
        %2592 = vmatprep.subr.mxu0 0.0
        %2593 = vmatpush1.msra.mxu0 0.0
        %2594 = vmatprep.subr.mxu0 0.0
        %2595 = vmatpush1.msra.mxu0 0.0
        %2596 = vmatprep.subr.mxu0 0.0
        %2597 = vmatpush1.msra.mxu0 0.0
        %2598 = vmatprep.subr.mxu0 0.0
        %2599 = vmatpush1.msra.mxu0 0.0
        %2600 = vmatprep.subr.mxu0 0.0
        %2601 = vmatpush1.msra.mxu0 0.0
        %2602 = vmatprep.subr.mxu0 0.0
        %2603 = vmatpush1.msra.mxu0 0.0
        %2604 = vmatprep.subr.mxu0 0.0
        %2605 = vmatpush1.msra.mxu0 0.0
        %2606 = vmatprep.subr.mxu0 0.0
        %2607 = vmatpush1.msra.mxu0 0.0
        %2608 = vmatprep.subr.mxu0 0.0
        %2609 = vmatpush1.msra.mxu0 0.0
        %2610 = vmatprep.subr.mxu0 0.0
        %2611 = vmatpush1.msra.mxu0 0.0
        %2612 = vmatprep.mubr.f32.mxu0 0.0
        %2613 = vmatmul.mubr.f32.gmra.mrb[0].mxu0 %v2066
        %v2614 = vpop.f32.mrb[0].mxu0
        %v2615 = vadd.f32 %v2063, %v2614
        %v2616 = vpop.f32.mrb[0].mxu0
        %v2617 = vadd.f32 %v2063, %v2616
        %2618 = vdwg.mxu0
        %2619 = vmatprep.subr.mxu0 %v2114
        %2620 = vmatpush1.msra.mxu0 %v2111
        %2621 = vmatprep.subr.mxu0 0.0
        %2622 = vmatpush1.msra.mxu0 0.0
        %2623 = vmatprep.subr.mxu0 0.0
        %2624 = vmatpush1.msra.mxu0 0.0
        %2625 = vmatprep.subr.mxu0 0.0
        %2626 = vmatpush1.msra.mxu0 0.0
        %2627 = vmatprep.subr.mxu0 0.0
        %2628 = vmatpush1.msra.mxu0 0.0
        %2629 = vmatprep.subr.mxu0 0.0
        %2630 = vmatpush1.msra.mxu0 0.0
        %2631 = vmatprep.subr.mxu0 0.0
        %2632 = vmatpush1.msra.mxu0 0.0
        %2633 = vmatprep.subr.mxu0 0.0
        %2634 = vmatpush1.msra.mxu0 0.0
        %2635 = vmatprep.subr.mxu0 0.0
        %2636 = vmatpush1.msra.mxu0 0.0
        %2637 = vmatprep.subr.mxu0 0.0
        %2638 = vmatpush1.msra.mxu0 0.0
        %2639 = vmatprep.subr.mxu0 0.0
        %2640 = vmatpush1.msra.mxu0 0.0
        %2641 = vmatprep.subr.mxu0 0.0
        %2642 = vmatpush1.msra.mxu0 0.0
        %2643 = vmatprep.subr.mxu0 0.0
        %2644 = vmatpush1.msra.mxu0 0.0
        %2645 = vmatprep.subr.mxu0 0.0
        %2646 = vmatpush1.msra.mxu0 0.0
        %2647 = vmatprep.subr.mxu0 0.0
        %2648 = vmatpush1.msra.mxu0 0.0
        %2649 = vmatprep.subr.mxu0 0.0
        %2650 = vmatpush1.msra.mxu0 0.0
        %2651 = vmatprep.subr.mxu0 0.0
        %2652 = vmatpush1.msra.mxu0 0.0
        %2653 = vmatprep.subr.mxu0 0.0
        %2654 = vmatpush1.msra.mxu0 0.0
        %2655 = vmatprep.subr.mxu0 0.0
        %2656 = vmatpush1.msra.mxu0 0.0
        %2657 = vmatprep.subr.mxu0 0.0
        %2658 = vmatpush1.msra.mxu0 0.0
        %2659 = vmatprep.subr.mxu0 0.0
        %2660 = vmatpush1.msra.mxu0 0.0
        %2661 = vmatprep.subr.mxu0 0.0
        %2662 = vmatpush1.msra.mxu0 0.0
        %2663 = vmatprep.subr.mxu0 0.0
        %2664 = vmatpush1.msra.mxu0 0.0
        %2665 = vmatprep.subr.mxu0 0.0
        %2666 = vmatpush1.msra.mxu0 0.0
        %2667 = vmatprep.subr.mxu0 0.0
        %2668 = vmatpush1.msra.mxu0 0.0
        %2669 = vmatprep.subr.mxu0 0.0
        %2670 = vmatpush1.msra.mxu0 0.0
        %2671 = vmatprep.subr.mxu0 0.0
        %2672 = vmatpush1.msra.mxu0 0.0
        %2673 = vmatprep.subr.mxu0 0.0
        %2674 = vmatpush1.msra.mxu0 0.0
        %2675 = vmatprep.subr.mxu0 0.0
        %2676 = vmatpush1.msra.mxu0 0.0
        %2677 = vmatprep.subr.mxu0 0.0
        %2678 = vmatpush1.msra.mxu0 0.0
        %2679 = vmatprep.subr.mxu0 0.0
        %2680 = vmatpush1.msra.mxu0 0.0
        %2681 = vmatprep.subr.mxu0 0.0
        %2682 = vmatpush1.msra.mxu0 0.0
        %2683 = vmatprep.mubr.f32.mxu0 0.0
        %2684 = vmatmul.mubr.f32.gmra.mrb[0].mxu0 %v2066
        %v2685 = vpop.f32.mrb[0].mxu0
        %v2686 = vadd.f32 %v2063, %v2685
        %v2687 = vpop.f32.mrb[0].mxu0
        %v2688 = vadd.f32 %v2063, %v2687
        %2689 = vdwg.mxu0
        %2690 = vmatprep.subr.mxu0 %v2120
        %2691 = vmatpush1.msra.mxu0 %v2117
        %2692 = vmatprep.subr.mxu0 0.0
        %2693 = vmatpush1.msra.mxu0 0.0
        %2694 = vmatprep.subr.mxu0 0.0
        %2695 = vmatpush1.msra.mxu0 0.0
        %2696 = vmatprep.subr.mxu0 0.0
        %2697 = vmatpush1.msra.mxu0 0.0
        %2698 = vmatprep.subr.mxu0 0.0
        %2699 = vmatpush1.msra.mxu0 0.0
        %2700 = vmatprep.subr.mxu0 0.0
        %2701 = vmatpush1.msra.mxu0 0.0
        %2702 = vmatprep.subr.mxu0 0.0
        %2703 = vmatpush1.msra.mxu0 0.0
        %2704 = vmatprep.subr.mxu0 0.0
        %2705 = vmatpush1.msra.mxu0 0.0
        %2706 = vmatprep.subr.mxu0 0.0
        %2707 = vmatpush1.msra.mxu0 0.0
        %2708 = vmatprep.subr.mxu0 0.0
        %2709 = vmatpush1.msra.mxu0 0.0
        %2710 = vmatprep.subr.mxu0 0.0
        %2711 = vmatpush1.msra.mxu0 0.0
        %2712 = vmatprep.subr.mxu0 0.0
        %2713 = vmatpush1.msra.mxu0 0.0
        %2714 = vmatprep.subr.mxu0 0.0
        %2715 = vmatpush1.msra.mxu0 0.0
        %2716 = vmatprep.subr.mxu0 0.0
        %2717 = vmatpush1.msra.mxu0 0.0
        %2718 = vmatprep.subr.mxu0 0.0
        %2719 = vmatpush1.msra.mxu0 0.0
        %2720 = vmatprep.subr.mxu0 0.0
        %2721 = vmatpush1.msra.mxu0 0.0
        %2722 = vmatprep.subr.mxu0 0.0
        %2723 = vmatpush1.msra.mxu0 0.0
        %2724 = vmatprep.subr.mxu0 0.0
        %2725 = vmatpush1.msra.mxu0 0.0
        %2726 = vmatprep.subr.mxu0 0.0
        %2727 = vmatpush1.msra.mxu0 0.0
        %2728 = vmatprep.subr.mxu0 0.0
        %2729 = vmatpush1.msra.mxu0 0.0
        %2730 = vmatprep.subr.mxu0 0.0
        %2731 = vmatpush1.msra.mxu0 0.0
        %2732 = vmatprep.subr.mxu0 0.0
        %2733 = vmatpush1.msra.mxu0 0.0
        %2734 = vmatprep.subr.mxu0 0.0
        %2735 = vmatpush1.msra.mxu0 0.0
        %2736 = vmatprep.subr.mxu0 0.0
        %2737 = vmatpush1.msra.mxu0 0.0
        %2738 = vmatprep.subr.mxu0 0.0
        %2739 = vmatpush1.msra.mxu0 0.0
        %2740 = vmatprep.subr.mxu0 0.0
        %2741 = vmatpush1.msra.mxu0 0.0
        %2742 = vmatprep.subr.mxu0 0.0
        %2743 = vmatpush1.msra.mxu0 0.0
        %2744 = vmatprep.subr.mxu0 0.0
        %2745 = vmatpush1.msra.mxu0 0.0
        %2746 = vmatprep.subr.mxu0 0.0
        %2747 = vmatpush1.msra.mxu0 0.0
        %2748 = vmatprep.subr.mxu0 0.0
        %2749 = vmatpush1.msra.mxu0 0.0
        %2750 = vmatprep.subr.mxu0 0.0
        %2751 = vmatpush1.msra.mxu0 0.0
        %2752 = vmatprep.subr.mxu0 0.0
        %2753 = vmatpush1.msra.mxu0 0.0
        %2754 = vmatprep.mubr.f32.mxu0 0.0
        %2755 = vmatmul.mubr.f32.gmra.mrb[0].mxu0 %v2066
        %v2756 = vpop.f32.mrb[0].mxu0
        %v2757 = vadd.f32 %v2063, %v2756
        %v2758 = vpop.f32.mrb[0].mxu0
        %v2759 = vadd.f32 %v2063, %v2758
        %2760 = vdwg.mxu0
        %v2761 = vmax.f32 %v2189, %v2260
        %v2762 = vmax.f32 %v2191, %v2262
        %v2763 = vmax.f32 %v2761, %v2331
        %v2764 = vmax.f32 %v2762, %v2333
        %v2765 = vmax.f32 %v2763, %v2402
        %v2766 = vmax.f32 %v2764, %v2404
        %v2767 = vmax.f32 %v2765, %v2473
        %v2768 = vmax.f32 %v2766, %v2475
        %v2769 = vmax.f32 %v2767, %v2544
        %v2770 = vmax.f32 %v2768, %v2546
        %v2771 = vmax.f32 %v2769, %v2615
        %v2772 = vmax.f32 %v2770, %v2617
        %v2773 = vmax.f32 %v2771, %v2686
        %v2774 = vmax.f32 %v2772, %v2688
        %v2775 = vmax.f32 %v2773, %v2757
        %v2776 = vmax.f32 %v2774, %v2759
        %v2777 = vsub.f32 %v2189, %v2775
        %v2778 = vsub.f32 %v2191, %v2776
        %v2779 = vmul.f32 %v2777, 1.442695
        %v2780 = vpow.pop %v2779
        %v2781 = vmul.f32 %v2778, 1.442695
        %v2782 = vpow.pop %v2781
        %v2783 = vsub.f32 %v2260, %v2775
        %v2784 = vsub.f32 %v2262, %v2776
        %v2785 = vmul.f32 %v2783, 1.442695
        %v2786 = vpow.pop %v2785
        %v2787 = vmul.f32 %v2784, 1.442695
        %v2788 = vpow.pop %v2787
        %v2789 = vsub.f32 %v2331, %v2775
        %v2790 = vsub.f32 %v2333, %v2776
        %v2791 = vmul.f32 %v2789, 1.442695
        %v2792 = vpow.pop %v2791
        %v2793 = vmul.f32 %v2790, 1.442695
        %v2794 = vpow.pop %v2793
        %v2795 = vsub.f32 %v2402, %v2775
        %v2796 = vsub.f32 %v2404, %v2776
        %v2797 = vmul.f32 %v2795, 1.442695
        %v2798 = vpow.pop %v2797
        %v2799 = vmul.f32 %v2796, 1.442695
        %v2800 = vpow.pop %v2799
        %v2801 = vsub.f32 %v2473, %v2775
        %v2802 = vsub.f32 %v2475, %v2776
        %v2803 = vmul.f32 %v2801, 1.442695
        %v2804 = vpow.pop %v2803
        %v2805 = vmul.f32 %v2802, 1.442695
        %v2806 = vpow.pop %v2805
        %v2807 = vsub.f32 %v2544, %v2775
        %v2808 = vsub.f32 %v2546, %v2776
        %v2809 = vmul.f32 %v2807, 1.442695
        %v2810 = vpow.pop %v2809
        %v2811 = vmul.f32 %v2808, 1.442695
        %v2812 = vpow.pop %v2811
        %v2813 = vsub.f32 %v2615, %v2775
        %v2814 = vsub.f32 %v2617, %v2776
        %v2815 = vmul.f32 %v2813, 1.442695
        %v2816 = vpow.pop %v2815
        %v2817 = vmul.f32 %v2814, 1.442695
        %v2818 = vpow.pop %v2817
        %v2819 = vsub.f32 %v2686, %v2775
        %v2820 = vsub.f32 %v2688, %v2776
        %v2821 = vmul.f32 %v2819, 1.442695
        %v2822 = vpow.pop %v2821
        %v2823 = vmul.f32 %v2820, 1.442695
        %v2824 = vpow.pop %v2823
        %v2825 = vsub.f32 %v2757, %v2775
        %v2826 = vsub.f32 %v2759, %v2776
        %v2827 = vmul.f32 %v2825, 1.442695
        %v2828 = vpow.pop %v2827
        %v2829 = vmul.f32 %v2826, 1.442695
        %v2830 = vpow.pop %v2829
        %v2831 = vadd.f32 %v2780, %v2786
        %v2832 = vadd.f32 %v2782, %v2788
        %v2833 = vadd.f32 %v2831, %v2792
        %v2834 = vadd.f32 %v2832, %v2794
        %v2835 = vadd.f32 %v2833, %v2798
        %v2836 = vadd.f32 %v2834, %v2800
        %v2837 = vadd.f32 %v2835, %v2804
        %v2838 = vadd.f32 %v2836, %v2806
        %v2839 = vadd.f32 %v2837, %v2810
        %v2840 = vadd.f32 %v2838, %v2812
        %v2841 = vadd.f32 %v2839, %v2816
        %v2842 = vadd.f32 %v2840, %v2818
        %v2843 = vadd.f32 %v2841, %v2822
        %v2844 = vadd.f32 %v2842, %v2824
        %v2845 = vadd.f32 %v2843, %v2828
        %v2846 = vadd.f32 %v2844, %v2830
        %v2847 = vrcp.pop %v2845
        %v2848 = vrcp.pop %v2846
        %v2849 = vmul.f32 %v2780, %v2847
        %v2850 = vmul.f32 %v2782, %v2848
        %v2851 = vmul.f32 %v2849, %v514
        %v2852 = vmul.f32 %v2850, %v516
        %v2853 = vadd.f32 %v2851, 0.0
        %v2854 = vadd.f32 %v2852, 0.0
        %v2857 = vrot.slane %v514, 4
        %v2858 = vrot.slane %v516, 4
        %v2861 = vmul.f32 %v2849, %v2857
        %v2862 = vmul.f32 %v2850, %v2858
        %v2863 = vadd.f32 %v2861, 0.0
        %v2864 = vadd.f32 %v2862, 0.0
        %v2865 = vmul.f32 %v2849, %v520
        %v2866 = vmul.f32 %v2850, %v522
        %v2867 = vadd.f32 %v2865, 0.0
        %v2868 = vadd.f32 %v2866, 0.0
        %v2871 = vrot.slane %v520, 4
        %v2872 = vrot.slane %v522, 4
        %v2875 = vmul.f32 %v2849, %v2871
        %v2876 = vmul.f32 %v2850, %v2872
        %v2877 = vadd.f32 %v2875, 0.0
        %v2878 = vadd.f32 %v2876, 0.0
        %v2879 = vmul.f32 %v2786, %v2847
        %v2880 = vmul.f32 %v2788, %v2848
        %v2881 = vmul.f32 %v2879, %v597
        %v2882 = vmul.f32 %v2880, %v599
        %v2883 = vadd.f32 %v2853, %v2881
        %v2884 = vadd.f32 %v2854, %v2882
        %v2887 = vrot.slane %v597, 4
        %v2888 = vrot.slane %v599, 4
        %v2891 = vmul.f32 %v2879, %v2887
        %v2892 = vmul.f32 %v2880, %v2888
        %v2893 = vadd.f32 %v2863, %v2891
        %v2894 = vadd.f32 %v2864, %v2892
        %v2895 = vmul.f32 %v2879, %v603
        %v2896 = vmul.f32 %v2880, %v605
        %v2897 = vadd.f32 %v2867, %v2895
        %v2898 = vadd.f32 %v2868, %v2896
        %v2901 = vrot.slane %v603, 4
        %v2902 = vrot.slane %v605, 4
        %v2905 = vmul.f32 %v2879, %v2901
        %v2906 = vmul.f32 %v2880, %v2902
        %v2907 = vadd.f32 %v2877, %v2905
        %v2908 = vadd.f32 %v2878, %v2906
        %v2909 = vmul.f32 %v2792, %v2847
        %v2910 = vmul.f32 %v2794, %v2848
        %v2911 = vmul.f32 %v2909, %v680
        %v2912 = vmul.f32 %v2910, %v682
        %v2913 = vadd.f32 %v2883, %v2911
        %v2914 = vadd.f32 %v2884, %v2912
        %v2917 = vrot.slane %v680, 4
        %v2918 = vrot.slane %v682, 4
        %v2921 = vmul.f32 %v2909, %v2917
        %v2922 = vmul.f32 %v2910, %v2918
        %v2923 = vadd.f32 %v2893, %v2921
        %v2924 = vadd.f32 %v2894, %v2922
        %v2925 = vmul.f32 %v2909, %v686
        %v2926 = vmul.f32 %v2910, %v688
        %v2927 = vadd.f32 %v2897, %v2925
        %v2928 = vadd.f32 %v2898, %v2926
        %v2931 = vrot.slane %v686, 4
        %v2932 = vrot.slane %v688, 4
        %v2935 = vmul.f32 %v2909, %v2931
        %v2936 = vmul.f32 %v2910, %v2932
        %v2937 = vadd.f32 %v2907, %v2935
        %v2938 = vadd.f32 %v2908, %v2936
        %v2939 = vmul.f32 %v2798, %v2847
        %v2940 = vmul.f32 %v2800, %v2848
        %v2941 = vmul.f32 %v2939, %v763
        %v2942 = vmul.f32 %v2940, %v765
        %v2943 = vadd.f32 %v2913, %v2941
        %v2944 = vadd.f32 %v2914, %v2942
        %v2947 = vrot.slane %v763, 4
        %v2948 = vrot.slane %v765, 4
        %v2951 = vmul.f32 %v2939, %v2947
        %v2952 = vmul.f32 %v2940, %v2948
        %v2953 = vadd.f32 %v2923, %v2951
        %v2954 = vadd.f32 %v2924, %v2952
        %v2955 = vmul.f32 %v2939, %v769
        %v2956 = vmul.f32 %v2940, %v771
        %v2957 = vadd.f32 %v2927, %v2955
        %v2958 = vadd.f32 %v2928, %v2956
        %v2961 = vrot.slane %v769, 4
        %v2962 = vrot.slane %v771, 4
        %v2965 = vmul.f32 %v2939, %v2961
        %v2966 = vmul.f32 %v2940, %v2962
        %v2967 = vadd.f32 %v2937, %v2965
        %v2968 = vadd.f32 %v2938, %v2966
        %v2969 = vmul.f32 %v2804, %v2847
        %v2970 = vmul.f32 %v2806, %v2848
        %v2971 = vmul.f32 %v2969, %v846
        %v2972 = vmul.f32 %v2970, %v848
        %v2973 = vadd.f32 %v2943, %v2971
        %v2974 = vadd.f32 %v2944, %v2972
        %v2977 = vrot.slane %v846, 4
        %v2978 = vrot.slane %v848, 4
        %v2981 = vmul.f32 %v2969, %v2977
        %v2982 = vmul.f32 %v2970, %v2978
        %v2983 = vadd.f32 %v2953, %v2981
        %v2984 = vadd.f32 %v2954, %v2982
        %v2985 = vmul.f32 %v2969, %v852
        %v2986 = vmul.f32 %v2970, %v854
        %v2987 = vadd.f32 %v2957, %v2985
        %v2988 = vadd.f32 %v2958, %v2986
        %v2991 = vrot.slane %v852, 4
        %v2992 = vrot.slane %v854, 4
        %v2995 = vmul.f32 %v2969, %v2991
        %v2996 = vmul.f32 %v2970, %v2992
        %v2997 = vadd.f32 %v2967, %v2995
        %v2998 = vadd.f32 %v2968, %v2996
        %v2999 = vmul.f32 %v2810, %v2847
        %v3000 = vmul.f32 %v2812, %v2848
        %v3001 = vmul.f32 %v2999, %v929
        %v3002 = vmul.f32 %v3000, %v931
        %v3003 = vadd.f32 %v2973, %v3001
        %v3004 = vadd.f32 %v2974, %v3002
        %v3007 = vrot.slane %v929, 4
        %v3008 = vrot.slane %v931, 4
        %v3011 = vmul.f32 %v2999, %v3007
        %v3012 = vmul.f32 %v3000, %v3008
        %v3013 = vadd.f32 %v2983, %v3011
        %v3014 = vadd.f32 %v2984, %v3012
        %v3015 = vmul.f32 %v2999, %v935
        %v3016 = vmul.f32 %v3000, %v937
        %v3017 = vadd.f32 %v2987, %v3015
        %v3018 = vadd.f32 %v2988, %v3016
        %v3021 = vrot.slane %v935, 4
        %v3022 = vrot.slane %v937, 4
        %v3025 = vmul.f32 %v2999, %v3021
        %v3026 = vmul.f32 %v3000, %v3022
        %v3027 = vadd.f32 %v2997, %v3025
        %v3028 = vadd.f32 %v2998, %v3026
        %v3029 = vmul.f32 %v2816, %v2847
        %v3030 = vmul.f32 %v2818, %v2848
        %v3031 = vmul.f32 %v3029, %v1012
        %v3032 = vmul.f32 %v3030, %v1014
        %v3033 = vadd.f32 %v3003, %v3031
        %v3034 = vadd.f32 %v3004, %v3032
        %v3037 = vrot.slane %v1012, 4
        %v3038 = vrot.slane %v1014, 4
        %v3041 = vmul.f32 %v3029, %v3037
        %v3042 = vmul.f32 %v3030, %v3038
        %v3043 = vadd.f32 %v3013, %v3041
        %v3044 = vadd.f32 %v3014, %v3042
        %v3045 = vmul.f32 %v3029, %v1018
        %v3046 = vmul.f32 %v3030, %v1020
        %v3047 = vadd.f32 %v3017, %v3045
        %v3048 = vadd.f32 %v3018, %v3046
        %v3051 = vrot.slane %v1018, 4
        %v3052 = vrot.slane %v1020, 4
        %v3055 = vmul.f32 %v3029, %v3051
        %v3056 = vmul.f32 %v3030, %v3052
        %v3057 = vadd.f32 %v3027, %v3055
        %v3058 = vadd.f32 %v3028, %v3056
        %v3059 = vmul.f32 %v2822, %v2847
        %v3060 = vmul.f32 %v2824, %v2848
        %v3061 = vmul.f32 %v3059, %v1095
        %v3062 = vmul.f32 %v3060, %v1097
        %v3063 = vadd.f32 %v3033, %v3061
        %v3064 = vadd.f32 %v3034, %v3062
        %v3067 = vrot.slane %v1095, 4
        %v3068 = vrot.slane %v1097, 4
        %v3071 = vmul.f32 %v3059, %v3067
        %v3072 = vmul.f32 %v3060, %v3068
        %v3073 = vadd.f32 %v3043, %v3071
        %v3074 = vadd.f32 %v3044, %v3072
        %v3075 = vmul.f32 %v3059, %v1101
        %v3076 = vmul.f32 %v3060, %v1103
        %v3077 = vadd.f32 %v3047, %v3075
        %v3078 = vadd.f32 %v3048, %v3076
        %v3081 = vrot.slane %v1101, 4
        %v3082 = vrot.slane %v1103, 4
        %v3085 = vmul.f32 %v3059, %v3081
        %v3086 = vmul.f32 %v3060, %v3082
        %v3087 = vadd.f32 %v3057, %v3085
        %v3088 = vadd.f32 %v3058, %v3086
        %v3089 = vmul.f32 %v2828, %v2847
        %v3090 = vmul.f32 %v2830, %v2848
        %v3091 = vmul.f32 %v3089, %v1178
        %v3092 = vmul.f32 %v3090, %v1180
        %v3093 = vadd.f32 %v3063, %v3091
        %v3094 = vadd.f32 %v3064, %v3092
        %v3097 = vrot.slane %v1178, 4
        %v3098 = vrot.slane %v1180, 4
        %v3101 = vmul.f32 %v3089, %v3097
        %v3102 = vmul.f32 %v3090, %v3098
        %v3103 = vadd.f32 %v3073, %v3101
        %v3104 = vadd.f32 %v3074, %v3102
        %v3105 = vmul.f32 %v3089, %v1184
        %v3106 = vmul.f32 %v3090, %v1186
        %v3107 = vadd.f32 %v3077, %v3105
        %v3108 = vadd.f32 %v3078, %v3106
        %v3111 = vrot.slane %v1184, 4
        %v3112 = vrot.slane %v1186, 4
        %v3115 = vmul.f32 %v3089, %v3111
        %v3116 = vmul.f32 %v3090, %v3112
        %v3117 = vadd.f32 %v3087, %v3115
        %v3118 = vadd.f32 %v3088, %v3116
        %v3121 = vrot.slane %v3103, 4
        %v3122 = vrot.slane %v3104, 4
        %v3127 = vrot.slane %v3117, 4
        %v3128 = vrot.slane %v3118, 4
        %v3131 = vsel %vm1305, %v3093, %v3121
        %v3132 = vsel %vm1305, %v3094, %v3122
        %v3133 = vsel %vm1305, %v3107, %v3127
        %v3134 = vsel %vm1305, %v3108, %v3128
        %3135 = vst [vmem:[%s307] sm:$0xff] %v3131
        %3136 = vst [vmem:[%s307 + $0x8] sm:$0xff] %v3132
        %3137 = vst [vmem:[%s307 + $0x10] sm:$0xff] %v3133
        %3138 = vst [vmem:[%s307 + $0x18] sm:$0xff] %v3134
        %s3139 = sand.u32 %s185, 1
        %s3140 = scalar_lea.sflag [#allocation4], %s3139
        %s3141 = sand.u32 %s185, 1
        %s3142 = smul.addr %s3141, 32
        %s3143 = scalar_lea.vmem [#allocation7], %s3142
        // Predicated region
        $region57: #{tpu_custom_call.1} parent=47 // pred_check
          %p3144 = pneg %p195
        $region58: #{tpu_custom_call.1} parent=47 // pred_check_branch
          %3146 = sbr.rel (%p3144) target = $region60
        $region59: #{tpu_custom_call.1} parent=47 // pred_region
          %s3148 = ssub.s32 512, 512
          %3149 = vsyncadd %s3140, %s3148
          %s3150 = smul.addr %s25, 4
          %s3151 = smul.addr %s3150, 128
          %s3152 = scalar_lea.hbm %s7, %s3151
          %s3153 = sshll.u32 %s3143, 4
          %s3154 = int_to_ptr.vmem [resolvable:$true] %s3153
          %3159 = dma.vmem_to_hbm [thread:$0]  %s3154, 512, %s3152, %s3140, 256, 256, 16
        $region60: #{tpu_custom_call.1} parent=47 // pred_fallthru
          _
      $region48: #{tpu_custom_call.1} parent=5 // pred_fallthru
        _
      %p3160 = scmp.le.s32.totalorder 2, %s20
      // Predicated region
      $region61: #{tpu_custom_call.1} parent=5 // pred_check
        %p3161 = pneg %p3160
      $region62: #{tpu_custom_call.1} parent=5 // pred_check_branch
        %3163 = sbr.rel (%p3161) target = $region64
      $region63: #{tpu_custom_call.1} parent=5 // pred_region
        %s3164 = ssub.s32 %s20, 2
        // Predicated region
        $region65: #{tpu_custom_call.1} parent=63 // pred_check
          %p3165 = pneg %p201
        $region66: #{tpu_custom_call.1} parent=63 // pred_check_branch
          %3167 = sbr.rel (%p3165) target = $region68
        $region67: #{tpu_custom_call.1} parent=63 // pred_region
          %s3168 = sand.u32 %s186, 1
          %s3169 = scalar_lea.sflag [#allocation4], %s3168
          %s3170 = sand.u32 %s186, 1
          %s3171 = smul.addr %s3170, 32
          %s3172 = scalar_lea.vmem [#allocation7], %s3171
          %3173 = dma.done %s3169, 512
        $region68: #{tpu_custom_call.1} parent=63 // pred_fallthru
          _
      $region64: #{tpu_custom_call.1} parent=5 // pred_fallthru
        _
    $region6: #{tpu_custom_call.1} parent=1 // loop_footer
      %s24 = sadd.s32 1, %s20
    $region7: #{tpu_custom_call.1} parent=1 // loop_footer_branch
      %19 = sbr.rel target = $region3
    $region8: #{tpu_custom_call.1} parent=1 // loop_exit
      _
    %3174 = vsyncpa [#allocation3], 1
    %s3175 = scalar_lea.sflag [#allocation3], 1
    %3176 = vsyncpa %s3175, 1
    %3177 = vsyncpa [#allocation6], 1
    %3178 = vsyncpa [#allocation4], 1
    %s3179 = scalar_lea.sflag [#allocation4], 1
    %3180 = vsyncpa %s3179, 1

</llo_original>
